<compile_context>
chip_gen: v7x
topology: tpu7x:2x2x1
jax: 0.10.0
libtpu: 0.0.40
codegen_flags: <defaults>
</compile_context>

<pallas_src>
import functools

import jax
import jax.numpy as jnp
from jax import lax
from jax.experimental import pallas as pl
from jax.experimental.pallas import tpu as pltpu


def _round_up(v, m):
    return ((v + m - 1) // m) * m


def _fold_bn(gamma, beta, mean, var, eps=1e-5):
    """Fold inference BatchNorm into per-channel (scale, bias), shape (C, 1)."""
    s = gamma / jnp.sqrt(var + eps)
    b = beta - mean * s
    return s.astype(jnp.float32)[:, None], b.astype(jnp.float32)[:, None]


def _vmem_capacity_bytes():
    try:
        info = pltpu.get_tpu_info()
        cap = getattr(info, "vmem_capacity_bytes", None)
        if cap:
            return int(cap)
    except Exception:
        pass
    return 64 * 1024 * 1024          # conservative: v7x physical VMEM per core


def _staging_layout(Mt, HW, W, dil):
    """Column layout of the flat padded conv1 staging buffer.

    [ zeros | depth halo | main slab (128-aligned start) | depth halo | zeros ]
    """
    halo = dil * HW                   # one depth halo, in flat columns
    spill = dil * (W + 1)             # max in-plane (H/W) spill of any tap
    col0 = _round_up(halo + spill, 128)             # main-slab start, aligned
    tot = _round_up(col0 + Mt + halo + spill, 128)  # total buffer columns
    return col0, tot


def _make_tap_masks(D, H, W, dil):
    """(27, 1, D*H*W) bf16 0/1 validity mask per 3x3x3 tap (precomputed)."""
    d = jnp.arange(D)[:, None, None]
    h = jnp.arange(H)[None, :, None]
    w = jnp.arange(W)[None, None, :]
    rows = []
    for kd in range(3):
        for kh in range(3):
            for kw in range(3):
                dd, dh, dw = (kd - 1) * dil, (kh - 1) * dil, (kw - 1) * dil
                ok = ((d + dd >= 0) & (d + dd < D) &
                      (h + dh >= 0) & (h + dh < H) &
                      (w + dw >= 0) & (w + dw < W))
                rows.append(ok.reshape(1, D * H * W))
    return jnp.stack(rows, axis=0).astype(jnp.bfloat16)


def _bottleneck_kernel(Dt, HW, W, dil, col0, tot,
                       x_lo_ref, x_mid_ref, x_hi_ref, mask_ref,
                       w1_ref, s1_ref, b1_ref,
                       w2_ref, s2_ref, b2_ref,
                       w3_ref, s3_ref, b3_ref,
                       out_ref, t1_ref, col_ref):
    Mt = Dt * HW
    halo = dil * HW
    P = w1_ref.shape[0]

    # ---- conv1 (1x1x1) + bn1 + relu, staged as bf16 in a flat padded buffer.
    w1 = w1_ref[...]
    s1 = s1_ref[...]
    b1 = b1_ref[...]

    def conv1(xs):
        y = jnp.dot(w1, xs.astype(jnp.bfloat16),
                    preferred_element_type=jnp.float32)
        return jnp.maximum(y * s1 + b1, 0.0).astype(jnp.bfloat16)

    # Zero only the small in-plane spill strips (multiply-by-mask must never
    # see uninitialized VMEM); kept per-step since scratch is per-core.
    t1_ref[:, :col0 - halo] = jnp.zeros((P, col0 - halo), jnp.bfloat16)
    t1_ref[:, col0 + Mt + halo:] = jnp.zeros(
        (P, tot - (col0 + Mt + halo)), jnp.bfloat16)

    # Depth-halo planes, recomputed from the neighbouring slabs.  At the
    # volume edges the neighbour index was clamped; those taps are masked.
    t1_ref[:, col0 - halo:col0] = conv1(x_lo_ref[:, (Dt - dil) * HW:])
    t1_ref[:, col0 + Mt:col0 + Mt + halo] = conv1(x_hi_ref[:, :halo])
    # Main slab: lane-aligned store (col0 % 128 == 0).
    t1_ref[:, col0:col0 + Mt] = conv1(x_mid_ref[...])

    # ---- conv2 (3x3x3, stride 1, padding=dilation): build the (27*P, Mt)
    # im2col slab in VMEM, then one stacked MXU matmul with K = 27*P.
    for k in range(27):
        kd, kh, kw = k // 9, (k // 3) % 3, k % 3
        off = dil * ((kd - 1) * HW + (kh - 1) * W + (kw - 1))
        tap = t1_ref[:, col0 + off:col0 + off + Mt]          # (P, Mt) bf16
        if k == 13:                                          # centre tap: all-valid
            col_ref[k * P:(k + 1) * P, :] = tap
        else:
            col_ref[k * P:(k + 1) * P, :] = tap * mask_ref[k]

    t2 = jnp.dot(w2_ref[...], col_ref[...],
                 preferred_element_type=jnp.float32)         # (P, Mt) f32
    t2 = jnp.maximum(t2 * s2_ref[...] + b2_ref[...], 0.0)

    # ---- conv3 (1x1x1) + bn3 + identity residual + relu.
    t3 = jnp.dot(w3_ref[...], t2.astype(jnp.bfloat16),
                 preferred_element_type=jnp.float32)         # (4P, Mt) f32
    t3 = t3 * s3_ref[...] + b3_ref[...]
    res = x_mid_ref[...].astype(jnp.float32)                 # residual, read late
    out_ref[...] = jnp.maximum(t3 + res, 0.0).astype(out_ref.dtype)


def bottleneck_forward(x, params, *, stride=1, dilation=1, max_dt=None):
    """Fused Pallas forward pass of the Bottleneck block (inference BN)."""
    assert stride == 1, "TODO(synk): stride>1 / downsample not implemented"
    N, C_in, D, H, W = x.shape
    HW = H * W
    assert 1 <= dilation <= D

    w1 = params["conv1_w"]
    w2 = params["conv2_w"]
    w3 = params["conv3_w"]
    P = w1.shape[0]
    C_out = w3.shape[0]
    assert C_out == 4 * P and C_in == C_out, (
        "identity residual requires inplanes == 4 * planes (downsample=None)")

    s1, b1 = _fold_bn(*params["bn1"])
    s2, b2 = _fold_bn(*params["bn2"])
    s3, b3 = _fold_bn(*params["bn3"])

    # bf16 MXU operands; per-tap weights stacked along the contraction axis:
    # column index of w2m is ((kd*3 + kh)*3 + kw) * P + c_in.
    w1m = w1.reshape(P, C_in).astype(jnp.bfloat16)
    w2m = jnp.transpose(w2, (0, 2, 3, 4, 1)).reshape(P, 27 * P).astype(jnp.bfloat16)
    w3m = w3.reshape(C_out, P).astype(jnp.bfloat16)

    mask = _make_tap_masks(D, H, W, dilation)                # (27, 1, D*HW)

    xb = jnp.dtype(x.dtype).itemsize

    def est_vmem(dt):
        mt = dt * HW
        _, tot_ = _staging_layout(mt, HW, W, dilation)
        inbuf = 2 * (3 * C_in * mt * xb + 27 * mt * 2)       # double-buffered ins
        outbuf = 2 * C_out * mt * xb                         # double-buffered out
        wts = 4 * (P * C_in + 27 * P * P + C_out * P) + 16 * (2 * P + C_out)
        scratch = P * tot_ * 2 + 27 * P * mt * 2             # staging + im2col
        temps = 4 * mt * (3 * P + 3 * C_out)                 # f32 temporaries
        return inbuf + outbuf + wts + scratch + temps

    cap = _vmem_capacity_bytes()
    budget = int(0.6 * cap)

    # Depth-slab candidates: divide D, cover the dilation halo, and keep the
    # lane extent a multiple of 128 (or the full volume) for unmasked stores.
    cands = [dt for dt in range(1, D + 1)
             if D % dt == 0 and dt >= dilation
             and ((dt * HW) % 128 == 0 or dt == D)]
    if max_dt is not None:
        cands = [dt for dt in cands if dt <= max_dt] or cands
    fitting = [dt for dt in cands if est_vmem(dt) <= budget]
    Dt = max(fitting) if fitting else min(cands)

    n_slabs = D // Dt
    Mt = Dt * HW
    col0, tot = _staging_layout(Mt, HW, W, dilation)
    vmem_limit = int(min(cap, max(2 * est_vmem(Dt), 32 * 1024 * 1024)))

    # Lane-dense layout: flattened spatial on lanes, channels on sublanes.
    x3 = x.reshape(N, C_in, D * HW)

    def _full(a):
        return pl.BlockSpec(a.shape, lambda n, s, _nd=a.ndim: (0,) * _nd)

    kernel = functools.partial(
        _bottleneck_kernel, Dt, HW, W, dilation, col0, tot)

    out = pl.pallas_call(
        kernel,
        out_shape=jax.ShapeDtypeStruct((N, C_out, D * HW), x.dtype),
        grid=(N, n_slabs),
        in_specs=[
            # previous / current / next depth slab of x (halo + residual)
            pl.BlockSpec((None, C_in, Mt),
                         lambda n, s: (n, 0, jnp.maximum(s - 1, 0))),
            pl.BlockSpec((None, C_in, Mt), lambda n, s: (n, 0, s)),
            pl.BlockSpec((None, C_in, Mt),
                         lambda n, s: (n, 0, jnp.minimum(s + 1, n_slabs - 1))),
            pl.BlockSpec((27, 1, Mt), lambda n, s: (0, 0, s)),
            _full(w1m), _full(s1), _full(b1),
            _full(w2m), _full(s2), _full(b2),
            _full(w3m), _full(s3), _full(b3),
        ],
        out_specs=pl.BlockSpec((None, C_out, Mt), lambda n, s: (n, 0, s)),
        scratch_shapes=[
            pltpu.VMEM((P, tot), jnp.bfloat16),              # padded conv1 staging
            pltpu.VMEM((27 * P, Mt), jnp.bfloat16),          # im2col slab
        ],
        compiler_params=pltpu.CompilerParams(
            dimension_semantics=("parallel", "parallel"),
            vmem_limit_bytes=vmem_limit),
    )(x3, x3, x3, mask, w1m, s1, b1, w2m, s2, b2, w3m, s3, b3)

    return out.reshape(N, C_out, D, H, W)


def bottleneck_ref(x, params, *, dilation=1, emulate_bf16=False):
    """Pure-JAX reference mirroring the PyTorch module (eval-mode BN).

    With emulate_bf16=True, operands are rounded to bf16 at every matmul
    boundary (like the kernel) so the comparison can be tight.
    """
    if emulate_bf16:
        r = lambda a: a.astype(jnp.bfloat16).astype(jnp.float32)
    else:
        r = lambda a: a.astype(jnp.float32)

    def conv(y, w, padding=0, dil=1):
        return lax.conv_general_dilated(
            r(y), r(w), window_strides=(1, 1, 1),
            padding=[(padding, padding)] * 3,
            rhs_dilation=(dil, dil, dil),
            dimension_numbers=("NCDHW", "OIDHW", "NCDHW"),
            precision=lax.Precision.HIGHEST)

    def bn(y, p):
        gamma, beta, mean, var = p
        s = gamma / jnp.sqrt(var + 1e-5)
        b = beta - mean * s
        return y * s[None, :, None, None, None] + b[None, :, None, None, None]

    out = jax.nn.relu(bn(conv(x, params["conv1_w"]), params["bn1"]))
    out = jax.nn.relu(bn(conv(out, params["conv2_w"], padding=dilation,
                              dil=dilation), params["bn2"]))
    out = bn(conv(out, params["conv3_w"]), params["bn3"])
    return jax.nn.relu(out + x.astype(jnp.float32))


if __name__ == "__main__":
    key = jax.random.PRNGKey(0)
    keys = jax.random.split(key, 16)

    # Small shapes consistent with the module: expansion=4, inplanes = 4*planes
    # so downsample=None and the identity residual applies.
    N, inplanes, planes = 2, 32, 8
    D = H = W = 8
    x = jax.random.normal(keys[0], (N, inplanes, D, H, W), dtype=jnp.float32)

    def bn_params(kg, kb, km, kv, c):
        gamma = jax.random.uniform(kg, (c,), jnp.float32, 0.5, 1.5)
        beta = 0.1 * jax.random.normal(kb, (c,), jnp.float32)
        mean = 0.1 * jax.random.normal(km, (c,), jnp.float32)
        var = jax.random.uniform(kv, (c,), jnp.float32, 0.5, 1.5)
        return (gamma, beta, mean, var)

    params = {
        "conv1_w": 0.15 * jax.random.normal(
            keys[1], (planes, inplanes, 1, 1, 1), jnp.float32),
        "conv2_w": 0.10 * jax.random.normal(
            keys[2], (planes, planes, 3, 3, 3), jnp.float32),
        "conv3_w": 0.15 * jax.random.normal(
            keys[3], (4 * planes, planes, 1, 1, 1), jnp.float32),
        "bn1": bn_params(keys[4], keys[5], keys[6], keys[7], planes),
        "bn2": bn_params(keys[8], keys[9], keys[10], keys[11], planes),
        "bn3": bn_params(keys[12], keys[13], keys[14], keys[15], 4 * planes),
    }

    def check(dilation, max_dt, tag):
        out = jax.block_until_ready(
            bottleneck_forward(x, params, stride=1, dilation=dilation,
                               max_dt=max_dt))
        ref_b16 = bottleneck_ref(x, params, dilation=dilation, emulate_bf16=True)
        ref_f32 = bottleneck_ref(x, params, dilation=dilation, emulate_bf16=False)
        assert out.shape == ref_f32.shape, (tag, out.shape, ref_f32.shape)
        o = out.astype(jnp.float32)
        err_b = float(jnp.max(jnp.abs(o - ref_b16)))
        err_f = float(jnp.max(jnp.abs(o - ref_f32)))
        mean_b = float(jnp.mean(jnp.abs(o - ref_b16)))
        assert jnp.allclose(o, ref_b16, rtol=3e-2, atol=3e-2), (tag, err_b)
        assert mean_b < 2e-3, (tag, mean_b)
        assert jnp.allclose(o, ref_f32, rtol=1e-1, atol=1e-1), (tag, err_f)

    check(dilation=1, max_dt=None, tag="dil1_single_slab")   # Dt = D
    check(dilation=1, max_dt=4, tag="dil1_two_slabs")        # depth-halo path
    check(dilation=2, max_dt=4, tag="dil2_two_slabs")        # dilated conv path

    print("KERNEL_OK")
</pallas_src>

<mosaic_0001>
module attributes {stable_mosaic.version = 11 : i64} {
  func.func @_bottleneck_kernel(%arg0: i32, %arg1: i32, %arg2: memref<1x32x512xf32, #tpu.memory_space<vmem>>, %arg3: memref<1x32x512xf32, #tpu.memory_space<vmem>>, %arg4: memref<1x32x512xf32, #tpu.memory_space<vmem>>, %arg5: memref<27x1x512xbf16, #tpu.memory_space<vmem>>, %arg6: memref<8x32xbf16, #tpu.memory_space<vmem>>, %arg7: memref<8x1xf32, #tpu.memory_space<vmem>>, %arg8: memref<8x1xf32, #tpu.memory_space<vmem>>, %arg9: memref<8x216xbf16, #tpu.memory_space<vmem>>, %arg10: memref<8x1xf32, #tpu.memory_space<vmem>>, %arg11: memref<8x1xf32, #tpu.memory_space<vmem>>, %arg12: memref<32x8xbf16, #tpu.memory_space<vmem>>, %arg13: memref<32x1xf32, #tpu.memory_space<vmem>>, %arg14: memref<32x1xf32, #tpu.memory_space<vmem>>, %arg15: memref<1x32x512xf32, #tpu.memory_space<vmem>>, %arg16: memref<8x768xbf16, #tpu.memory_space<vmem>>, %arg17: memref<216x512xbf16, #tpu.memory_space<vmem>>) attributes {dimension_semantics = [#tpu.dimension_semantics<parallel>, #tpu.dimension_semantics<parallel>], iteration_bounds = array<i64: 2, 1>, scalar_prefetch = 0 : i64, scratch_operands = 2 : i64, tpu.core_type = #tpu.core_type<tc>, window_params = [{transform_indices = @transform_0, window_bounds = array<i64: 1, 32, 512>}, {transform_indices = @transform_1, window_bounds = array<i64: 1, 32, 512>}, {transform_indices = @transform_2, window_bounds = array<i64: 1, 32, 512>}, {transform_indices = @transform_3, window_bounds = array<i64: 27, 1, 512>}, {pipeline_mode = #tpu.pipeline_mode<synchronous>, transform_indices = @transform_4, window_bounds = array<i64: 8, 32>}, {pipeline_mode = #tpu.pipeline_mode<synchronous>, transform_indices = @transform_5, window_bounds = array<i64: 8, 1>}, {pipeline_mode = #tpu.pipeline_mode<synchronous>, transform_indices = @transform_6, window_bounds = array<i64: 8, 1>}, {pipeline_mode = #tpu.pipeline_mode<synchronous>, transform_indices = @transform_7, window_bounds = array<i64: 8, 216>}, {pipeline_mode = #tpu.pipeline_mode<synchronous>, transform_indices = @transform_8, window_bounds = array<i64: 8, 1>}, {pipeline_mode = #tpu.pipeline_mode<synchronous>, transform_indices = @transform_9, window_bounds = array<i64: 8, 1>}, {pipeline_mode = #tpu.pipeline_mode<synchronous>, transform_indices = @transform_10, window_bounds = array<i64: 32, 8>}, {pipeline_mode = #tpu.pipeline_mode<synchronous>, transform_indices = @transform_11, window_bounds = array<i64: 32, 1>}, {pipeline_mode = #tpu.pipeline_mode<synchronous>, transform_indices = @transform_12, window_bounds = array<i64: 32, 1>}, {transform_indices = @transform_13, window_bounds = array<i64: 1, 32, 512>}]} {
    %c0 = arith.constant 0 : index
    %c0_0 = arith.constant 0 : index
    %0 = vector.load %arg6[%c0, %c0_0] : memref<8x32xbf16, #tpu.memory_space<vmem>>, vector<8x32xbf16>
    %c0_1 = arith.constant 0 : index
    %c0_2 = arith.constant 0 : index
    %1 = vector.load %arg7[%c0_1, %c0_2] : memref<8x1xf32, #tpu.memory_space<vmem>>, vector<8x1xf32>
    %c0_3 = arith.constant 0 : index
    %c0_4 = arith.constant 0 : index
    %2 = vector.load %arg8[%c0_3, %c0_4] : memref<8x1xf32, #tpu.memory_space<vmem>>, vector<8x1xf32>
    %cst = arith.constant 0.000000e+00 : bf16
    %3 = vector.broadcast %cst : bf16 to vector<8x64xbf16>
    %c0_5 = arith.constant 0 : index
    %c0_6 = arith.constant 0 : index
    %4 = vector.load %arg16[%c0_5, %c0_6] : memref<8x768xbf16, #tpu.memory_space<vmem>>, vector<8x64xbf16>
    tpu.vector_store %arg16[%c0_5, %c0_6], %3 {strides = array<i32>} : memref<8x768xbf16, #tpu.memory_space<vmem>>, vector<8x64xbf16>,
    %cst_7 = arith.constant 0.000000e+00 : bf16
    %5 = vector.broadcast %cst_7 : bf16 to vector<8x64xbf16>
    %c0_8 = arith.constant 0 : index
    %c704 = arith.constant 704 : index
    %6 = vector.load %arg16[%c0_8, %c704] : memref<8x768xbf16, #tpu.memory_space<vmem>>, vector<8x64xbf16>
    tpu.vector_store %arg16[%c0_8, %c704], %5 {strides = array<i32>} : memref<8x768xbf16, #tpu.memory_space<vmem>>, vector<8x64xbf16>,
    %c0_9 = arith.constant 0 : index
    %c0_10 = arith.constant 0 : index
    %c448 = arith.constant 448 : index
    %7 = vector.load %arg2[%c0_9, %c0_10, %c448] : memref<1x32x512xf32, #tpu.memory_space<vmem>>, vector<1x32x64xf32>
    %8 = vector.shape_cast %7 : vector<1x32x64xf32> to vector<32x64xf32>
    %9 = arith.truncf %8 : vector<32x64xf32> to vector<32x64xbf16>
    %cst_11 = arith.constant dense<0.000000e+00> : vector<8x64xf32>
    %10 = tpu.matmul %0, %9, %cst_11 {dimension_numbers = #tpu.dot_dimension_numbers<[1], [0], [0], [1], [0, 0, 1, 1], [], []>} : vector<8x32xbf16>, vector<32x64xbf16>, vector<8x64xf32> -> vector<8x64xf32>
    %11 = vector.broadcast %1 : vector<8x1xf32> to vector<8x64xf32>
    %12 = arith.mulf %10, %11 : vector<8x64xf32>
    %13 = vector.broadcast %2 : vector<8x1xf32> to vector<8x64xf32>
    %14 = arith.addf %12, %13 : vector<8x64xf32>
    %cst_12 = arith.constant 0.000000e+00 : f32
    %15 = vector.broadcast %cst_12 : f32 to vector<8x64xf32>
    %16 = arith.maximumf %14, %15 : vector<8x64xf32>
    %17 = arith.truncf %16 : vector<8x64xf32> to vector<8x64xbf16>
    %c0_13 = arith.constant 0 : index
    %c64 = arith.constant 64 : index
    %18 = vector.load %arg16[%c0_13, %c64] : memref<8x768xbf16, #tpu.memory_space<vmem>>, vector<8x64xbf16>
    tpu.vector_store %arg16[%c0_13, %c64], %17 {strides = array<i32>} : memref<8x768xbf16, #tpu.memory_space<vmem>>, vector<8x64xbf16>,
    %c0_14 = arith.constant 0 : index
    %c0_15 = arith.constant 0 : index
    %c0_16 = arith.constant 0 : index
    %19 = vector.load %arg4[%c0_14, %c0_15, %c0_16] : memref<1x32x512xf32, #tpu.memory_space<vmem>>, vector<1x32x64xf32>
    %20 = vector.shape_cast %19 : vector<1x32x64xf32> to vector<32x64xf32>
    %21 = arith.truncf %20 : vector<32x64xf32> to vector<32x64xbf16>
    %cst_17 = arith.constant dense<0.000000e+00> : vector<8x64xf32>
    %22 = tpu.matmul %0, %21, %cst_17 {dimension_numbers = #tpu.dot_dimension_numbers<[1], [0], [0], [1], [0, 0, 1, 1], [], []>} : vector<8x32xbf16>, vector<32x64xbf16>, vector<8x64xf32> -> vector<8x64xf32>
    %23 = vector.broadcast %1 : vector<8x1xf32> to vector<8x64xf32>
    %24 = arith.mulf %22, %23 : vector<8x64xf32>
    %25 = vector.broadcast %2 : vector<8x1xf32> to vector<8x64xf32>
    %26 = arith.addf %24, %25 : vector<8x64xf32>
    %cst_18 = arith.constant 0.000000e+00 : f32
    %27 = vector.broadcast %cst_18 : f32 to vector<8x64xf32>
    %28 = arith.maximumf %26, %27 : vector<8x64xf32>
    %29 = arith.truncf %28 : vector<8x64xf32> to vector<8x64xbf16>
    %c0_19 = arith.constant 0 : index
    %c640 = arith.constant 640 : index
    %30 = vector.load %arg16[%c0_19, %c640] : memref<8x768xbf16, #tpu.memory_space<vmem>>, vector<8x64xbf16>
    tpu.vector_store %arg16[%c0_19, %c640], %29 {strides = array<i32>} : memref<8x768xbf16, #tpu.memory_space<vmem>>, vector<8x64xbf16>,
    %c0_20 = arith.constant 0 : index
    %c0_21 = arith.constant 0 : index
    %c0_22 = arith.constant 0 : index
    %31 = vector.load %arg3[%c0_20, %c0_21, %c0_22] : memref<1x32x512xf32, #tpu.memory_space<vmem>>, vector<1x32x512xf32>
    %32 = vector.shape_cast %31 : vector<1x32x512xf32> to vector<32x512xf32>
    %33 = arith.truncf %32 : vector<32x512xf32> to vector<32x512xbf16>
    %cst_23 = arith.constant dense<0.000000e+00> : vector<8x512xf32>
    %34 = tpu.matmul %0, %33, %cst_23 {dimension_numbers = #tpu.dot_dimension_numbers<[1], [0], [0], [1], [0, 0, 1, 1], [], []>} : vector<8x32xbf16>, vector<32x512xbf16>, vector<8x512xf32> -> vector<8x512xf32>
    %35 = vector.broadcast %1 : vector<8x1xf32> to vector<8x512xf32>
    %36 = arith.mulf %34, %35 : vector<8x512xf32>
    %37 = vector.broadcast %2 : vector<8x1xf32> to vector<8x512xf32>
    %38 = arith.addf %36, %37 : vector<8x512xf32>
    %cst_24 = arith.constant 0.000000e+00 : f32
    %39 = vector.broadcast %cst_24 : f32 to vector<8x512xf32>
    %40 = arith.maximumf %38, %39 : vector<8x512xf32>
    %41 = arith.truncf %40 : vector<8x512xf32> to vector<8x512xbf16>
    %c0_25 = arith.constant 0 : index
    %c128 = arith.constant 128 : index
    %42 = vector.load %arg16[%c0_25, %c128] : memref<8x768xbf16, #tpu.memory_space<vmem>>, vector<8x512xbf16>
    tpu.vector_store %arg16[%c0_25, %c128], %41 {strides = array<i32>} : memref<8x768xbf16, #tpu.memory_space<vmem>>, vector<8x512xbf16>,
    %c0_26 = arith.constant 0 : index
    %c55 = arith.constant 55 : index
    %43 = vector.load %arg16[%c0_26, %c55] : memref<8x768xbf16, #tpu.memory_space<vmem>>, vector<8x512xbf16>
    %c0_27 = arith.constant 0 : index
    %c0_28 = arith.constant 0 : index
    %c0_29 = arith.constant 0 : index
    %44 = vector.load %arg5[%c0_27, %c0_28, %c0_29] : memref<27x1x512xbf16, #tpu.memory_space<vmem>>, vector<1x1x512xbf16>
    %45 = vector.shape_cast %44 : vector<1x1x512xbf16> to vector<1x512xbf16>
    %46 = vector.broadcast %45 : vector<1x512xbf16> to vector<8x512xbf16>
    %47 = arith.mulf %43, %46 : vector<8x512xbf16>
    %c0_30 = arith.constant 0 : index
    %c0_31 = arith.constant 0 : index
    %48 = vector.load %arg17[%c0_30, %c0_31] : memref<216x512xbf16, #tpu.memory_space<vmem>>, vector<8x512xbf16>
    tpu.vector_store %arg17[%c0_30, %c0_31], %47 {strides = array<i32>} : memref<216x512xbf16, #tpu.memory_space<vmem>>, vector<8x512xbf16>,
    %c0_32 = arith.constant 0 : index
    %c56 = arith.constant 56 : index
    %49 = vector.load %arg16[%c0_32, %c56] : memref<8x768xbf16, #tpu.memory_space<vmem>>, vector<8x512xbf16>
    %c1 = arith.constant 1 : index
    %c0_33 = arith.constant 0 : index
    %c0_34 = arith.constant 0 : index
    %50 = vector.load %arg5[%c1, %c0_33, %c0_34] : memref<27x1x512xbf16, #tpu.memory_space<vmem>>, vector<1x1x512xbf16>
    %51 = vector.shape_cast %50 : vector<1x1x512xbf16> to vector<1x512xbf16>
    %52 = vector.broadcast %51 : vector<1x512xbf16> to vector<8x512xbf16>
    %53 = arith.mulf %49, %52 : vector<8x512xbf16>
    %c8 = arith.constant 8 : index
    %c0_35 = arith.constant 0 : index
    %54 = vector.load %arg17[%c8, %c0_35] : memref<216x512xbf16, #tpu.memory_space<vmem>>, vector<8x512xbf16>
    tpu.vector_store %arg17[%c8, %c0_35], %53 {strides = array<i32>} : memref<216x512xbf16, #tpu.memory_space<vmem>>, vector<8x512xbf16>,
    %c0_36 = arith.constant 0 : index
    %c57 = arith.constant 57 : index
    %55 = vector.load %arg16[%c0_36, %c57] : memref<8x768xbf16, #tpu.memory_space<vmem>>, vector<8x512xbf16>
    %c2 = arith.constant 2 : index
    %c0_37 = arith.constant 0 : index
    %c0_38 = arith.constant 0 : index
    %56 = vector.load %arg5[%c2, %c0_37, %c0_38] : memref<27x1x512xbf16, #tpu.memory_space<vmem>>, vector<1x1x512xbf16>
    %57 = vector.shape_cast %56 : vector<1x1x512xbf16> to vector<1x512xbf16>
    %58 = vector.broadcast %57 : vector<1x512xbf16> to vector<8x512xbf16>
    %59 = arith.mulf %55, %58 : vector<8x512xbf16>
    %c16 = arith.constant 16 : index
    %c0_39 = arith.constant 0 : index
    %60 = vector.load %arg17[%c16, %c0_39] : memref<216x512xbf16, #tpu.memory_space<vmem>>, vector<8x512xbf16>
    tpu.vector_store %arg17[%c16, %c0_39], %59 {strides = array<i32>} : memref<216x512xbf16, #tpu.memory_space<vmem>>, vector<8x512xbf16>,
    %c0_40 = arith.constant 0 : index
    %c63 = arith.constant 63 : index
    %61 = vector.load %arg16[%c0_40, %c63] : memref<8x768xbf16, #tpu.memory_space<vmem>>, vector<8x512xbf16>
    %c3 = arith.constant 3 : index
    %c0_41 = arith.constant 0 : index
    %c0_42 = arith.constant 0 : index
    %62 = vector.load %arg5[%c3, %c0_41, %c0_42] : memref<27x1x512xbf16, #tpu.memory_space<vmem>>, vector<1x1x512xbf16>
    %63 = vector.shape_cast %62 : vector<1x1x512xbf16> to vector<1x512xbf16>
    %64 = vector.broadcast %63 : vector<1x512xbf16> to vector<8x512xbf16>
    %65 = arith.mulf %61, %64 : vector<8x512xbf16>
    %c24 = arith.constant 24 : index
    %c0_43 = arith.constant 0 : index
    %66 = vector.load %arg17[%c24, %c0_43] : memref<216x512xbf16, #tpu.memory_space<vmem>>, vector<8x512xbf16>
    tpu.vector_store %arg17[%c24, %c0_43], %65 {strides = array<i32>} : memref<216x512xbf16, #tpu.memory_space<vmem>>, vector<8x512xbf16>,
    %c0_44 = arith.constant 0 : index
    %c64_45 = arith.constant 64 : index
    %67 = vector.load %arg16[%c0_44, %c64_45] : memref<8x768xbf16, #tpu.memory_space<vmem>>, vector<8x512xbf16>
    %c4 = arith.constant 4 : index
    %c0_46 = arith.constant 0 : index
    %c0_47 = arith.constant 0 : index
    %68 = vector.load %arg5[%c4, %c0_46, %c0_47] : memref<27x1x512xbf16, #tpu.memory_space<vmem>>, vector<1x1x512xbf16>
    %69 = vector.shape_cast %68 : vector<1x1x512xbf16> to vector<1x512xbf16>
    %70 = vector.broadcast %69 : vector<1x512xbf16> to vector<8x512xbf16>
    %71 = arith.mulf %67, %70 : vector<8x512xbf16>
    %c32 = arith.constant 32 : index
    %c0_48 = arith.constant 0 : index
    %72 = vector.load %arg17[%c32, %c0_48] : memref<216x512xbf16, #tpu.memory_space<vmem>>, vector<8x512xbf16>
    tpu.vector_store %arg17[%c32, %c0_48], %71 {strides = array<i32>} : memref<216x512xbf16, #tpu.memory_space<vmem>>, vector<8x512xbf16>,
    %c0_49 = arith.constant 0 : index
    %c65 = arith.constant 65 : index
    %73 = vector.load %arg16[%c0_49, %c65] : memref<8x768xbf16, #tpu.memory_space<vmem>>, vector<8x512xbf16>
    %c5 = arith.constant 5 : index
    %c0_50 = arith.constant 0 : index
    %c0_51 = arith.constant 0 : index
    %74 = vector.load %arg5[%c5, %c0_50, %c0_51] : memref<27x1x512xbf16, #tpu.memory_space<vmem>>, vector<1x1x512xbf16>
    %75 = vector.shape_cast %74 : vector<1x1x512xbf16> to vector<1x512xbf16>
    %76 = vector.broadcast %75 : vector<1x512xbf16> to vector<8x512xbf16>
    %77 = arith.mulf %73, %76 : vector<8x512xbf16>
    %c40 = arith.constant 40 : index
    %c0_52 = arith.constant 0 : index
    %78 = vector.load %arg17[%c40, %c0_52] : memref<216x512xbf16, #tpu.memory_space<vmem>>, vector<8x512xbf16>
    tpu.vector_store %arg17[%c40, %c0_52], %77 {strides = array<i32>} : memref<216x512xbf16, #tpu.memory_space<vmem>>, vector<8x512xbf16>,
    %c0_53 = arith.constant 0 : index
    %c71 = arith.constant 71 : index
    %79 = vector.load %arg16[%c0_53, %c71] : memref<8x768xbf16, #tpu.memory_space<vmem>>, vector<8x512xbf16>
    %c6 = arith.constant 6 : index
    %c0_54 = arith.constant 0 : index
    %c0_55 = arith.constant 0 : index
    %80 = vector.load %arg5[%c6, %c0_54, %c0_55] : memref<27x1x512xbf16, #tpu.memory_space<vmem>>, vector<1x1x512xbf16>
    %81 = vector.shape_cast %80 : vector<1x1x512xbf16> to vector<1x512xbf16>
    %82 = vector.broadcast %81 : vector<1x512xbf16> to vector<8x512xbf16>
    %83 = arith.mulf %79, %82 : vector<8x512xbf16>
    %c48 = arith.constant 48 : index
    %c0_56 = arith.constant 0 : index
    %84 = vector.load %arg17[%c48, %c0_56] : memref<216x512xbf16, #tpu.memory_space<vmem>>, vector<8x512xbf16>
    tpu.vector_store %arg17[%c48, %c0_56], %83 {strides = array<i32>} : memref<216x512xbf16, #tpu.memory_space<vmem>>, vector<8x512xbf16>,
    %c0_57 = arith.constant 0 : index
    %c72 = arith.constant 72 : index
    %85 = vector.load %arg16[%c0_57, %c72] : memref<8x768xbf16, #tpu.memory_space<vmem>>, vector<8x512xbf16>
    %c7 = arith.constant 7 : index
    %c0_58 = arith.constant 0 : index
    %c0_59 = arith.constant 0 : index
    %86 = vector.load %arg5[%c7, %c0_58, %c0_59] : memref<27x1x512xbf16, #tpu.memory_space<vmem>>, vector<1x1x512xbf16>
    %87 = vector.shape_cast %86 : vector<1x1x512xbf16> to vector<1x512xbf16>
    %88 = vector.broadcast %87 : vector<1x512xbf16> to vector<8x512xbf16>
    %89 = arith.mulf %85, %88 : vector<8x512xbf16>
    %c56_60 = arith.constant 56 : index
    %c0_61 = arith.constant 0 : index
    %90 = vector.load %arg17[%c56_60, %c0_61] : memref<216x512xbf16, #tpu.memory_space<vmem>>, vector<8x512xbf16>
    tpu.vector_store %arg17[%c56_60, %c0_61], %89 {strides = array<i32>} : memref<216x512xbf16, #tpu.memory_space<vmem>>, vector<8x512xbf16>,
    %c0_62 = arith.constant 0 : index
    %c73 = arith.constant 73 : index
    %91 = vector.load %arg16[%c0_62, %c73] : memref<8x768xbf16, #tpu.memory_space<vmem>>, vector<8x512xbf16>
    %c8_63 = arith.constant 8 : index
    %c0_64 = arith.constant 0 : index
    %c0_65 = arith.constant 0 : index
    %92 = vector.load %arg5[%c8_63, %c0_64, %c0_65] : memref<27x1x512xbf16, #tpu.memory_space<vmem>>, vector<1x1x512xbf16>
    %93 = vector.shape_cast %92 : vector<1x1x512xbf16> to vector<1x512xbf16>
    %94 = vector.broadcast %93 : vector<1x512xbf16> to vector<8x512xbf16>
    %95 = arith.mulf %91, %94 : vector<8x512xbf16>
    %c64_66 = arith.constant 64 : index
    %c0_67 = arith.constant 0 : index
    %96 = vector.load %arg17[%c64_66, %c0_67] : memref<216x512xbf16, #tpu.memory_space<vmem>>, vector<8x512xbf16>
    tpu.vector_store %arg17[%c64_66, %c0_67], %95 {strides = array<i32>} : memref<216x512xbf16, #tpu.memory_space<vmem>>, vector<8x512xbf16>,
    %c0_68 = arith.constant 0 : index
    %c119 = arith.constant 119 : index
    %97 = vector.load %arg16[%c0_68, %c119] : memref<8x768xbf16, #tpu.memory_space<vmem>>, vector<8x512xbf16>
    %c9 = arith.constant 9 : index
    %c0_69 = arith.constant 0 : index
    %c0_70 = arith.constant 0 : index
    %98 = vector.load %arg5[%c9, %c0_69, %c0_70] : memref<27x1x512xbf16, #tpu.memory_space<vmem>>, vector<1x1x512xbf16>
    %99 = vector.shape_cast %98 : vector<1x1x512xbf16> to vector<1x512xbf16>
    %100 = vector.broadcast %99 : vector<1x512xbf16> to vector<8x512xbf16>
    %101 = arith.mulf %97, %100 : vector<8x512xbf16>
    %c72_71 = arith.constant 72 : index
    %c0_72 = arith.constant 0 : index
    %102 = vector.load %arg17[%c72_71, %c0_72] : memref<216x512xbf16, #tpu.memory_space<vmem>>, vector<8x512xbf16>
    tpu.vector_store %arg17[%c72_71, %c0_72], %101 {strides = array<i32>} : memref<216x512xbf16, #tpu.memory_space<vmem>>, vector<8x512xbf16>,
    %c0_73 = arith.constant 0 : index
    %c120 = arith.constant 120 : index
    %103 = vector.load %arg16[%c0_73, %c120] : memref<8x768xbf16, #tpu.memory_space<vmem>>, vector<8x512xbf16>
    %c10 = arith.constant 10 : index
    %c0_74 = arith.constant 0 : index
    %c0_75 = arith.constant 0 : index
    %104 = vector.load %arg5[%c10, %c0_74, %c0_75] : memref<27x1x512xbf16, #tpu.memory_space<vmem>>, vector<1x1x512xbf16>
    %105 = vector.shape_cast %104 : vector<1x1x512xbf16> to vector<1x512xbf16>
    %106 = vector.broadcast %105 : vector<1x512xbf16> to vector<8x512xbf16>
    %107 = arith.mulf %103, %106 : vector<8x512xbf16>
    %c80 = arith.constant 80 : index
    %c0_76 = arith.constant 0 : index
    %108 = vector.load %arg17[%c80, %c0_76] : memref<216x512xbf16, #tpu.memory_space<vmem>>, vector<8x512xbf16>
    tpu.vector_store %arg17[%c80, %c0_76], %107 {strides = array<i32>} : memref<216x512xbf16, #tpu.memory_space<vmem>>, vector<8x512xbf16>,
    %c0_77 = arith.constant 0 : index
    %c121 = arith.constant 121 : index
    %109 = vector.load %arg16[%c0_77, %c121] : memref<8x768xbf16, #tpu.memory_space<vmem>>, vector<8x512xbf16>
    %c11 = arith.constant 11 : index
    %c0_78 = arith.constant 0 : index
    %c0_79 = arith.constant 0 : index
    %110 = vector.load %arg5[%c11, %c0_78, %c0_79] : memref<27x1x512xbf16, #tpu.memory_space<vmem>>, vector<1x1x512xbf16>
    %111 = vector.shape_cast %110 : vector<1x1x512xbf16> to vector<1x512xbf16>
    %112 = vector.broadcast %111 : vector<1x512xbf16> to vector<8x512xbf16>
    %113 = arith.mulf %109, %112 : vector<8x512xbf16>
    %c88 = arith.constant 88 : index
    %c0_80 = arith.constant 0 : index
    %114 = vector.load %arg17[%c88, %c0_80] : memref<216x512xbf16, #tpu.memory_space<vmem>>, vector<8x512xbf16>
    tpu.vector_store %arg17[%c88, %c0_80], %113 {strides = array<i32>} : memref<216x512xbf16, #tpu.memory_space<vmem>>, vector<8x512xbf16>,
    %c0_81 = arith.constant 0 : index
    %c127 = arith.constant 127 : index
    %115 = vector.load %arg16[%c0_81, %c127] : memref<8x768xbf16, #tpu.memory_space<vmem>>, vector<8x512xbf16>
    %c12 = arith.constant 12 : index
    %c0_82 = arith.constant 0 : index
    %c0_83 = arith.constant 0 : index
    %116 = vector.load %arg5[%c12, %c0_82, %c0_83] : memref<27x1x512xbf16, #tpu.memory_space<vmem>>, vector<1x1x512xbf16>
    %117 = vector.shape_cast %116 : vector<1x1x512xbf16> to vector<1x512xbf16>
    %118 = vector.broadcast %117 : vector<1x512xbf16> to vector<8x512xbf16>
    %119 = arith.mulf %115, %118 : vector<8x512xbf16>
    %c96 = arith.constant 96 : index
    %c0_84 = arith.constant 0 : index
    %120 = vector.load %arg17[%c96, %c0_84] : memref<216x512xbf16, #tpu.memory_space<vmem>>, vector<8x512xbf16>
    tpu.vector_store %arg17[%c96, %c0_84], %119 {strides = array<i32>} : memref<216x512xbf16, #tpu.memory_space<vmem>>, vector<8x512xbf16>,
    %c0_85 = arith.constant 0 : index
    %c128_86 = arith.constant 128 : index
    %121 = vector.load %arg16[%c0_85, %c128_86] : memref<8x768xbf16, #tpu.memory_space<vmem>>, vector<8x512xbf16>
    %c104 = arith.constant 104 : index
    %c0_87 = arith.constant 0 : index
    %122 = vector.load %arg17[%c104, %c0_87] : memref<216x512xbf16, #tpu.memory_space<vmem>>, vector<8x512xbf16>
    tpu.vector_store %arg17[%c104, %c0_87], %121 {strides = array<i32>} : memref<216x512xbf16, #tpu.memory_space<vmem>>, vector<8x512xbf16>,
    %c0_88 = arith.constant 0 : index
    %c129 = arith.constant 129 : index
    %123 = vector.load %arg16[%c0_88, %c129] : memref<8x768xbf16, #tpu.memory_space<vmem>>, vector<8x512xbf16>
    %c14 = arith.constant 14 : index
    %c0_89 = arith.constant 0 : index
    %c0_90 = arith.constant 0 : index
    %124 = vector.load %arg5[%c14, %c0_89, %c0_90] : memref<27x1x512xbf16, #tpu.memory_space<vmem>>, vector<1x1x512xbf16>
    %125 = vector.shape_cast %124 : vector<1x1x512xbf16> to vector<1x512xbf16>
    %126 = vector.broadcast %125 : vector<1x512xbf16> to vector<8x512xbf16>
    %127 = arith.mulf %123, %126 : vector<8x512xbf16>
    %c112 = arith.constant 112 : index
    %c0_91 = arith.constant 0 : index
    %128 = vector.load %arg17[%c112, %c0_91] : memref<216x512xbf16, #tpu.memory_space<vmem>>, vector<8x512xbf16>
    tpu.vector_store %arg17[%c112, %c0_91], %127 {strides = array<i32>} : memref<216x512xbf16, #tpu.memory_space<vmem>>, vector<8x512xbf16>,
    %c0_92 = arith.constant 0 : index
    %c135 = arith.constant 135 : index
    %129 = vector.load %arg16[%c0_92, %c135] : memref<8x768xbf16, #tpu.memory_space<vmem>>, vector<8x512xbf16>
    %c15 = arith.constant 15 : index
    %c0_93 = arith.constant 0 : index
    %c0_94 = arith.constant 0 : index
    %130 = vector.load %arg5[%c15, %c0_93, %c0_94] : memref<27x1x512xbf16, #tpu.memory_space<vmem>>, vector<1x1x512xbf16>
    %131 = vector.shape_cast %130 : vector<1x1x512xbf16> to vector<1x512xbf16>
    %132 = vector.broadcast %131 : vector<1x512xbf16> to vector<8x512xbf16>
    %133 = arith.mulf %129, %132 : vector<8x512xbf16>
    %c120_95 = arith.constant 120 : index
    %c0_96 = arith.constant 0 : index
    %134 = vector.load %arg17[%c120_95, %c0_96] : memref<216x512xbf16, #tpu.memory_space<vmem>>, vector<8x512xbf16>
    tpu.vector_store %arg17[%c120_95, %c0_96], %133 {strides = array<i32>} : memref<216x512xbf16, #tpu.memory_space<vmem>>, vector<8x512xbf16>,
    %c0_97 = arith.constant 0 : index
    %c136 = arith.constant 136 : index
    %135 = vector.load %arg16[%c0_97, %c136] : memref<8x768xbf16, #tpu.memory_space<vmem>>, vector<8x512xbf16>
    %c16_98 = arith.constant 16 : index
    %c0_99 = arith.constant 0 : index
    %c0_100 = arith.constant 0 : index
    %136 = vector.load %arg5[%c16_98, %c0_99, %c0_100] : memref<27x1x512xbf16, #tpu.memory_space<vmem>>, vector<1x1x512xbf16>
    %137 = vector.shape_cast %136 : vector<1x1x512xbf16> to vector<1x512xbf16>
    %138 = vector.broadcast %137 : vector<1x512xbf16> to vector<8x512xbf16>
    %139 = arith.mulf %135, %138 : vector<8x512xbf16>
    %c128_101 = arith.constant 128 : index
    %c0_102 = arith.constant 0 : index
    %140 = vector.load %arg17[%c128_101, %c0_102] : memref<216x512xbf16, #tpu.memory_space<vmem>>, vector<8x512xbf16>
    tpu.vector_store %arg17[%c128_101, %c0_102], %139 {strides = array<i32>} : memref<216x512xbf16, #tpu.memory_space<vmem>>, vector<8x512xbf16>,
    %c0_103 = arith.constant 0 : index
    %c137 = arith.constant 137 : index
    %141 = vector.load %arg16[%c0_103, %c137] : memref<8x768xbf16, #tpu.memory_space<vmem>>, vector<8x512xbf16>
    %c17 = arith.constant 17 : index
    %c0_104 = arith.constant 0 : index
    %c0_105 = arith.constant 0 : index
    %142 = vector.load %arg5[%c17, %c0_104, %c0_105] : memref<27x1x512xbf16, #tpu.memory_space<vmem>>, vector<1x1x512xbf16>
    %143 = vector.shape_cast %142 : vector<1x1x512xbf16> to vector<1x512xbf16>
    %144 = vector.broadcast %143 : vector<1x512xbf16> to vector<8x512xbf16>
    %145 = arith.mulf %141, %144 : vector<8x512xbf16>
    %c136_106 = arith.constant 136 : index
    %c0_107 = arith.constant 0 : index
    %146 = vector.load %arg17[%c136_106, %c0_107] : memref<216x512xbf16, #tpu.memory_space<vmem>>, vector<8x512xbf16>
    tpu.vector_store %arg17[%c136_106, %c0_107], %145 {strides = array<i32>} : memref<216x512xbf16, #tpu.memory_space<vmem>>, vector<8x512xbf16>,
    %c0_108 = arith.constant 0 : index
    %c183 = arith.constant 183 : index
    %147 = vector.load %arg16[%c0_108, %c183] : memref<8x768xbf16, #tpu.memory_space<vmem>>, vector<8x512xbf16>
    %c18 = arith.constant 18 : index
    %c0_109 = arith.constant 0 : index
    %c0_110 = arith.constant 0 : index
    %148 = vector.load %arg5[%c18, %c0_109, %c0_110] : memref<27x1x512xbf16, #tpu.memory_space<vmem>>, vector<1x1x512xbf16>
    %149 = vector.shape_cast %148 : vector<1x1x512xbf16> to vector<1x512xbf16>
    %150 = vector.broadcast %149 : vector<1x512xbf16> to vector<8x512xbf16>
    %151 = arith.mulf %147, %150 : vector<8x512xbf16>
    %c144 = arith.constant 144 : index
    %c0_111 = arith.constant 0 : index
    %152 = vector.load %arg17[%c144, %c0_111] : memref<216x512xbf16, #tpu.memory_space<vmem>>, vector<8x512xbf16>
    tpu.vector_store %arg17[%c144, %c0_111], %151 {strides = array<i32>} : memref<216x512xbf16, #tpu.memory_space<vmem>>, vector<8x512xbf16>,
    %c0_112 = arith.constant 0 : index
    %c184 = arith.constant 184 : index
    %153 = vector.load %arg16[%c0_112, %c184] : memref<8x768xbf16, #tpu.memory_space<vmem>>, vector<8x512xbf16>
    %c19 = arith.constant 19 : index
    %c0_113 = arith.constant 0 : index
    %c0_114 = arith.constant 0 : index
    %154 = vector.load %arg5[%c19, %c0_113, %c0_114] : memref<27x1x512xbf16, #tpu.memory_space<vmem>>, vector<1x1x512xbf16>
    %155 = vector.shape_cast %154 : vector<1x1x512xbf16> to vector<1x512xbf16>
    %156 = vector.broadcast %155 : vector<1x512xbf16> to vector<8x512xbf16>
    %157 = arith.mulf %153, %156 : vector<8x512xbf16>
    %c152 = arith.constant 152 : index
    %c0_115 = arith.constant 0 : index
    %158 = vector.load %arg17[%c152, %c0_115] : memref<216x512xbf16, #tpu.memory_space<vmem>>, vector<8x512xbf16>
    tpu.vector_store %arg17[%c152, %c0_115], %157 {strides = array<i32>} : memref<216x512xbf16, #tpu.memory_space<vmem>>, vector<8x512xbf16>,
    %c0_116 = arith.constant 0 : index
    %c185 = arith.constant 185 : index
    %159 = vector.load %arg16[%c0_116, %c185] : memref<8x768xbf16, #tpu.memory_space<vmem>>, vector<8x512xbf16>
    %c20 = arith.constant 20 : index
    %c0_117 = arith.constant 0 : index
    %c0_118 = arith.constant 0 : index
    %160 = vector.load %arg5[%c20, %c0_117, %c0_118] : memref<27x1x512xbf16, #tpu.memory_space<vmem>>, vector<1x1x512xbf16>
    %161 = vector.shape_cast %160 : vector<1x1x512xbf16> to vector<1x512xbf16>
    %162 = vector.broadcast %161 : vector<1x512xbf16> to vector<8x512xbf16>
    %163 = arith.mulf %159, %162 : vector<8x512xbf16>
    %c160 = arith.constant 160 : index
    %c0_119 = arith.constant 0 : index
    %164 = vector.load %arg17[%c160, %c0_119] : memref<216x512xbf16, #tpu.memory_space<vmem>>, vector<8x512xbf16>
    tpu.vector_store %arg17[%c160, %c0_119], %163 {strides = array<i32>} : memref<216x512xbf16, #tpu.memory_space<vmem>>, vector<8x512xbf16>,
    %c0_120 = arith.constant 0 : index
    %c191 = arith.constant 191 : index
    %165 = vector.load %arg16[%c0_120, %c191] : memref<8x768xbf16, #tpu.memory_space<vmem>>, vector<8x512xbf16>
    %c21 = arith.constant 21 : index
    %c0_121 = arith.constant 0 : index
    %c0_122 = arith.constant 0 : index
    %166 = vector.load %arg5[%c21, %c0_121, %c0_122] : memref<27x1x512xbf16, #tpu.memory_space<vmem>>, vector<1x1x512xbf16>
    %167 = vector.shape_cast %166 : vector<1x1x512xbf16> to vector<1x512xbf16>
    %168 = vector.broadcast %167 : vector<1x512xbf16> to vector<8x512xbf16>
    %169 = arith.mulf %165, %168 : vector<8x512xbf16>
    %c168 = arith.constant 168 : index
    %c0_123 = arith.constant 0 : index
    %170 = vector.load %arg17[%c168, %c0_123] : memref<216x512xbf16, #tpu.memory_space<vmem>>, vector<8x512xbf16>
    tpu.vector_store %arg17[%c168, %c0_123], %169 {strides = array<i32>} : memref<216x512xbf16, #tpu.memory_space<vmem>>, vector<8x512xbf16>,
    %c0_124 = arith.constant 0 : index
    %c192 = arith.constant 192 : index
    %171 = vector.load %arg16[%c0_124, %c192] : memref<8x768xbf16, #tpu.memory_space<vmem>>, vector<8x512xbf16>
    %c22 = arith.constant 22 : index
    %c0_125 = arith.constant 0 : index
    %c0_126 = arith.constant 0 : index
    %172 = vector.load %arg5[%c22, %c0_125, %c0_126] : memref<27x1x512xbf16, #tpu.memory_space<vmem>>, vector<1x1x512xbf16>
    %173 = vector.shape_cast %172 : vector<1x1x512xbf16> to vector<1x512xbf16>
    %174 = vector.broadcast %173 : vector<1x512xbf16> to vector<8x512xbf16>
    %175 = arith.mulf %171, %174 : vector<8x512xbf16>
    %c176 = arith.constant 176 : index
    %c0_127 = arith.constant 0 : index
    %176 = vector.load %arg17[%c176, %c0_127] : memref<216x512xbf16, #tpu.memory_space<vmem>>, vector<8x512xbf16>
    tpu.vector_store %arg17[%c176, %c0_127], %175 {strides = array<i32>} : memref<216x512xbf16, #tpu.memory_space<vmem>>, vector<8x512xbf16>,
    %c0_128 = arith.constant 0 : index
    %c193 = arith.constant 193 : index
    %177 = vector.load %arg16[%c0_128, %c193] : memref<8x768xbf16, #tpu.memory_space<vmem>>, vector<8x512xbf16>
    %c23 = arith.constant 23 : index
    %c0_129 = arith.constant 0 : index
    %c0_130 = arith.constant 0 : index
    %178 = vector.load %arg5[%c23, %c0_129, %c0_130] : memref<27x1x512xbf16, #tpu.memory_space<vmem>>, vector<1x1x512xbf16>
    %179 = vector.shape_cast %178 : vector<1x1x512xbf16> to vector<1x512xbf16>
    %180 = vector.broadcast %179 : vector<1x512xbf16> to vector<8x512xbf16>
    %181 = arith.mulf %177, %180 : vector<8x512xbf16>
    %c184_131 = arith.constant 184 : index
    %c0_132 = arith.constant 0 : index
    %182 = vector.load %arg17[%c184_131, %c0_132] : memref<216x512xbf16, #tpu.memory_space<vmem>>, vector<8x512xbf16>
    tpu.vector_store %arg17[%c184_131, %c0_132], %181 {strides = array<i32>} : memref<216x512xbf16, #tpu.memory_space<vmem>>, vector<8x512xbf16>,
    %c0_133 = arith.constant 0 : index
    %c199 = arith.constant 199 : index
    %183 = vector.load %arg16[%c0_133, %c199] : memref<8x768xbf16, #tpu.memory_space<vmem>>, vector<8x512xbf16>
    %c24_134 = arith.constant 24 : index
    %c0_135 = arith.constant 0 : index
    %c0_136 = arith.constant 0 : index
    %184 = vector.load %arg5[%c24_134, %c0_135, %c0_136] : memref<27x1x512xbf16, #tpu.memory_space<vmem>>, vector<1x1x512xbf16>
    %185 = vector.shape_cast %184 : vector<1x1x512xbf16> to vector<1x512xbf16>
    %186 = vector.broadcast %185 : vector<1x512xbf16> to vector<8x512xbf16>
    %187 = arith.mulf %183, %186 : vector<8x512xbf16>
    %c192_137 = arith.constant 192 : index
    %c0_138 = arith.constant 0 : index
    %188 = vector.load %arg17[%c192_137, %c0_138] : memref<216x512xbf16, #tpu.memory_space<vmem>>, vector<8x512xbf16>
    tpu.vector_store %arg17[%c192_137, %c0_138], %187 {strides = array<i32>} : memref<216x512xbf16, #tpu.memory_space<vmem>>, vector<8x512xbf16>,
    %c0_139 = arith.constant 0 : index
    %c200 = arith.constant 200 : index
    %189 = vector.load %arg16[%c0_139, %c200] : memref<8x768xbf16, #tpu.memory_space<vmem>>, vector<8x512xbf16>
    %c25 = arith.constant 25 : index
    %c0_140 = arith.constant 0 : index
    %c0_141 = arith.constant 0 : index
    %190 = vector.load %arg5[%c25, %c0_140, %c0_141] : memref<27x1x512xbf16, #tpu.memory_space<vmem>>, vector<1x1x512xbf16>
    %191 = vector.shape_cast %190 : vector<1x1x512xbf16> to vector<1x512xbf16>
    %192 = vector.broadcast %191 : vector<1x512xbf16> to vector<8x512xbf16>
    %193 = arith.mulf %189, %192 : vector<8x512xbf16>
    %c200_142 = arith.constant 200 : index
    %c0_143 = arith.constant 0 : index
    %194 = vector.load %arg17[%c200_142, %c0_143] : memref<216x512xbf16, #tpu.memory_space<vmem>>, vector<8x512xbf16>
    tpu.vector_store %arg17[%c200_142, %c0_143], %193 {strides = array<i32>} : memref<216x512xbf16, #tpu.memory_space<vmem>>, vector<8x512xbf16>,
    %c0_144 = arith.constant 0 : index
    %c201 = arith.constant 201 : index
    %195 = vector.load %arg16[%c0_144, %c201] : memref<8x768xbf16, #tpu.memory_space<vmem>>, vector<8x512xbf16>
    %c26 = arith.constant 26 : index
    %c0_145 = arith.constant 0 : index
    %c0_146 = arith.constant 0 : index
    %196 = vector.load %arg5[%c26, %c0_145, %c0_146] : memref<27x1x512xbf16, #tpu.memory_space<vmem>>, vector<1x1x512xbf16>
    %197 = vector.shape_cast %196 : vector<1x1x512xbf16> to vector<1x512xbf16>
    %198 = vector.broadcast %197 : vector<1x512xbf16> to vector<8x512xbf16>
    %199 = arith.mulf %195, %198 : vector<8x512xbf16>
    %c208 = arith.constant 208 : index
    %c0_147 = arith.constant 0 : index
    %200 = vector.load %arg17[%c208, %c0_147] : memref<216x512xbf16, #tpu.memory_space<vmem>>, vector<8x512xbf16>
    tpu.vector_store %arg17[%c208, %c0_147], %199 {strides = array<i32>} : memref<216x512xbf16, #tpu.memory_space<vmem>>, vector<8x512xbf16>,
    %c0_148 = arith.constant 0 : index
    %c0_149 = arith.constant 0 : index
    %201 = vector.load %arg9[%c0_148, %c0_149] : memref<8x216xbf16, #tpu.memory_space<vmem>>, vector<8x216xbf16>
    %c0_150 = arith.constant 0 : index
    %c0_151 = arith.constant 0 : index
    %202 = vector.load %arg17[%c0_150, %c0_151] : memref<216x512xbf16, #tpu.memory_space<vmem>>, vector<216x512xbf16>
    %cst_152 = arith.constant dense<0.000000e+00> : vector<8x512xf32>
    %203 = tpu.matmul %201, %202, %cst_152 {dimension_numbers = #tpu.dot_dimension_numbers<[1], [0], [0], [1], [0, 0, 1, 1], [], []>} : vector<8x216xbf16>, vector<216x512xbf16>, vector<8x512xf32> -> vector<8x512xf32>
    %c0_153 = arith.constant 0 : index
    %c0_154 = arith.constant 0 : index
    %204 = vector.load %arg10[%c0_153, %c0_154] : memref<8x1xf32, #tpu.memory_space<vmem>>, vector<8x1xf32>
    %205 = vector.broadcast %204 : vector<8x1xf32> to vector<8x512xf32>
    %206 = arith.mulf %203, %205 : vector<8x512xf32>
    %c0_155 = arith.constant 0 : index
    %c0_156 = arith.constant 0 : index
    %207 = vector.load %arg11[%c0_155, %c0_156] : memref<8x1xf32, #tpu.memory_space<vmem>>, vector<8x1xf32>
    %208 = vector.broadcast %207 : vector<8x1xf32> to vector<8x512xf32>
    %209 = arith.addf %206, %208 : vector<8x512xf32>
    %cst_157 = arith.constant 0.000000e+00 : f32
    %210 = vector.broadcast %cst_157 : f32 to vector<8x512xf32>
    %211 = arith.maximumf %209, %210 : vector<8x512xf32>
    %c0_158 = arith.constant 0 : index
    %c0_159 = arith.constant 0 : index
    %212 = vector.load %arg12[%c0_158, %c0_159] : memref<32x8xbf16, #tpu.memory_space<vmem>>, vector<32x8xbf16>
    %213 = arith.truncf %211 : vector<8x512xf32> to vector<8x512xbf16>
    %cst_160 = arith.constant dense<0.000000e+00> : vector<32x512xf32>
    %214 = tpu.matmul %212, %213, %cst_160 {dimension_numbers = #tpu.dot_dimension_numbers<[1], [0], [0], [1], [0, 0, 1, 1], [], []>} : vector<32x8xbf16>, vector<8x512xbf16>, vector<32x512xf32> -> vector<32x512xf32>
    %c0_161 = arith.constant 0 : index
    %c0_162 = arith.constant 0 : index
    %215 = vector.load %arg13[%c0_161, %c0_162] : memref<32x1xf32, #tpu.memory_space<vmem>>, vector<32x1xf32>
    %216 = vector.broadcast %215 : vector<32x1xf32> to vector<32x512xf32>
    %217 = arith.mulf %214, %216 : vector<32x512xf32>
    %c0_163 = arith.constant 0 : index
    %c0_164 = arith.constant 0 : index
    %218 = vector.load %arg14[%c0_163, %c0_164] : memref<32x1xf32, #tpu.memory_space<vmem>>, vector<32x1xf32>
    %219 = vector.broadcast %218 : vector<32x1xf32> to vector<32x512xf32>
    %220 = arith.addf %217, %219 : vector<32x512xf32>
    %c0_165 = arith.constant 0 : index
    %c0_166 = arith.constant 0 : index
    %c0_167 = arith.constant 0 : index
    %221 = vector.load %arg3[%c0_165, %c0_166, %c0_167] : memref<1x32x512xf32, #tpu.memory_space<vmem>>, vector<1x32x512xf32>
    %222 = vector.shape_cast %221 : vector<1x32x512xf32> to vector<32x512xf32>
    %223 = arith.addf %220, %222 : vector<32x512xf32>
    %cst_168 = arith.constant 0.000000e+00 : f32
    %224 = vector.broadcast %cst_168 : f32 to vector<32x512xf32>
    %225 = arith.maximumf %223, %224 : vector<32x512xf32>
    %c0_169 = arith.constant 0 : index
    %c0_170 = arith.constant 0 : index
    %c0_171 = arith.constant 0 : index
    %226 = vector.load %arg15[%c0_169, %c0_170, %c0_171] : memref<1x32x512xf32, #tpu.memory_space<vmem>>, vector<1x32x512xf32>
    %227 = vector.shape_cast %226 : vector<1x32x512xf32> to vector<32x512xf32>
    %228 = vector.shape_cast %225 : vector<32x512xf32> to vector<1x32x512xf32>
    tpu.vector_store %arg15[%c0_169, %c0_170, %c0_171], %228 {strides = array<i32>} : memref<1x32x512xf32, #tpu.memory_space<vmem>>, vector<1x32x512xf32>,
    return
  }
  func.func @transform_0(%arg0: i32, %arg1: i32) -> (i32, i32, i32) {
    %c1_i32 = arith.constant 1 : i32
    %0 = arith.subi %arg1, %c1_i32 : i32
    %c0_i32 = arith.constant 0 : i32
    %1 = arith.maxsi %0, %c0_i32 : i32
    %c0_i32_0 = arith.constant 0 : i32
    %c0_i32_1 = arith.constant 0 : i32
    return %arg0, %c0_i32_0, %1 : i32, i32, i32
  }
  func.func @transform_1(%arg0: i32, %arg1: i32) -> (i32, i32, i32) {
    %c0_i32 = arith.constant 0 : i32
    %c0_i32_0 = arith.constant 0 : i32
    return %arg0, %c0_i32, %arg1 : i32, i32, i32
  }
  func.func @transform_2(%arg0: i32, %arg1: i32) -> (i32, i32, i32) {
    %c1_i32 = arith.constant 1 : i32
    %0 = arith.addi %arg1, %c1_i32 : i32
    %c0_i32 = arith.constant 0 : i32
    %1 = arith.minsi %0, %c0_i32 : i32
    %c0_i32_0 = arith.constant 0 : i32
    %c0_i32_1 = arith.constant 0 : i32
    return %arg0, %c0_i32_0, %1 : i32, i32, i32
  }
  func.func @transform_3(%arg0: i32, %arg1: i32) -> (i32, i32, i32) {
    %c0_i32 = arith.constant 0 : i32
    %c0_i32_0 = arith.constant 0 : i32
    %c0_i32_1 = arith.constant 0 : i32
    return %c0_i32, %c0_i32_0, %arg1 : i32, i32, i32
  }
  func.func @transform_4(%arg0: i32, %arg1: i32) -> (i32, i32) {
    %c0_i32 = arith.constant 0 : i32
    %c0_i32_0 = arith.constant 0 : i32
    %c0_i32_1 = arith.constant 0 : i32
    return %c0_i32, %c0_i32_0 : i32, i32
  }
  func.func @transform_5(%arg0: i32, %arg1: i32) -> (i32, i32) {
    %c0_i32 = arith.constant 0 : i32
    %c0_i32_0 = arith.constant 0 : i32
    %c0_i32_1 = arith.constant 0 : i32
    return %c0_i32, %c0_i32_0 : i32, i32
  }
  func.func @transform_6(%arg0: i32, %arg1: i32) -> (i32, i32) {
    %c0_i32 = arith.constant 0 : i32
    %c0_i32_0 = arith.constant 0 : i32
    %c0_i32_1 = arith.constant 0 : i32
    return %c0_i32, %c0_i32_0 : i32, i32
  }
  func.func @transform_7(%arg0: i32, %arg1: i32) -> (i32, i32) {
    %c0_i32 = arith.constant 0 : i32
    %c0_i32_0 = arith.constant 0 : i32
    %c0_i32_1 = arith.constant 0 : i32
    return %c0_i32, %c0_i32_0 : i32, i32
  }
  func.func @transform_8(%arg0: i32, %arg1: i32) -> (i32, i32) {
    %c0_i32 = arith.constant 0 : i32
    %c0_i32_0 = arith.constant 0 : i32
    %c0_i32_1 = arith.constant 0 : i32
    return %c0_i32, %c0_i32_0 : i32, i32
  }
  func.func @transform_9(%arg0: i32, %arg1: i32) -> (i32, i32) {
    %c0_i32 = arith.constant 0 : i32
    %c0_i32_0 = arith.constant 0 : i32
    %c0_i32_1 = arith.constant 0 : i32
    return %c0_i32, %c0_i32_0 : i32, i32
  }
  func.func @transform_10(%arg0: i32, %arg1: i32) -> (i32, i32) {
    %c0_i32 = arith.constant 0 : i32
    %c0_i32_0 = arith.constant 0 : i32
    %c0_i32_1 = arith.constant 0 : i32
    return %c0_i32, %c0_i32_0 : i32, i32
  }
  func.func @transform_11(%arg0: i32, %arg1: i32) -> (i32, i32) {
    %c0_i32 = arith.constant 0 : i32
    %c0_i32_0 = arith.constant 0 : i32
    %c0_i32_1 = arith.constant 0 : i32
    return %c0_i32, %c0_i32_0 : i32, i32
  }
  func.func @transform_12(%arg0: i32, %arg1: i32) -> (i32, i32) {
    %c0_i32 = arith.constant 0 : i32
    %c0_i32_0 = arith.constant 0 : i32
    %c0_i32_1 = arith.constant 0 : i32
    return %c0_i32, %c0_i32_0 : i32, i32
  }
  func.func @transform_13(%arg0: i32, %arg1: i32) -> (i32, i32, i32) {
    %c0_i32 = arith.constant 0 : i32
    %c0_i32_0 = arith.constant 0 : i32
    return %arg0, %c0_i32, %arg1 : i32, i32, i32
  }
}

</mosaic_0001>

<llo_original>
// kernel: tpu_custom_call.1
$region0: #{tpu_custom_call.1}
  #allocation0 [shape = 'u32[]', space=smem, size = 0x4, offset = 0x4, fixed_abs, tag = 'smem constant byte address 0x4 - core index']
  #allocation1 [shape = 'u32[144,128]{1,0:T(1,128)}', space=vmem, size = 0x12000, scoped, tag = 'internal scratch']
  #allocation2 [shape = 'bf16[8,768]{1,0:T(8,128)(2,1)}', space=vmem, size = 0x3000, scoped, tag = 'scratch operand']
  #allocation3 [shape = 'bf16[216,512]{1,0:T(8,128)(2,1)}', space=vmem, size = 0x36000, scoped, tag = 'scratch operand']
  %s0 = inlined_call_operand.vmem [shape: f32[2,32,512], index: 0, kind: input, shape index: {}]
  %s1 = inlined_call_operand.hbm [shape: f32[2,32,512], index: 1, kind: input, shape index: {}]
  %s2 = inlined_call_operand.hbm [shape: f32[2,32,512], index: 2, kind: input, shape index: {}]
  %s3 = inlined_call_operand.vmem [shape: bf16[27,1,512], index: 3, kind: input, shape index: {}]
  %s4 = inlined_call_operand.vmem [shape: bf16[8,32], index: 4, kind: input, shape index: {}]
  %s5 = inlined_call_operand.vmem [shape: f32[8,1], index: 5, kind: input, shape index: {}]
  %s6 = inlined_call_operand.vmem [shape: f32[8,1], index: 6, kind: input, shape index: {}]
  %s7 = inlined_call_operand.vmem [shape: bf16[8,216], index: 7, kind: input, shape index: {}]
  %s8 = inlined_call_operand.vmem [shape: f32[8,1], index: 8, kind: input, shape index: {}]
  %s9 = inlined_call_operand.vmem [shape: f32[8,1], index: 9, kind: input, shape index: {}]
  %s10 = inlined_call_operand.vmem [shape: bf16[32,8], index: 10, kind: input, shape index: {}]
  %s11 = inlined_call_operand.vmem [shape: f32[32,1], index: 11, kind: input, shape index: {}]
  %s12 = inlined_call_operand.vmem [shape: f32[32,1], index: 12, kind: input, shape index: {}]
  %s13 = inlined_call_operand.hbm [shape: f32[2,32,512], index: 13, kind: output, shape index: {}]
  %s14 = sld [smem:[#allocation0]]
  $region93: #{tpu_custom_call.1} parent=0
    _
  %s16 = ssub.s32 1, %s14
  %s17 = scalar_select 0, %s16, %s14
  $region1: #{tpu_custom_call.1} parent=0
    #allocation4 [shape = 'u8[131072]{0}', space=vmem, size = 0x20000, scoped, tag = 'input window, operand 1']
    #allocation5 [shape = 's32[2]{0}', space=sflag, size = 0x8, scoped, tag = 'scoped memory for tpu_custom_call.1']
    #allocation6 [shape = 's32[2]{0}', space=sflag, size = 0x8, scoped, tag = 'scoped memory for tpu_custom_call.1']
    #allocation7 [shape = 'u8[131072]{0}', space=vmem, size = 0x20000, scoped, tag = 'input window, operand 2']
    #allocation8 [shape = 's32[2]{0}', space=sflag, size = 0x8, scoped, tag = 'scoped memory for tpu_custom_call.1']
    #allocation9 [shape = 'u8[131072]{0}', space=vmem, size = 0x20000, scoped, tag = 'output window, operand 0']
    %18 = vsyncpa [#allocation5], 0
    %s19 = scalar_lea.sflag [#allocation5], 1
    %20 = vsyncpa %s19, 0
    %21 = vsyncpa [#allocation8], 0
    %s22 = scalar_lea.sflag [#allocation8], 1
    %23 = vsyncpa %s22, 0
    %24 = vsyncpa [#allocation6], 0
    %s25 = scalar_lea.sflag [#allocation6], 1
    %26 = vsyncpa %s25, 0
    loop: start=0, step=1, limit=4
    $region2: #{tpu_custom_call.1} parent=1 // loop_pre_header
      _
    $region3: #{tpu_custom_call.1} parent=1 // loop_header
      %s28 = sphi 0, %s32
      %p29 = scmp.ge.s32.totalorder %s28, 4
      %s35 = sphi 0, %s47
      %s36 = sphi 0, %s43
      %s37 = sphi 0, %s35
      %s38 = sphi 0, %s36
      %s39 = sphi 0, %s37
      %s40 = sphi 0, %s38
      %s58 = sphi 0, %s60
      %s61 = sphi 0, %s58
      %s62 = sphi 0, %s61
      %s78 = sphi 0, %s62
      %s86 = sphi 0, %s88
      %s89 = sphi 0, %s86
      %s90 = sphi 0, %s89
      %s106 = sphi 0, %s90
      %s120 = sphi 0, %s122
      %s123 = sphi 0, %s120
      %s124 = sphi 0, %s123
      %s140 = sphi 0, %s124
      %s146 = sphi 0, %s148
      %s149 = sphi 0, %s146
      %s150 = sphi 0, %s149
      %s166 = sphi 0, %s150
      %s170 = sphi 0, %s170
      %s172 = sphi 0, %s170
      %s173 = sphi 0, %s172
      %s187 = sphi 0, %s173
      %s191 = sphi 0, %s191
      %s193 = sphi 0, %s191
      %s194 = sphi 0, %s193
      %s208 = sphi 0, %s194
      %s212 = sphi 0, %s212
      %s214 = sphi 0, %s212
      %s215 = sphi 0, %s214
      %s229 = sphi 0, %s215
      %s233 = sphi 0, %s233
      %s235 = sphi 0, %s233
      %s236 = sphi 0, %s235
      %s250 = sphi 0, %s236
      %s254 = sphi 0, %s254
      %s256 = sphi 0, %s254
      %s257 = sphi 0, %s256
      %s271 = sphi 0, %s257
      %s275 = sphi 0, %s275
      %s277 = sphi 0, %s275
      %s278 = sphi 0, %s277
      %s292 = sphi 0, %s278
      %s296 = sphi 0, %s296
      %s298 = sphi 0, %s296
      %s299 = sphi 0, %s298
      %s313 = sphi 0, %s299
      %s317 = sphi 0, %s317
      %s319 = sphi 0, %s317
      %s320 = sphi 0, %s319
      %s334 = sphi 0, %s320
      %s338 = sphi 0, %s338
      %s340 = sphi 0, %s338
      %s341 = sphi 0, %s340
      %s355 = sphi 0, %s341
      %s363 = sphi 0, %s365
      %s366 = sphi 0, %s363
      %s367 = sphi 0, %s366
      %s383 = sphi 0, %s367
    $region4: #{tpu_custom_call.1} parent=1 // loop_header_branch
      %31 = sbr.rel (%p29) target = $region8
    $region5: #{tpu_custom_call.1} parent=1 // loop_body
      %s33 = ssub.s32 %s28, 1
      %s34 = ssub.s32 %s28, 2
      %s41 = sadd.s32 1, %s36
      %p42 = scmp.ge.s32.totalorder %s41, 1
      %s43 = scalar_select %p42, 0, %s41
      %s44 = sadd.s32 1, %s35
      %s45 = scalar_select %p42, %s44, %s35
      %p46 = scmp.ge.s32.totalorder %s45, 2
      %s47 = scalar_select %p46, 0, %s45
      %s48 = ssub.s32 %s36, 1
      %p49 = scmp.gt.s32.totalorder %s48, 0
      %s50 = scalar_select %p49, %s48, 0
      %s51 = ssub.s32 %s43, 1
      %p52 = scmp.gt.s32.totalorder %s51, 0
      %s53 = scalar_select %p52, %s51, 0
      %s54 = ssub.s32 %s35, %s47
      %s55 = ssub.s32 %s50, %s53
      %s56 = sor.u32 %s54, %s55
      %p57 = scmp.eq.s32.totalorder %s56, 0
      %s59 = sadd.s32 %s58, 1
      %s60 = scalar_select %p57, %s58, %s59
      %p63 = pneg %p57
      %p64 = scmp.eq.s32.totalorder %s28, 1
      %p65 = por %p63, %p64
      %p66 = scmp.ne.s32.totalorder %s58, %s61
      %p67 = scmp.eq.s32.totalorder %s28, 0
      %p68 = por %p66, %p67
      %p69 = scmp.ne.s32.totalorder %s58, %s61
      %p70 = scmp.eq.s32.totalorder %s33, 1
      %p71 = por %p69, %p70
      %p72 = scmp.ne.s32.totalorder %s61, %s62
      %p73 = scmp.eq.s32.totalorder %s33, 0
      %p74 = por %p72, %p73
      %p75 = scmp.ne.s32.totalorder %s61, %s62
      %p76 = scmp.eq.s32.totalorder %s34, 1
      %p77 = por %p75, %p76
      %p79 = scmp.ne.s32.totalorder %s62, %s78
      %p80 = scmp.eq.s32.totalorder %s34, 0
      %p81 = por %p79, %p80
      %s82 = ssub.s32 %s35, %s47
      %s83 = ssub.s32 %s36, %s43
      %s84 = sor.u32 %s82, %s83
      %p85 = scmp.eq.s32.totalorder %s84, 0
      %s87 = sadd.s32 %s86, 1
      %s88 = scalar_select %p85, %s86, %s87
      %p91 = pneg %p85
      %p92 = scmp.eq.s32.totalorder %s28, 1
      %p93 = por %p91, %p92
      %p94 = scmp.ne.s32.totalorder %s86, %s89
      %p95 = scmp.eq.s32.totalorder %s28, 0
      %p96 = por %p94, %p95
      %p97 = scmp.ne.s32.totalorder %s86, %s89
      %p98 = scmp.eq.s32.totalorder %s33, 1
      %p99 = por %p97, %p98
      %p100 = scmp.ne.s32.totalorder %s89, %s90
      %p101 = scmp.eq.s32.totalorder %s33, 0
      %p102 = por %p100, %p101
      %p103 = scmp.ne.s32.totalorder %s89, %s90
      %p104 = scmp.eq.s32.totalorder %s34, 1
      %p105 = por %p103, %p104
      %p107 = scmp.ne.s32.totalorder %s90, %s106
      %p108 = scmp.eq.s32.totalorder %s34, 0
      %p109 = por %p107, %p108
      %s110 = sadd.s32 %s36, 1
      %p111 = scmp.lt.s32.totalorder %s110, 0
      %s112 = scalar_select %p111, %s110, 0
      %s113 = sadd.s32 %s43, 1
      %p114 = scmp.lt.s32.totalorder %s113, 0
      %s115 = scalar_select %p114, %s113, 0
      %s116 = ssub.s32 %s35, %s47
      %s117 = ssub.s32 %s112, %s115
      %s118 = sor.u32 %s116, %s117
      %p119 = scmp.eq.s32.totalorder %s118, 0
      %s121 = sadd.s32 %s120, 1
      %s122 = scalar_select %p119, %s120, %s121
      %p125 = pneg %p119
      %p126 = scmp.eq.s32.totalorder %s28, 1
      %p127 = por %p125, %p126
      %p128 = scmp.ne.s32.totalorder %s120, %s123
      %p129 = scmp.eq.s32.totalorder %s28, 0
      %p130 = por %p128, %p129
      %p131 = scmp.ne.s32.totalorder %s120, %s123
      %p132 = scmp.eq.s32.totalorder %s33, 1
      %p133 = por %p131, %p132
      %p134 = scmp.ne.s32.totalorder %s123, %s124
      %p135 = scmp.eq.s32.totalorder %s33, 0
      %p136 = por %p134, %p135
      %p137 = scmp.ne.s32.totalorder %s123, %s124
      %p138 = scmp.eq.s32.totalorder %s34, 1
      %p139 = por %p137, %p138
      %p141 = scmp.ne.s32.totalorder %s124, %s140
      %p142 = scmp.eq.s32.totalorder %s34, 0
      %p143 = por %p141, %p142
      %s144 = ssub.s32 %s36, %s43
      %p145 = scmp.eq.s32.totalorder %s144, 0
      %s147 = sadd.s32 %s146, 1
      %s148 = scalar_select %p145, %s146, %s147
      %p151 = pneg %p145
      %p152 = scmp.eq.s32.totalorder %s28, 1
      %p153 = por %p151, %p152
      %p154 = scmp.ne.s32.totalorder %s146, %s149
      %p155 = scmp.eq.s32.totalorder %s28, 0
      %p156 = por %p154, %p155
      %p157 = scmp.ne.s32.totalorder %s146, %s149
      %p158 = scmp.eq.s32.totalorder %s33, 1
      %p159 = por %p157, %p158
      %p160 = scmp.ne.s32.totalorder %s149, %s150
      %p161 = scmp.eq.s32.totalorder %s33, 0
      %p162 = por %p160, %p161
      %p163 = scmp.ne.s32.totalorder %s149, %s150
      %p164 = scmp.eq.s32.totalorder %s34, 1
      %p165 = por %p163, %p164
      %p167 = scmp.ne.s32.totalorder %s150, %s166
      %p168 = scmp.eq.s32.totalorder %s34, 0
      %p169 = por %p167, %p168
      %s171 = sadd.s32 %s170, 1
      %p174 = scmp.eq.s32.totalorder %s28, 1
      %p175 = scmp.ne.s32.totalorder %s170, %s172
      %p176 = scmp.eq.s32.totalorder %s28, 0
      %p177 = por %p175, %p176
      %p178 = scmp.ne.s32.totalorder %s170, %s172
      %p179 = scmp.eq.s32.totalorder %s33, 1
      %p180 = por %p178, %p179
      %p181 = scmp.ne.s32.totalorder %s172, %s173
      %p182 = scmp.eq.s32.totalorder %s33, 0
      %p183 = por %p181, %p182
      %p184 = scmp.ne.s32.totalorder %s172, %s173
      %p185 = scmp.eq.s32.totalorder %s34, 1
      %p186 = por %p184, %p185
      %p188 = scmp.ne.s32.totalorder %s173, %s187
      %p189 = scmp.eq.s32.totalorder %s34, 0
      %p190 = por %p188, %p189
      %s192 = sadd.s32 %s191, 1
      %p195 = scmp.eq.s32.totalorder %s28, 1
      %p196 = scmp.ne.s32.totalorder %s191, %s193
      %p197 = scmp.eq.s32.totalorder %s28, 0
      %p198 = por %p196, %p197
      %p199 = scmp.ne.s32.totalorder %s191, %s193
      %p200 = scmp.eq.s32.totalorder %s33, 1
      %p201 = por %p199, %p200
      %p202 = scmp.ne.s32.totalorder %s193, %s194
      %p203 = scmp.eq.s32.totalorder %s33, 0
      %p204 = por %p202, %p203
      %p205 = scmp.ne.s32.totalorder %s193, %s194
      %p206 = scmp.eq.s32.totalorder %s34, 1
      %p207 = por %p205, %p206
      %p209 = scmp.ne.s32.totalorder %s194, %s208
      %p210 = scmp.eq.s32.totalorder %s34, 0
      %p211 = por %p209, %p210
      %s213 = sadd.s32 %s212, 1
      %p216 = scmp.eq.s32.totalorder %s28, 1
      %p217 = scmp.ne.s32.totalorder %s212, %s214
      %p218 = scmp.eq.s32.totalorder %s28, 0
      %p219 = por %p217, %p218
      %p220 = scmp.ne.s32.totalorder %s212, %s214
      %p221 = scmp.eq.s32.totalorder %s33, 1
      %p222 = por %p220, %p221
      %p223 = scmp.ne.s32.totalorder %s214, %s215
      %p224 = scmp.eq.s32.totalorder %s33, 0
      %p225 = por %p223, %p224
      %p226 = scmp.ne.s32.totalorder %s214, %s215
      %p227 = scmp.eq.s32.totalorder %s34, 1
      %p228 = por %p226, %p227
      %p230 = scmp.ne.s32.totalorder %s215, %s229
      %p231 = scmp.eq.s32.totalorder %s34, 0
      %p232 = por %p230, %p231
      %s234 = sadd.s32 %s233, 1
      %p237 = scmp.eq.s32.totalorder %s28, 1
      %p238 = scmp.ne.s32.totalorder %s233, %s235
      %p239 = scmp.eq.s32.totalorder %s28, 0
      %p240 = por %p238, %p239
      %p241 = scmp.ne.s32.totalorder %s233, %s235
      %p242 = scmp.eq.s32.totalorder %s33, 1
      %p243 = por %p241, %p242
      %p244 = scmp.ne.s32.totalorder %s235, %s236
      %p245 = scmp.eq.s32.totalorder %s33, 0
      %p246 = por %p244, %p245
      %p247 = scmp.ne.s32.totalorder %s235, %s236
      %p248 = scmp.eq.s32.totalorder %s34, 1
      %p249 = por %p247, %p248
      %p251 = scmp.ne.s32.totalorder %s236, %s250
      %p252 = scmp.eq.s32.totalorder %s34, 0
      %p253 = por %p251, %p252
      %s255 = sadd.s32 %s254, 1
      %p258 = scmp.eq.s32.totalorder %s28, 1
      %p259 = scmp.ne.s32.totalorder %s254, %s256
      %p260 = scmp.eq.s32.totalorder %s28, 0
      %p261 = por %p259, %p260
      %p262 = scmp.ne.s32.totalorder %s254, %s256
      %p263 = scmp.eq.s32.totalorder %s33, 1
      %p264 = por %p262, %p263
      %p265 = scmp.ne.s32.totalorder %s256, %s257
      %p266 = scmp.eq.s32.totalorder %s33, 0
      %p267 = por %p265, %p266
      %p268 = scmp.ne.s32.totalorder %s256, %s257
      %p269 = scmp.eq.s32.totalorder %s34, 1
      %p270 = por %p268, %p269
      %p272 = scmp.ne.s32.totalorder %s257, %s271
      %p273 = scmp.eq.s32.totalorder %s34, 0
      %p274 = por %p272, %p273
      %s276 = sadd.s32 %s275, 1
      %p279 = scmp.eq.s32.totalorder %s28, 1
      %p280 = scmp.ne.s32.totalorder %s275, %s277
      %p281 = scmp.eq.s32.totalorder %s28, 0
      %p282 = por %p280, %p281
      %p283 = scmp.ne.s32.totalorder %s275, %s277
      %p284 = scmp.eq.s32.totalorder %s33, 1
      %p285 = por %p283, %p284
      %p286 = scmp.ne.s32.totalorder %s277, %s278
      %p287 = scmp.eq.s32.totalorder %s33, 0
      %p288 = por %p286, %p287
      %p289 = scmp.ne.s32.totalorder %s277, %s278
      %p290 = scmp.eq.s32.totalorder %s34, 1
      %p291 = por %p289, %p290
      %p293 = scmp.ne.s32.totalorder %s278, %s292
      %p294 = scmp.eq.s32.totalorder %s34, 0
      %p295 = por %p293, %p294
      %s297 = sadd.s32 %s296, 1
      %p300 = scmp.eq.s32.totalorder %s28, 1
      %p301 = scmp.ne.s32.totalorder %s296, %s298
      %p302 = scmp.eq.s32.totalorder %s28, 0
      %p303 = por %p301, %p302
      %p304 = scmp.ne.s32.totalorder %s296, %s298
      %p305 = scmp.eq.s32.totalorder %s33, 1
      %p306 = por %p304, %p305
      %p307 = scmp.ne.s32.totalorder %s298, %s299
      %p308 = scmp.eq.s32.totalorder %s33, 0
      %p309 = por %p307, %p308
      %p310 = scmp.ne.s32.totalorder %s298, %s299
      %p311 = scmp.eq.s32.totalorder %s34, 1
      %p312 = por %p310, %p311
      %p314 = scmp.ne.s32.totalorder %s299, %s313
      %p315 = scmp.eq.s32.totalorder %s34, 0
      %p316 = por %p314, %p315
      %s318 = sadd.s32 %s317, 1
      %p321 = scmp.eq.s32.totalorder %s28, 1
      %p322 = scmp.ne.s32.totalorder %s317, %s319
      %p323 = scmp.eq.s32.totalorder %s28, 0
      %p324 = por %p322, %p323
      %p325 = scmp.ne.s32.totalorder %s317, %s319
      %p326 = scmp.eq.s32.totalorder %s33, 1
      %p327 = por %p325, %p326
      %p328 = scmp.ne.s32.totalorder %s319, %s320
      %p329 = scmp.eq.s32.totalorder %s33, 0
      %p330 = por %p328, %p329
      %p331 = scmp.ne.s32.totalorder %s319, %s320
      %p332 = scmp.eq.s32.totalorder %s34, 1
      %p333 = por %p331, %p332
      %p335 = scmp.ne.s32.totalorder %s320, %s334
      %p336 = scmp.eq.s32.totalorder %s34, 0
      %p337 = por %p335, %p336
      %s339 = sadd.s32 %s338, 1
      %p342 = scmp.eq.s32.totalorder %s28, 1
      %p343 = scmp.ne.s32.totalorder %s338, %s340
      %p344 = scmp.eq.s32.totalorder %s28, 0
      %p345 = por %p343, %p344
      %p346 = scmp.ne.s32.totalorder %s338, %s340
      %p347 = scmp.eq.s32.totalorder %s33, 1
      %p348 = por %p346, %p347
      %p349 = scmp.ne.s32.totalorder %s340, %s341
      %p350 = scmp.eq.s32.totalorder %s33, 0
      %p351 = por %p349, %p350
      %p352 = scmp.ne.s32.totalorder %s340, %s341
      %p353 = scmp.eq.s32.totalorder %s34, 1
      %p354 = por %p352, %p353
      %p356 = scmp.ne.s32.totalorder %s341, %s355
      %p357 = scmp.eq.s32.totalorder %s34, 0
      %p358 = por %p356, %p357
      %s359 = ssub.s32 %s35, %s47
      %s360 = ssub.s32 %s36, %s43
      %s361 = sor.u32 %s359, %s360
      %p362 = scmp.eq.s32.totalorder %s361, 0
      %s364 = sadd.s32 %s363, 1
      %s365 = scalar_select %p362, %s363, %s364
      %p368 = pneg %p362
      %p369 = scmp.eq.s32.totalorder %s28, 1
      %p370 = por %p368, %p369
      %p371 = scmp.ne.s32.totalorder %s363, %s366
      %p372 = scmp.eq.s32.totalorder %s28, 0
      %p373 = por %p371, %p372
      %p374 = scmp.ne.s32.totalorder %s363, %s366
      %p375 = scmp.eq.s32.totalorder %s33, 1
      %p376 = por %p374, %p375
      %p377 = scmp.ne.s32.totalorder %s366, %s367
      %p378 = scmp.eq.s32.totalorder %s33, 0
      %p379 = por %p377, %p378
      %p380 = scmp.ne.s32.totalorder %s366, %s367
      %p381 = scmp.eq.s32.totalorder %s34, 1
      %p382 = por %p380, %p381
      %p384 = scmp.ne.s32.totalorder %s367, %s383
      %p385 = scmp.eq.s32.totalorder %s34, 0
      %p386 = por %p384, %p385
      %p387 = scmp.le.s32.totalorder 1, %s28
      %p388 = scmp.lt.s32.totalorder %s28, 3
      %p389 = pnand %p387, %p388
      %p390 = pneg %p389
      // Predicated region
      $region9: #{tpu_custom_call.1} parent=5 // pred_check
        _
      $region10: #{tpu_custom_call.1} parent=5 // pred_check_branch
        %392 = sbr.rel (%p389) target = $region12
      $region11: #{tpu_custom_call.1} parent=5 // pred_region
        %s393 = ssub.s32 %s28, 1
        // Predicated region
        $region13: #{tpu_custom_call.1} parent=11 // pred_check
          %p394 = pneg %p162
        $region14: #{tpu_custom_call.1} parent=11 // pred_check_branch
          %396 = sbr.rel (%p394) target = $region16
        $region15: #{tpu_custom_call.1} parent=11 // pred_region
          %s397 = smul.u32 4, %s38
          %p398 = scmp.lt.s32.totalorder %s397, 3
          %s399 = scalar_select %p398, %s397, 3
          %s400 = scalar_lea.vmem %s3, %s399
          %s401 = smul.u32 4, %s38
        $region16: #{tpu_custom_call.1} parent=11 // pred_fallthru
          _
        // Predicated region
        $region17: #{tpu_custom_call.1} parent=11 // pred_check
          %p402 = pneg %p183
        $region18: #{tpu_custom_call.1} parent=11 // pred_check_branch
          %404 = sbr.rel (%p402) target = $region20
        $region19: #{tpu_custom_call.1} parent=11 // pred_region
          _
        $region20: #{tpu_custom_call.1} parent=11 // pred_fallthru
          _
        // Predicated region
        $region21: #{tpu_custom_call.1} parent=11 // pred_check
          %p405 = pneg %p204
        $region22: #{tpu_custom_call.1} parent=11 // pred_check_branch
          %407 = sbr.rel (%p405) target = $region24
        $region23: #{tpu_custom_call.1} parent=11 // pred_region
          _
        $region24: #{tpu_custom_call.1} parent=11 // pred_fallthru
          _
        // Predicated region
        $region25: #{tpu_custom_call.1} parent=11 // pred_check
          %p408 = pneg %p225
        $region26: #{tpu_custom_call.1} parent=11 // pred_check_branch
          %410 = sbr.rel (%p408) target = $region28
        $region27: #{tpu_custom_call.1} parent=11 // pred_region
          _
        $region28: #{tpu_custom_call.1} parent=11 // pred_fallthru
          _
        // Predicated region
        $region29: #{tpu_custom_call.1} parent=11 // pred_check
          %p411 = pneg %p246
        $region30: #{tpu_custom_call.1} parent=11 // pred_check_branch
          %413 = sbr.rel (%p411) target = $region32
        $region31: #{tpu_custom_call.1} parent=11 // pred_region
          _
        $region32: #{tpu_custom_call.1} parent=11 // pred_fallthru
          _
        // Predicated region
        $region33: #{tpu_custom_call.1} parent=11 // pred_check
          %p414 = pneg %p267
        $region34: #{tpu_custom_call.1} parent=11 // pred_check_branch
          %416 = sbr.rel (%p414) target = $region36
        $region35: #{tpu_custom_call.1} parent=11 // pred_region
          _
        $region36: #{tpu_custom_call.1} parent=11 // pred_fallthru
          _
        // Predicated region
        $region37: #{tpu_custom_call.1} parent=11 // pred_check
          %p417 = pneg %p288
        $region38: #{tpu_custom_call.1} parent=11 // pred_check_branch
          %419 = sbr.rel (%p417) target = $region40
        $region39: #{tpu_custom_call.1} parent=11 // pred_region
          _
        $region40: #{tpu_custom_call.1} parent=11 // pred_fallthru
          _
        // Predicated region
        $region41: #{tpu_custom_call.1} parent=11 // pred_check
          %p420 = pneg %p309
        $region42: #{tpu_custom_call.1} parent=11 // pred_check_branch
          %422 = sbr.rel (%p420) target = $region44
        $region43: #{tpu_custom_call.1} parent=11 // pred_region
          _
        $region44: #{tpu_custom_call.1} parent=11 // pred_fallthru
          _
        // Predicated region
        $region45: #{tpu_custom_call.1} parent=11 // pred_check
          %p423 = pneg %p330
        $region46: #{tpu_custom_call.1} parent=11 // pred_check_branch
          %425 = sbr.rel (%p423) target = $region48
        $region47: #{tpu_custom_call.1} parent=11 // pred_region
          _
        $region48: #{tpu_custom_call.1} parent=11 // pred_fallthru
          _
        // Predicated region
        $region49: #{tpu_custom_call.1} parent=11 // pred_check
          %p426 = pneg %p351
        $region50: #{tpu_custom_call.1} parent=11 // pred_check_branch
          %428 = sbr.rel (%p426) target = $region52
        $region51: #{tpu_custom_call.1} parent=11 // pred_region
          _
        $region52: #{tpu_custom_call.1} parent=11 // pred_fallthru
          _
      $region12: #{tpu_custom_call.1} parent=5 // pred_fallthru
        _
      %p429 = scmp.lt.s32.totalorder %s28, 2
      // Predicated region
      $region53: #{tpu_custom_call.1} parent=5 // pred_check
        %p430 = pneg %p429
      $region54: #{tpu_custom_call.1} parent=5 // pred_check_branch
        %432 = sbr.rel (%p430) target = $region56
      $region55: #{tpu_custom_call.1} parent=5 // pred_region
        // Predicated region
        $region57: #{tpu_custom_call.1} parent=55 // pred_check
          %p433 = pneg %p68
        $region58: #{tpu_custom_call.1} parent=55 // pred_check_branch
          %435 = sbr.rel (%p433) target = $region60
        $region59: #{tpu_custom_call.1} parent=55 // pred_region
          %s436 = ssub.s32 %s36, 1
          %p437 = scmp.gt.s32.totalorder %s436, 0
          %s438 = scalar_select %p437, %s436, 0
          %s439 = smul.u32 4, %s438
          %p440 = scmp.lt.s32.totalorder %s35, 1
          %s441 = scalar_select %p440, %s35, 1
          %p442 = scmp.lt.s32.totalorder %s439, 3
          %s443 = scalar_select %p442, %s439, 3
          %s444 = smul.addr %s441, 16
          %s445 = sadd.s32 %s443, %s444
          %s446 = smul.addr %s445, 8
          %s447 = scalar_lea.vmem %s0, %s446
          %s448 = ssub.s32 %s36, 1
          %p449 = scmp.gt.s32.totalorder %s448, 0
          %s450 = scalar_select %p449, %s448, 0
          %s451 = smul.u32 4, %s450
        $region60: #{tpu_custom_call.1} parent=55 // pred_fallthru
          _
        // Predicated region
        $region61: #{tpu_custom_call.1} parent=55 // pred_check
          %p452 = pneg %p96
        $region62: #{tpu_custom_call.1} parent=55 // pred_check_branch
          %454 = sbr.rel (%p452) target = $region64
        $region63: #{tpu_custom_call.1} parent=55 // pred_region
          %s455 = sand.u32 %s86, 1
          %s456 = scalar_lea.sflag [#allocation5], %s455
          %s457 = sand.u32 %s86, 1
          %s458 = smul.addr %s457, 128
          %s459 = scalar_lea.vmem [#allocation4], %s458
          %s460 = smul.u32 4, %s36
          %s462 = ssub.s32 2048, 2048
          %463 = vsyncadd %s456, %s462
          %s464 = smul.addr %s35, 16
          %s465 = sadd.s32 %s460, %s464
          %s466 = smul.addr %s465, 128
          %s467 = scalar_lea.hbm %s1, %s466
          %s468 = sshll.u32 %s459, 4
          %s469 = int_to_ptr.vmem [resolvable:$true] %s468
          %474 = dma.hbm_to_vmem [thread:$0]  %s467, 2048, %s469, %s456, 512, 512, 32
        $region64: #{tpu_custom_call.1} parent=55 // pred_fallthru
          _
        // Predicated region
        $region65: #{tpu_custom_call.1} parent=55 // pred_check
          %p475 = pneg %p130
        $region66: #{tpu_custom_call.1} parent=55 // pred_check_branch
          %477 = sbr.rel (%p475) target = $region68
        $region67: #{tpu_custom_call.1} parent=55 // pred_region
          %s478 = sand.u32 %s120, 1
          %s479 = scalar_lea.sflag [#allocation8], %s478
          %s480 = sand.u32 %s120, 1
          %s481 = smul.addr %s480, 128
          %s482 = scalar_lea.vmem [#allocation7], %s481
          %s483 = sadd.s32 %s36, 1
          %p484 = scmp.lt.s32.totalorder %s483, 0
          %s485 = scalar_select %p484, %s483, 0
          %s486 = smul.u32 4, %s485
          %s488 = ssub.s32 2048, 2048
          %489 = vsyncadd %s479, %s488
          %s490 = smul.addr %s35, 16
          %s491 = sadd.s32 %s486, %s490
          %s492 = smul.addr %s491, 128
          %s493 = scalar_lea.hbm %s2, %s492
          %s494 = sshll.u32 %s482, 4
          %s495 = int_to_ptr.vmem [resolvable:$true] %s494
          %500 = dma.hbm_to_vmem [thread:$0]  %s493, 2048, %s495, %s479, 512, 512, 32
        $region68: #{tpu_custom_call.1} parent=55 // pred_fallthru
          _
      $region56: #{tpu_custom_call.1} parent=5 // pred_fallthru
        _
      %p501 = scmp.le.s32.totalorder 1, %s28
      %p502 = scmp.lt.s32.totalorder %s28, 3
      %p503 = pnand %p501, %p502
      %p504 = pneg %p503
      // Predicated region
      $region69: #{tpu_custom_call.1} parent=5 // pred_check
        _
      $region70: #{tpu_custom_call.1} parent=5 // pred_check_branch
        %506 = sbr.rel (%p503) target = $region72
      $region71: #{tpu_custom_call.1} parent=5 // pred_region
        %s507 = ssub.s32 %s28, 1
        %s508 = sand.u32 %s89, 1
        %s509 = scalar_lea.sflag [#allocation5], %s508
        %s510 = sand.u32 %s89, 1
        %s511 = smul.addr %s510, 128
        %s512 = scalar_lea.vmem [#allocation4], %s511
        // Predicated region
        $region73: #{tpu_custom_call.1} parent=71 // pred_check
          %p513 = pneg %p102
        $region74: #{tpu_custom_call.1} parent=71 // pred_check_branch
          %515 = sbr.rel (%p513) target = $region76
        $region75: #{tpu_custom_call.1} parent=71 // pred_region
          %516 = dma.done %s509, 2048
        $region76: #{tpu_custom_call.1} parent=71 // pred_fallthru
          _
        %s517 = sand.u32 %s123, 1
        %s518 = scalar_lea.sflag [#allocation8], %s517
        %s519 = sand.u32 %s123, 1
        %s520 = smul.addr %s519, 128
        %s521 = scalar_lea.vmem [#allocation7], %s520
        // Predicated region
        $region77: #{tpu_custom_call.1} parent=71 // pred_check
          %p522 = pneg %p136
        $region78: #{tpu_custom_call.1} parent=71 // pred_check_branch
          %524 = sbr.rel (%p522) target = $region80
        $region79: #{tpu_custom_call.1} parent=71 // pred_region
          %525 = dma.done %s518, 2048
        $region80: #{tpu_custom_call.1} parent=71 // pred_fallthru
          _
        %s526 = ssub.s32 %s38, 1
        %p527 = scmp.gt.s32.totalorder %s526, 0
        %s528 = scalar_select %p527, %s526, 0
        %s529 = smul.u32 4, %s528
        %p530 = scmp.lt.s32.totalorder %s37, 1
        %s531 = scalar_select %p530, %s37, 1
        %p532 = scmp.lt.s32.totalorder %s529, 3
        %s533 = scalar_select %p532, %s529, 3
        %s534 = smul.addr %s531, 16
        %s535 = sadd.s32 %s533, %s534
        %s536 = smul.addr %s535, 8
        %s537 = scalar_lea.vmem %s0, %s536
        %p538 = pneg %p74
        %p539 = pneg %p71
        %s540 = sand.u32 %s89, 1
        %s541 = scalar_lea.sflag [#allocation5], %s540
        %s542 = sand.u32 %s89, 1
        %s543 = smul.addr %s542, 128
        %s544 = scalar_lea.vmem [#allocation4], %s543
        %p545 = pneg %p102
        %p546 = pneg %p99
        %s547 = sand.u32 %s123, 1
        %s548 = scalar_lea.sflag [#allocation8], %s547
        %s549 = sand.u32 %s123, 1
        %s550 = smul.addr %s549, 128
        %s551 = scalar_lea.vmem [#allocation7], %s550
        %p552 = pneg %p136
        %p553 = pneg %p133
        %s554 = smul.u32 4, %s38
        %p555 = scmp.lt.s32.totalorder %s554, 3
        %s556 = scalar_select %p555, %s554, 3
        %s557 = scalar_lea.vmem %s3, %s556
        %p558 = pneg %p162
        %p559 = pneg %p159
        %p560 = pneg %p183
        %p561 = pneg %p180
        %p562 = pneg %p204
        %p563 = pneg %p201
        %p564 = pneg %p225
        %p565 = pneg %p222
        %p566 = pneg %p246
        %p567 = pneg %p243
        %p568 = pneg %p267
        %p569 = pneg %p264
        %p570 = pneg %p288
        %p571 = pneg %p285
        %p572 = pneg %p309
        %p573 = pneg %p306
        %p574 = pneg %p330
        %p575 = pneg %p327
        %p576 = pneg %p351
        %p577 = pneg %p348
        %p578 = pneg %p379
        %p579 = pneg %p376
        %s580 = sand.u32 %s366, 1
        %s581 = scalar_lea.sflag [#allocation6], %s580
        %s582 = sand.u32 %s366, 1
        %s583 = smul.addr %s582, 128
        %s584 = scalar_lea.vmem [#allocation9], %s583
        %s585 = ssub.s32 %s38, 1
        %p586 = scmp.gt.s32.totalorder %s585, 0
        %s587 = scalar_select %p586, %s585, 0
        %s588 = smul.u32 4, %s587
        %p589 = scmp.lt.s32.totalorder %s37, 1
        %s590 = scalar_select %p589, %s37, 1
        %p591 = scmp.lt.s32.totalorder %s588, 3
        %s592 = scalar_select %p591, %s588, 3
        %s593 = smul.addr %s590, 16
        %s594 = sadd.s32 %s592, %s593
        %s595 = smul.addr %s594, 8
        %s596 = scalar_lea.vmem %s0, %s595
        %s597 = ssub.s32 %s38, 1
        %p598 = scmp.gt.s32.totalorder %s597, 0
        %s599 = scalar_select %p598, %s597, 0
        %s600 = smul.u32 4, %s599
        %s601 = smul.u32 4, %s38
        %s602 = sadd.s32 %s38, 1
        %p603 = scmp.lt.s32.totalorder %s602, 0
        %s604 = scalar_select %p603, %s602, 0
        %s605 = smul.u32 4, %s604
        %s606 = smul.u32 4, %s38
        %p607 = scmp.lt.s32.totalorder %s606, 3
        %s608 = scalar_select %p607, %s606, 3
        %s609 = scalar_lea.vmem %s3, %s608
        %s610 = smul.u32 4, %s38
        %s611 = smul.u32 4, %s38
        %v613 = vld [vmem:[%s4] sm:$0xf]
        %v614 = vld [vmem:[%s5] sm:$0xff]
        %v615 = vld [vmem:[%s6] sm:$0xff]
        %vm616 = vcmask 519168
        %617 = vst.msk [vmem:[#allocation2] sm:$0xf] %vm616, 0
        %vm618 = vcmask 1043968
        %619 = vst.msk [vmem:[#allocation2 + $0x14] sm:$0xf] %vm618, 0
        %v620 = vld [vmem:[%s596 + $0x18] sm:$0xff]
        %v621 = vld [vmem:[%s596 + $0x38] sm:$0xff]
        %v622 = vld [vmem:[%s596 + $0x58] sm:$0xff]
        %v623 = vld [vmem:[%s596 + $0x78] sm:$0xff]
        %v624 = vpack.c.bf16 %v621, %v620
        %v625 = vpack.c.bf16 %v623, %v622
        %628 = vrot.lane.b32.xlu0 %v624, 64
        %v629 = vpop.permute.xlu0 %628
        %630 = vrot.lane.b32.xlu0 %v625, 64
        %v631 = vpop.permute.xlu0 %630
        %vm634 = vcmask 261120
        %v636 = vsel %vm634, %v613, 0
        %638 = vmatprep.subr.bf16.mxu0 0
        %639 = vmatpush1.bf16.msra.mxu0 %v629
        %640 = vmatprep.subr.bf16.mxu0 0
        %641 = vmatpush1.bf16.msra.mxu0 %v631
        %642 = vmatprep.subr.bf16.mxu0 0
        %643 = vmatpush1.bf16.msra.mxu0 0
        %644 = vmatprep.subr.bf16.mxu0 0
        %645 = vmatpush1.bf16.msra.mxu0 0
        %646 = vmatprep.subr.bf16.mxu0 0
        %647 = vmatpush1.bf16.msra.mxu0 0
        %648 = vmatprep.subr.bf16.mxu0 0
        %649 = vmatpush1.bf16.msra.mxu0 0
        %650 = vmatprep.subr.bf16.mxu0 0
        %651 = vmatpush1.bf16.msra.mxu0 0
        %652 = vmatprep.subr.bf16.mxu0 0
        %653 = vmatpush1.bf16.msra.mxu0 0
        %654 = vmatprep.subr.bf16.mxu0 0
        %655 = vmatpush1.bf16.msra.mxu0 0
        %656 = vmatprep.subr.bf16.mxu0 0
        %657 = vmatpush1.bf16.msra.mxu0 0
        %658 = vmatprep.subr.bf16.mxu0 0
        %659 = vmatpush1.bf16.msra.mxu0 0
        %660 = vmatprep.subr.bf16.mxu0 0
        %661 = vmatpush1.bf16.msra.mxu0 0
        %662 = vmatprep.subr.bf16.mxu0 0
        %663 = vmatpush1.bf16.msra.mxu0 0
        %664 = vmatprep.subr.bf16.mxu0 0
        %665 = vmatpush1.bf16.msra.mxu0 0
        %666 = vmatprep.subr.bf16.mxu0 0
        %667 = vmatpush1.bf16.msra.mxu0 0
        %668 = vmatprep.subr.bf16.mxu0 0
        %669 = vmatpush1.bf16.msra.mxu0 0
        %670 = vmatprep.mubr.bf16.mxu0 0
        %671 = vmatmul.mubr.bf16.gmra.mrb[0].mxu0 %v636
        %v672 = vpop.f32.mrb[0].mxu0
        %v673 = vadd.f32 0.0, %v672
        %v674 = vpop.f32.mrb[0].mxu0
        %v675 = vpop.f32.mrb[0].mxu0
        %v676 = vpop.f32.mrb[0].mxu0
        %677 = vdwg.mxu0
        %679 = vset.pattern.permute.xlu0 0
        %680 = vperm.xlu0 %679, %v614
        %v681 = vpop.permute.xlu0 %680
        %v683 = vmul.f32 %v673, %v681
        %685 = vset.pattern.permute.xlu0 0
        %686 = vperm.xlu0 %685, %v615
        %v687 = vpop.permute.xlu0 %686
        %v689 = vadd.f32 %v683, %v687
        %v690 = vmax.f32 %v689, 0.0
        %v691 = vpack.c.bf16 %v690, %v690
        %v693 = vunpack.c.l.b16 %v691
        %v694 = vpack.c.b16 %v693, %v693
        %695 = vrot.lane.b32.xlu0 %v694, 64
        %v696 = vpop.permute.xlu0 %695
        %698 = vst.msk [vmem:[#allocation2] sm:$0xf] %vm618, %v696
        %v699 = vld [vmem:[%s521] sm:$0xff]
        %v700 = vld [vmem:[%s521 + $0x20] sm:$0xff]
        %v701 = vld [vmem:[%s521 + $0x40] sm:$0xff]
        %v702 = vld [vmem:[%s521 + $0x60] sm:$0xff]
        %v703 = vpack.c.bf16 %v700, %v699
        %v704 = vpack.c.bf16 %v702, %v701
        %705 = vmatprep.subr.bf16.mxu0 0
        %706 = vmatpush1.bf16.msra.mxu0 %v703
        %707 = vmatprep.subr.bf16.mxu0 0
        %708 = vmatpush1.bf16.msra.mxu0 %v704
        %709 = vmatprep.subr.bf16.mxu0 0
        %710 = vmatpush1.bf16.msra.mxu0 0
        %711 = vmatprep.subr.bf16.mxu0 0
        %712 = vmatpush1.bf16.msra.mxu0 0
        %713 = vmatprep.subr.bf16.mxu0 0
        %714 = vmatpush1.bf16.msra.mxu0 0
        %715 = vmatprep.subr.bf16.mxu0 0
        %716 = vmatpush1.bf16.msra.mxu0 0
        %717 = vmatprep.subr.bf16.mxu0 0
        %718 = vmatpush1.bf16.msra.mxu0 0
        %719 = vmatprep.subr.bf16.mxu0 0
        %720 = vmatpush1.bf16.msra.mxu0 0
        %721 = vmatprep.subr.bf16.mxu0 0
        %722 = vmatpush1.bf16.msra.mxu0 0
        %723 = vmatprep.subr.bf16.mxu0 0
        %724 = vmatpush1.bf16.msra.mxu0 0
        %725 = vmatprep.subr.bf16.mxu0 0
        %726 = vmatpush1.bf16.msra.mxu0 0
        %727 = vmatprep.subr.bf16.mxu0 0
        %728 = vmatpush1.bf16.msra.mxu0 0
        %729 = vmatprep.subr.bf16.mxu0 0
        %730 = vmatpush1.bf16.msra.mxu0 0
        %731 = vmatprep.subr.bf16.mxu0 0
        %732 = vmatpush1.bf16.msra.mxu0 0
        %733 = vmatprep.subr.bf16.mxu0 0
        %734 = vmatpush1.bf16.msra.mxu0 0
        %735 = vmatprep.subr.bf16.mxu0 0
        %736 = vmatpush1.bf16.msra.mxu0 0
        %737 = vmatprep.mubr.bf16.mxu0 0
        %738 = vmatmul.mubr.bf16.gmra.mrb[0].mxu0 %v636
        %v739 = vpop.f32.mrb[0].mxu0
        %v740 = vadd.f32 0.0, %v739
        %v741 = vpop.f32.mrb[0].mxu0
        %v742 = vpop.f32.mrb[0].mxu0
        %v743 = vpop.f32.mrb[0].mxu0
        %744 = vdwg.mxu0
        %v745 = vmul.f32 %v740, %v681
        %v746 = vadd.f32 %v745, %v687
        %v747 = vmax.f32 %v746, 0.0
        %v748 = vpack.c.bf16 %v747, %v747
        %749 = vst.msk [vmem:[#allocation2 + $0x14] sm:$0xf] %vm616, %v748
        %v750 = vld [vmem:[%s512] sm:$0xff]
        %v751 = vld [vmem:[%s512 + $0x8] sm:$0xff]
        %v752 = vld [vmem:[%s512 + $0x10] sm:$0xff]
        %v753 = vld [vmem:[%s512 + $0x18] sm:$0xff]
        %v754 = vld [vmem:[%s512 + $0x20] sm:$0xff]
        %v755 = vld [vmem:[%s512 + $0x28] sm:$0xff]
        %v756 = vld [vmem:[%s512 + $0x30] sm:$0xff]
        %v757 = vld [vmem:[%s512 + $0x38] sm:$0xff]
        %v758 = vld [vmem:[%s512 + $0x40] sm:$0xff]
        %v759 = vld [vmem:[%s512 + $0x48] sm:$0xff]
        %v760 = vld [vmem:[%s512 + $0x50] sm:$0xff]
        %v761 = vld [vmem:[%s512 + $0x58] sm:$0xff]
        %v762 = vld [vmem:[%s512 + $0x60] sm:$0xff]
        %v763 = vld [vmem:[%s512 + $0x68] sm:$0xff]
        %v764 = vld [vmem:[%s512 + $0x70] sm:$0xff]
        %v765 = vld [vmem:[%s512 + $0x78] sm:$0xff]
        %v766 = vpack.c.bf16 %v754, %v750
        %v767 = vpack.c.bf16 %v755, %v751
        %v768 = vpack.c.bf16 %v756, %v752
        %v769 = vpack.c.bf16 %v757, %v753
        %v770 = vpack.c.bf16 %v762, %v758
        %v771 = vpack.c.bf16 %v763, %v759
        %v772 = vpack.c.bf16 %v764, %v760
        %v773 = vpack.c.bf16 %v765, %v761
        %774 = vmatprep.subr.bf16.mxu0 %v767
        %775 = vmatpush1.bf16.msra.mxu0 %v766
        %776 = vmatprep.subr.bf16.mxu0 %v771
        %777 = vmatpush1.bf16.msra.mxu0 %v770
        %778 = vmatprep.subr.bf16.mxu0 0
        %779 = vmatpush1.bf16.msra.mxu0 0
        %780 = vmatprep.subr.bf16.mxu0 0
        %781 = vmatpush1.bf16.msra.mxu0 0
        %782 = vmatprep.subr.bf16.mxu0 0
        %783 = vmatpush1.bf16.msra.mxu0 0
        %784 = vmatprep.subr.bf16.mxu0 0
        %785 = vmatpush1.bf16.msra.mxu0 0
        %786 = vmatprep.subr.bf16.mxu0 0
        %787 = vmatpush1.bf16.msra.mxu0 0
        %788 = vmatprep.subr.bf16.mxu0 0
        %789 = vmatpush1.bf16.msra.mxu0 0
        %790 = vmatprep.subr.bf16.mxu0 0
        %791 = vmatpush1.bf16.msra.mxu0 0
        %792 = vmatprep.subr.bf16.mxu0 0
        %793 = vmatpush1.bf16.msra.mxu0 0
        %794 = vmatprep.subr.bf16.mxu0 0
        %795 = vmatpush1.bf16.msra.mxu0 0
        %796 = vmatprep.subr.bf16.mxu0 0
        %797 = vmatpush1.bf16.msra.mxu0 0
        %798 = vmatprep.subr.bf16.mxu0 0
        %799 = vmatpush1.bf16.msra.mxu0 0
        %800 = vmatprep.subr.bf16.mxu0 0
        %801 = vmatpush1.bf16.msra.mxu0 0
        %802 = vmatprep.subr.bf16.mxu0 0
        %803 = vmatpush1.bf16.msra.mxu0 0
        %804 = vmatprep.subr.bf16.mxu0 0
        %805 = vmatpush1.bf16.msra.mxu0 0
        %806 = vmatprep.mubr.bf16.mxu0 0
        %807 = vmatmul.mubr.bf16.gmra.mrb[0].mxu0 %v636
        %v808 = vpop.f32.mrb[0].mxu0
        %v809 = vadd.f32 0.0, %v808
        %v810 = vpop.f32.mrb[0].mxu0
        %v811 = vadd.f32 0.0, %v810
        %v812 = vpop.f32.mrb[0].mxu0
        %v813 = vpop.f32.mrb[0].mxu0
        %814 = vdwg.mxu0
        %815 = vmatprep.subr.bf16.mxu0 %v769
        %816 = vmatpush1.bf16.msra.mxu0 %v768
        %817 = vmatprep.subr.bf16.mxu0 %v773
        %818 = vmatpush1.bf16.msra.mxu0 %v772
        %819 = vmatprep.subr.bf16.mxu0 0
        %820 = vmatpush1.bf16.msra.mxu0 0
        %821 = vmatprep.subr.bf16.mxu0 0
        %822 = vmatpush1.bf16.msra.mxu0 0
        %823 = vmatprep.subr.bf16.mxu0 0
        %824 = vmatpush1.bf16.msra.mxu0 0
        %825 = vmatprep.subr.bf16.mxu0 0
        %826 = vmatpush1.bf16.msra.mxu0 0
        %827 = vmatprep.subr.bf16.mxu0 0
        %828 = vmatpush1.bf16.msra.mxu0 0
        %829 = vmatprep.subr.bf16.mxu0 0
        %830 = vmatpush1.bf16.msra.mxu0 0
        %831 = vmatprep.subr.bf16.mxu0 0
        %832 = vmatpush1.bf16.msra.mxu0 0
        %833 = vmatprep.subr.bf16.mxu0 0
        %834 = vmatpush1.bf16.msra.mxu0 0
        %835 = vmatprep.subr.bf16.mxu0 0
        %836 = vmatpush1.bf16.msra.mxu0 0
        %837 = vmatprep.subr.bf16.mxu0 0
        %838 = vmatpush1.bf16.msra.mxu0 0
        %839 = vmatprep.subr.bf16.mxu0 0
        %840 = vmatpush1.bf16.msra.mxu0 0
        %841 = vmatprep.subr.bf16.mxu0 0
        %842 = vmatpush1.bf16.msra.mxu0 0
        %843 = vmatprep.subr.bf16.mxu0 0
        %844 = vmatpush1.bf16.msra.mxu0 0
        %845 = vmatprep.subr.bf16.mxu0 0
        %846 = vmatpush1.bf16.msra.mxu0 0
        %847 = vmatprep.mubr.bf16.mxu0 0
        %848 = vmatmul.mubr.bf16.gmra.mrb[0].mxu0 %v636
        %v849 = vpop.f32.mrb[0].mxu0
        %v850 = vadd.f32 0.0, %v849
        %v851 = vpop.f32.mrb[0].mxu0
        %v852 = vadd.f32 0.0, %v851
        %v853 = vpop.f32.mrb[0].mxu0
        %v854 = vpop.f32.mrb[0].mxu0
        %855 = vdwg.mxu0
        %v856 = vmul.f32 %v809, %v681
        %v857 = vmul.f32 %v811, %v681
        %v858 = vmul.f32 %v850, %v681
        %v859 = vmul.f32 %v852, %v681
        %v860 = vadd.f32 %v856, %v687
        %v861 = vadd.f32 %v857, %v687
        %v862 = vadd.f32 %v858, %v687
        %v863 = vadd.f32 %v859, %v687
        %v864 = vmax.f32 %v860, 0.0
        %v865 = vmax.f32 %v861, 0.0
        %v866 = vmax.f32 %v862, 0.0
        %v867 = vmax.f32 %v863, 0.0
        %v868 = vpack.c.bf16 %v864, %v864
        %v869 = vpack.c.bf16 %v865, %v865
        %v870 = vpack.c.bf16 %v866, %v866
        %v871 = vpack.c.bf16 %v867, %v867
        %v876 = vunpack.c.l.b16 %v868
        %v877 = vunpack.c.l.b16 %v869
        %v878 = vunpack.c.l.b16 %v870
        %v879 = vunpack.c.l.b16 %v871
        %v880 = vpack.c.b16 %v877, %v876
        %v881 = vpack.c.b16 %v879, %v878
        %884 = vst [vmem:[#allocation2 + $0x4] sm:$0xff] %v880
        %885 = vst [vmem:[#allocation2 + $0xc] sm:$0xff] %v881
        %v886 = vld [vmem:[#allocation2] sm:$0xff]
        %v887 = vld [vmem:[#allocation2 + $0x8] sm:$0xff]
        %v888 = vld [vmem:[#allocation2 + $0x10] sm:$0xf]
        %v889 = vld [vmem:[%s609] sm:$0xf]
        %v892 = vunpack.c.l.s4 1966171168
        %v893 = vunpack.c.0.s8 %v892
        %v894 = vlaneseq
        %v895 = vshrl.u32 %v894, 7
        %v896 = vsub.s32 %v893, %v895
        %v897 = vrot.slane %v889, %v896
        %v898 = vcombine.high %v897, %v897
        %v900 = vunpack.c.l.s4 1966171168
        %v901 = vunpack.c.0.s8 %v900
        %v902 = vlaneseq
        %v903 = vshrl.u32 %v902, 7
        %v904 = vsub.s32 %v901, %v903
        %v905 = vrot.slane %v897, %v904
        %v907 = vunpack.c.l.s4 1966171168
        %v908 = vunpack.c.0.s8 %v907
        %v909 = vlaneseq
        %v910 = vshrl.u32 %v909, 7
        %v911 = vsub.s32 %v908, %v910
        %v912 = vrot.slane %v898, %v911
        %v913 = vcombine.high %v905, %v905
        %v914 = vcombine.high %v912, %v912
        %v916 = vpack.i.b16 %v905, %v905
        %v918 = vlaneseq
        %v919 = vshrl.u32 %v918, 7
        %v920 = vsub.s32 0, %v919
        %v921 = vrot.slane %v916, %v920
        %v923 = vpack.i.b16 %v912, %v912
        %v925 = vlaneseq
        %v926 = vshrl.u32 %v925, 7
        %v927 = vsub.s32 0, %v926
        %v928 = vrot.slane %v923, %v927
        %v930 = vpack.i.b16 %v913, %v913
        %v932 = vlaneseq
        %v933 = vshrl.u32 %v932, 7
        %v934 = vsub.s32 0, %v933
        %v935 = vrot.slane %v930, %v934
        %v937 = vpack.i.b16 %v914, %v914
        %v939 = vlaneseq
        %v940 = vshrl.u32 %v939, 7
        %v941 = vsub.s32 0, %v940
        %v942 = vrot.slane %v937, %v941
        %v947 = vunpack.c.l.b16 %v921
        %v948 = vunpack.c.l.b16 %v928
        %v949 = vunpack.c.l.b16 %v935
        %v950 = vunpack.c.l.b16 %v942
        %v951 = vpack.c.b16 %v948, %v947
        %v952 = vpack.c.b16 %v950, %v949
        %953 = vrot.lane.b32.xlu0 %v951, 55
        %v954 = vpop.permute.xlu0 %953
        %955 = vrot.lane.b32.xlu0 %v952, 55
        %v956 = vpop.permute.xlu0 %955
        %v957 = vrot.slane %v954, 4
        %v958 = vrot.slane %v956, 4
        %vm959 = vcmask 449536
        %v960 = vsel %vm959, %v957, %v954
        %vm961 = vcmask 1043456
        %v962 = vsel %vm961, %v957, %v958
        %v963 = vsel %vm959, %v962, %v956
        %v967 = vmul.bf16 %v886, %v960
        %v968 = vmul.bf16 %v887, %v963
        %v969 = vmul.bf16 %v888, %v958
        %973 = vrot.lane.b32.xlu0 %v967, 73
        %v974 = vpop.permute.xlu0 %973
        %975 = vrot.lane.b32.xlu0 %v968, 73
        %v976 = vpop.permute.xlu0 %975
        %977 = vrot.lane.b32.xlu0 %v969, 73
        %v978 = vpop.permute.xlu0 %977
        %v979 = vrot.slane %v974, 4
        %v980 = vrot.slane %v976, 4
        %v981 = vrot.slane %v978, 4
        %v982 = vsel %vm961, %v979, %v980
        %vm983 = vcmask 596992
        %v984 = vsel %vm983, %v974, %v982
        %v985 = vsel %vm961, %v980, %v981
        %v986 = vsel %vm983, %v976, %v985
        %989 = vst [vmem:[#allocation3] sm:$0xff] %v984
        %990 = vst [vmem:[#allocation3 + $0x8] sm:$0xff] %v986
        %v991 = vld [vmem:[#allocation2] sm:$0xff]
        %v992 = vld [vmem:[#allocation2 + $0x8] sm:$0xff]
        %v993 = vld [vmem:[#allocation2 + $0x10] sm:$0xf]
        %s994 = scalar_lea.vmem %s609, 4
        %v995 = vld [vmem:[%s994] sm:$0xf]
        %v998 = vunpack.c.l.s4 1966171168
        %v999 = vunpack.c.0.s8 %v998
        %v1000 = vlaneseq
        %v1001 = vshrl.u32 %v1000, 7
        %v1002 = vsub.s32 %v999, %v1001
        %v1003 = vrot.slane %v995, %v1002
        %v1004 = vcombine.high %v1003, %v1003
        %v1006 = vunpack.c.l.s4 1966171168
        %v1007 = vunpack.c.0.s8 %v1006
        %v1008 = vlaneseq
        %v1009 = vshrl.u32 %v1008, 7
        %v1010 = vsub.s32 %v1007, %v1009
        %v1011 = vrot.slane %v1003, %v1010
        %v1013 = vunpack.c.l.s4 1966171168
        %v1014 = vunpack.c.0.s8 %v1013
        %v1015 = vlaneseq
        %v1016 = vshrl.u32 %v1015, 7
        %v1017 = vsub.s32 %v1014, %v1016
        %v1018 = vrot.slane %v1004, %v1017
        %v1019 = vcombine.high %v1011, %v1011
        %v1020 = vcombine.high %v1018, %v1018
        %v1022 = vpack.i.b16 %v1011, %v1011
        %v1024 = vlaneseq
        %v1025 = vshrl.u32 %v1024, 7
        %v1026 = vsub.s32 0, %v1025
        %v1027 = vrot.slane %v1022, %v1026
        %v1029 = vpack.i.b16 %v1018, %v1018
        %v1031 = vlaneseq
        %v1032 = vshrl.u32 %v1031, 7
        %v1033 = vsub.s32 0, %v1032
        %v1034 = vrot.slane %v1029, %v1033
        %v1036 = vpack.i.b16 %v1019, %v1019
        %v1038 = vlaneseq
        %v1039 = vshrl.u32 %v1038, 7
        %v1040 = vsub.s32 0, %v1039
        %v1041 = vrot.slane %v1036, %v1040
        %v1043 = vpack.i.b16 %v1020, %v1020
        %v1045 = vlaneseq
        %v1046 = vshrl.u32 %v1045, 7
        %v1047 = vsub.s32 0, %v1046
        %v1048 = vrot.slane %v1043, %v1047
        %v1053 = vunpack.c.l.b16 %v1027
        %v1054 = vunpack.c.l.b16 %v1034
        %v1055 = vunpack.c.l.b16 %v1041
        %v1056 = vunpack.c.l.b16 %v1048
        %v1057 = vpack.c.b16 %v1054, %v1053
        %v1058 = vpack.c.b16 %v1056, %v1055
        %1059 = vrot.lane.b32.xlu0 %v1057, 56
        %v1060 = vpop.permute.xlu0 %1059
        %1061 = vrot.lane.b32.xlu0 %v1058, 56
        %v1062 = vpop.permute.xlu0 %1061
        %v1063 = vrot.slane %v1060, 4
        %v1064 = vrot.slane %v1062, 4
        %vm1065 = vcmask 457728
        %v1066 = vsel %vm1065, %v1063, %v1060
        %v1067 = vsel %vm961, %v1063, %v1064
        %v1068 = vsel %vm1065, %v1067, %v1062
        %v1072 = vmul.bf16 %v991, %v1066
        %v1073 = vmul.bf16 %v992, %v1068
        %v1074 = vmul.bf16 %v993, %v1064
        %1078 = vrot.lane.b32.xlu0 %v1072, 72
        %v1079 = vpop.permute.xlu0 %1078
        %1080 = vrot.lane.b32.xlu0 %v1073, 72
        %v1081 = vpop.permute.xlu0 %1080
        %1082 = vrot.lane.b32.xlu0 %v1074, 72
        %v1083 = vpop.permute.xlu0 %1082
        %v1084 = vrot.slane %v1079, 4
        %v1085 = vrot.slane %v1081, 4
        %v1086 = vrot.slane %v1083, 4
        %v1087 = vsel %vm961, %v1084, %v1085
        %vm1088 = vcmask 588800
        %v1089 = vsel %vm1088, %v1079, %v1087
        %v1090 = vsel %vm961, %v1085, %v1086
        %v1091 = vsel %vm1088, %v1081, %v1090
        %1094 = vst [vmem:[#allocation3 + $0x10] sm:$0xff] %v1089
        %1095 = vst [vmem:[#allocation3 + $0x18] sm:$0xff] %v1091
        %v1096 = vld [vmem:[#allocation2] sm:$0xff]
        %v1097 = vld [vmem:[#allocation2 + $0x8] sm:$0xff]
        %v1098 = vld [vmem:[#allocation2 + $0x10] sm:$0xf]
        %s1099 = scalar_lea.vmem %s609, 8
        %v1100 = vld [vmem:[%s1099] sm:$0xf]
        %v1103 = vunpack.c.l.s4 1966171168
        %v1104 = vunpack.c.0.s8 %v1103
        %v1105 = vlaneseq
        %v1106 = vshrl.u32 %v1105, 7
        %v1107 = vsub.s32 %v1104, %v1106
        %v1108 = vrot.slane %v1100, %v1107
        %v1109 = vcombine.high %v1108, %v1108
        %v1111 = vunpack.c.l.s4 1966171168
        %v1112 = vunpack.c.0.s8 %v1111
        %v1113 = vlaneseq
        %v1114 = vshrl.u32 %v1113, 7
        %v1115 = vsub.s32 %v1112, %v1114
        %v1116 = vrot.slane %v1108, %v1115
        %v1118 = vunpack.c.l.s4 1966171168
        %v1119 = vunpack.c.0.s8 %v1118
        %v1120 = vlaneseq
        %v1121 = vshrl.u32 %v1120, 7
        %v1122 = vsub.s32 %v1119, %v1121
        %v1123 = vrot.slane %v1109, %v1122
        %v1124 = vcombine.high %v1116, %v1116
        %v1125 = vcombine.high %v1123, %v1123
        %v1127 = vpack.i.b16 %v1116, %v1116
        %v1129 = vlaneseq
        %v1130 = vshrl.u32 %v1129, 7
        %v1131 = vsub.s32 0, %v1130
        %v1132 = vrot.slane %v1127, %v1131
        %v1134 = vpack.i.b16 %v1123, %v1123
        %v1136 = vlaneseq
        %v1137 = vshrl.u32 %v1136, 7
        %v1138 = vsub.s32 0, %v1137
        %v1139 = vrot.slane %v1134, %v1138
        %v1141 = vpack.i.b16 %v1124, %v1124
        %v1143 = vlaneseq
        %v1144 = vshrl.u32 %v1143, 7
        %v1145 = vsub.s32 0, %v1144
        %v1146 = vrot.slane %v1141, %v1145
        %v1148 = vpack.i.b16 %v1125, %v1125
        %v1150 = vlaneseq
        %v1151 = vshrl.u32 %v1150, 7
        %v1152 = vsub.s32 0, %v1151
        %v1153 = vrot.slane %v1148, %v1152
        %v1158 = vunpack.c.l.b16 %v1132
        %v1159 = vunpack.c.l.b16 %v1139
        %v1160 = vunpack.c.l.b16 %v1146
        %v1161 = vunpack.c.l.b16 %v1153
        %v1162 = vpack.c.b16 %v1159, %v1158
        %v1163 = vpack.c.b16 %v1161, %v1160
        %1164 = vrot.lane.b32.xlu0 %v1162, 57
        %v1165 = vpop.permute.xlu0 %1164
        %1166 = vrot.lane.b32.xlu0 %v1163, 57
        %v1167 = vpop.permute.xlu0 %1166
        %v1168 = vrot.slane %v1165, 4
        %v1169 = vrot.slane %v1167, 4
        %vm1170 = vcmask 465920
        %v1171 = vsel %vm1170, %v1168, %v1165
        %v1172 = vsel %vm961, %v1168, %v1169
        %v1173 = vsel %vm1170, %v1172, %v1167
        %v1177 = vmul.bf16 %v1096, %v1171
        %v1178 = vmul.bf16 %v1097, %v1173
        %v1179 = vmul.bf16 %v1098, %v1169
        %1183 = vrot.lane.b32.xlu0 %v1177, 71
        %v1184 = vpop.permute.xlu0 %1183
        %1185 = vrot.lane.b32.xlu0 %v1178, 71
        %v1186 = vpop.permute.xlu0 %1185
        %1187 = vrot.lane.b32.xlu0 %v1179, 71
        %v1188 = vpop.permute.xlu0 %1187
        %v1189 = vrot.slane %v1184, 4
        %v1190 = vrot.slane %v1186, 4
        %v1191 = vrot.slane %v1188, 4
        %v1192 = vsel %vm961, %v1189, %v1190
        %vm1193 = vcmask 580608
        %v1194 = vsel %vm1193, %v1184, %v1192
        %v1195 = vsel %vm961, %v1190, %v1191
        %v1196 = vsel %vm1193, %v1186, %v1195
        %1199 = vst [vmem:[#allocation3 + $0x20] sm:$0xff] %v1194
        %1200 = vst [vmem:[#allocation3 + $0x28] sm:$0xff] %v1196
        %v1201 = vld [vmem:[#allocation2] sm:$0xff]
        %v1202 = vld [vmem:[#allocation2 + $0x8] sm:$0xff]
        %v1203 = vld [vmem:[#allocation2 + $0x10] sm:$0xf]
        %s1204 = scalar_lea.vmem %s609, 12
        %v1205 = vld [vmem:[%s1204] sm:$0xf]
        %v1208 = vunpack.c.l.s4 1966171168
        %v1209 = vunpack.c.0.s8 %v1208
        %v1210 = vlaneseq
        %v1211 = vshrl.u32 %v1210, 7
        %v1212 = vsub.s32 %v1209, %v1211
        %v1213 = vrot.slane %v1205, %v1212
        %v1214 = vcombine.high %v1213, %v1213
        %v1216 = vunpack.c.l.s4 1966171168
        %v1217 = vunpack.c.0.s8 %v1216
        %v1218 = vlaneseq
        %v1219 = vshrl.u32 %v1218, 7
        %v1220 = vsub.s32 %v1217, %v1219
        %v1221 = vrot.slane %v1213, %v1220
        %v1223 = vunpack.c.l.s4 1966171168
        %v1224 = vunpack.c.0.s8 %v1223
        %v1225 = vlaneseq
        %v1226 = vshrl.u32 %v1225, 7
        %v1227 = vsub.s32 %v1224, %v1226
        %v1228 = vrot.slane %v1214, %v1227
        %v1229 = vcombine.high %v1221, %v1221
        %v1230 = vcombine.high %v1228, %v1228
        %v1232 = vpack.i.b16 %v1221, %v1221
        %v1234 = vlaneseq
        %v1235 = vshrl.u32 %v1234, 7
        %v1236 = vsub.s32 0, %v1235
        %v1237 = vrot.slane %v1232, %v1236
        %v1239 = vpack.i.b16 %v1228, %v1228
        %v1241 = vlaneseq
        %v1242 = vshrl.u32 %v1241, 7
        %v1243 = vsub.s32 0, %v1242
        %v1244 = vrot.slane %v1239, %v1243
        %v1246 = vpack.i.b16 %v1229, %v1229
        %v1248 = vlaneseq
        %v1249 = vshrl.u32 %v1248, 7
        %v1250 = vsub.s32 0, %v1249
        %v1251 = vrot.slane %v1246, %v1250
        %v1253 = vpack.i.b16 %v1230, %v1230
        %v1255 = vlaneseq
        %v1256 = vshrl.u32 %v1255, 7
        %v1257 = vsub.s32 0, %v1256
        %v1258 = vrot.slane %v1253, %v1257
        %v1263 = vunpack.c.l.b16 %v1237
        %v1264 = vunpack.c.l.b16 %v1244
        %v1265 = vunpack.c.l.b16 %v1251
        %v1266 = vunpack.c.l.b16 %v1258
        %v1267 = vpack.c.b16 %v1264, %v1263
        %v1268 = vpack.c.b16 %v1266, %v1265
        %1269 = vrot.lane.b32.xlu0 %v1267, 63
        %v1270 = vpop.permute.xlu0 %1269
        %1271 = vrot.lane.b32.xlu0 %v1268, 63
        %v1272 = vpop.permute.xlu0 %1271
        %v1273 = vrot.slane %v1270, 4
        %v1274 = vrot.slane %v1272, 4
        %vm1275 = vcmask 515072
        %v1276 = vsel %vm1275, %v1273, %v1270
        %v1277 = vsel %vm961, %v1273, %v1274
        %v1278 = vsel %vm1275, %v1277, %v1272
        %v1282 = vmul.bf16 %v1201, %v1276
        %v1283 = vmul.bf16 %v1202, %v1278
        %v1284 = vmul.bf16 %v1203, %v1274
        %1288 = vrot.lane.b32.xlu0 %v1282, 65
        %v1289 = vpop.permute.xlu0 %1288
        %1290 = vrot.lane.b32.xlu0 %v1283, 65
        %v1291 = vpop.permute.xlu0 %1290
        %1292 = vrot.lane.b32.xlu0 %v1284, 65
        %v1293 = vpop.permute.xlu0 %1292
        %v1294 = vrot.slane %v1289, 4
        %v1295 = vrot.slane %v1291, 4
        %v1296 = vrot.slane %v1293, 4
        %v1297 = vsel %vm961, %v1294, %v1295
        %vm1298 = vcmask 531456
        %v1299 = vsel %vm1298, %v1289, %v1297
        %v1300 = vsel %vm961, %v1295, %v1296
        %v1301 = vsel %vm1298, %v1291, %v1300
        %1304 = vst [vmem:[#allocation3 + $0x30] sm:$0xff] %v1299
        %1305 = vst [vmem:[#allocation3 + $0x38] sm:$0xff] %v1301
        %v1306 = vld [vmem:[#allocation2] sm:$0xff]
        %v1307 = vld [vmem:[#allocation2 + $0x8] sm:$0xff]
        %v1308 = vld [vmem:[#allocation2 + $0x10] sm:$0xf]
        %s1309 = scalar_lea.vmem %s609, 16
        %v1310 = vld [vmem:[%s1309] sm:$0xf]
        %v1313 = vunpack.c.l.s4 1966171168
        %v1314 = vunpack.c.0.s8 %v1313
        %v1315 = vlaneseq
        %v1316 = vshrl.u32 %v1315, 7
        %v1317 = vsub.s32 %v1314, %v1316
        %v1318 = vrot.slane %v1310, %v1317
        %v1319 = vcombine.high %v1318, %v1318
        %v1321 = vunpack.c.l.s4 1966171168
        %v1322 = vunpack.c.0.s8 %v1321
        %v1323 = vlaneseq
        %v1324 = vshrl.u32 %v1323, 7
        %v1325 = vsub.s32 %v1322, %v1324
        %v1326 = vrot.slane %v1318, %v1325
        %v1328 = vunpack.c.l.s4 1966171168
        %v1329 = vunpack.c.0.s8 %v1328
        %v1330 = vlaneseq
        %v1331 = vshrl.u32 %v1330, 7
        %v1332 = vsub.s32 %v1329, %v1331
        %v1333 = vrot.slane %v1319, %v1332
        %v1334 = vcombine.high %v1326, %v1326
        %v1335 = vcombine.high %v1333, %v1333
        %v1337 = vpack.i.b16 %v1326, %v1326
        %v1339 = vlaneseq
        %v1340 = vshrl.u32 %v1339, 7
        %v1341 = vsub.s32 0, %v1340
        %v1342 = vrot.slane %v1337, %v1341
        %v1344 = vpack.i.b16 %v1333, %v1333
        %v1346 = vlaneseq
        %v1347 = vshrl.u32 %v1346, 7
        %v1348 = vsub.s32 0, %v1347
        %v1349 = vrot.slane %v1344, %v1348
        %v1351 = vpack.i.b16 %v1334, %v1334
        %v1353 = vlaneseq
        %v1354 = vshrl.u32 %v1353, 7
        %v1355 = vsub.s32 0, %v1354
        %v1356 = vrot.slane %v1351, %v1355
        %v1358 = vpack.i.b16 %v1335, %v1335
        %v1360 = vlaneseq
        %v1361 = vshrl.u32 %v1360, 7
        %v1362 = vsub.s32 0, %v1361
        %v1363 = vrot.slane %v1358, %v1362
        %v1368 = vunpack.c.l.b16 %v1342
        %v1369 = vunpack.c.l.b16 %v1349
        %v1370 = vunpack.c.l.b16 %v1356
        %v1371 = vunpack.c.l.b16 %v1363
        %v1372 = vpack.c.b16 %v1369, %v1368
        %v1373 = vpack.c.b16 %v1371, %v1370
        %1374 = vrot.lane.b32.xlu0 %v1372, 64
        %v1375 = vpop.permute.xlu0 %1374
        %1376 = vrot.lane.b32.xlu0 %v1373, 64
        %v1377 = vpop.permute.xlu0 %1376
        %v1378 = vrot.slane %v1375, 4
        %v1379 = vrot.slane %v1377, 4
        %vm1380 = vcmask 523264
        %v1381 = vsel %vm1380, %v1378, %v1375
        %v1382 = vsel %vm961, %v1378, %v1379
        %v1383 = vsel %vm1380, %v1382, %v1377
        %v1387 = vmul.bf16 %v1306, %v1381
        %v1388 = vmul.bf16 %v1307, %v1383
        %v1389 = vmul.bf16 %v1308, %v1379
        %1393 = vrot.lane.b32.xlu0 %v1387, 64
        %v1394 = vpop.permute.xlu0 %1393
        %1395 = vrot.lane.b32.xlu0 %v1388, 64
        %v1396 = vpop.permute.xlu0 %1395
        %1397 = vrot.lane.b32.xlu0 %v1389, 64
        %v1398 = vpop.permute.xlu0 %1397
        %v1399 = vrot.slane %v1394, 4
        %v1400 = vrot.slane %v1396, 4
        %v1401 = vrot.slane %v1398, 4
        %v1402 = vsel %vm961, %v1399, %v1400
        %v1403 = vsel %vm1380, %v1394, %v1402
        %v1404 = vsel %vm961, %v1400, %v1401
        %v1405 = vsel %vm1380, %v1396, %v1404
        %1408 = vst [vmem:[#allocation3 + $0x40] sm:$0xff] %v1403
        %1409 = vst [vmem:[#allocation3 + $0x48] sm:$0xff] %v1405
        %v1410 = vld [vmem:[#allocation2] sm:$0xff]
        %v1411 = vld [vmem:[#allocation2 + $0x8] sm:$0xff]
        %v1412 = vld [vmem:[#allocation2 + $0x10] sm:$0xf]
        %s1413 = scalar_lea.vmem %s609, 20
        %v1414 = vld [vmem:[%s1413] sm:$0xf]
        %v1417 = vunpack.c.l.s4 1966171168
        %v1418 = vunpack.c.0.s8 %v1417
        %v1419 = vlaneseq
        %v1420 = vshrl.u32 %v1419, 7
        %v1421 = vsub.s32 %v1418, %v1420
        %v1422 = vrot.slane %v1414, %v1421
        %v1423 = vcombine.high %v1422, %v1422
        %v1425 = vunpack.c.l.s4 1966171168
        %v1426 = vunpack.c.0.s8 %v1425
        %v1427 = vlaneseq
        %v1428 = vshrl.u32 %v1427, 7
        %v1429 = vsub.s32 %v1426, %v1428
        %v1430 = vrot.slane %v1422, %v1429
        %v1432 = vunpack.c.l.s4 1966171168
        %v1433 = vunpack.c.0.s8 %v1432
        %v1434 = vlaneseq
        %v1435 = vshrl.u32 %v1434, 7
        %v1436 = vsub.s32 %v1433, %v1435
        %v1437 = vrot.slane %v1423, %v1436
        %v1438 = vcombine.high %v1430, %v1430
        %v1439 = vcombine.high %v1437, %v1437
        %v1441 = vpack.i.b16 %v1430, %v1430
        %v1443 = vlaneseq
        %v1444 = vshrl.u32 %v1443, 7
        %v1445 = vsub.s32 0, %v1444
        %v1446 = vrot.slane %v1441, %v1445
        %v1448 = vpack.i.b16 %v1437, %v1437
        %v1450 = vlaneseq
        %v1451 = vshrl.u32 %v1450, 7
        %v1452 = vsub.s32 0, %v1451
        %v1453 = vrot.slane %v1448, %v1452
        %v1455 = vpack.i.b16 %v1438, %v1438
        %v1457 = vlaneseq
        %v1458 = vshrl.u32 %v1457, 7
        %v1459 = vsub.s32 0, %v1458
        %v1460 = vrot.slane %v1455, %v1459
        %v1462 = vpack.i.b16 %v1439, %v1439
        %v1464 = vlaneseq
        %v1465 = vshrl.u32 %v1464, 7
        %v1466 = vsub.s32 0, %v1465
        %v1467 = vrot.slane %v1462, %v1466
        %v1472 = vunpack.c.l.b16 %v1446
        %v1473 = vunpack.c.l.b16 %v1453
        %v1474 = vunpack.c.l.b16 %v1460
        %v1475 = vunpack.c.l.b16 %v1467
        %v1476 = vpack.c.b16 %v1473, %v1472
        %v1477 = vpack.c.b16 %v1475, %v1474
        %1478 = vrot.lane.b32.xlu0 %v1476, 65
        %v1479 = vpop.permute.xlu0 %1478
        %1480 = vrot.lane.b32.xlu0 %v1477, 65
        %v1481 = vpop.permute.xlu0 %1480
        %v1482 = vrot.slane %v1479, 4
        %v1483 = vrot.slane %v1481, 4
        %v1484 = vsel %vm1298, %v1482, %v1479
        %v1485 = vsel %vm961, %v1482, %v1483
        %v1486 = vsel %vm1298, %v1485, %v1481
        %v1490 = vmul.bf16 %v1410, %v1484
        %v1491 = vmul.bf16 %v1411, %v1486
        %v1492 = vmul.bf16 %v1412, %v1483
        %1496 = vrot.lane.b32.xlu0 %v1490, 63
        %v1497 = vpop.permute.xlu0 %1496
        %1498 = vrot.lane.b32.xlu0 %v1491, 63
        %v1499 = vpop.permute.xlu0 %1498
        %1500 = vrot.lane.b32.xlu0 %v1492, 63
        %v1501 = vpop.permute.xlu0 %1500
        %v1502 = vrot.slane %v1497, 4
        %v1503 = vrot.slane %v1499, 4
        %v1504 = vrot.slane %v1501, 4
        %v1505 = vsel %vm961, %v1502, %v1503
        %v1506 = vsel %vm1275, %v1497, %v1505
        %v1507 = vsel %vm961, %v1503, %v1504
        %v1508 = vsel %vm1275, %v1499, %v1507
        %1511 = vst [vmem:[#allocation3 + $0x50] sm:$0xff] %v1506
        %1512 = vst [vmem:[#allocation3 + $0x58] sm:$0xff] %v1508
        %v1513 = vld [vmem:[#allocation2] sm:$0xff]
        %v1514 = vld [vmem:[#allocation2 + $0x8] sm:$0xff]
        %v1515 = vld [vmem:[#allocation2 + $0x10] sm:$0xf]
        %s1516 = scalar_lea.vmem %s609, 24
        %v1517 = vld [vmem:[%s1516] sm:$0xf]
        %v1520 = vunpack.c.l.s4 1966171168
        %v1521 = vunpack.c.0.s8 %v1520
        %v1522 = vlaneseq
        %v1523 = vshrl.u32 %v1522, 7
        %v1524 = vsub.s32 %v1521, %v1523
        %v1525 = vrot.slane %v1517, %v1524
        %v1526 = vcombine.high %v1525, %v1525
        %v1528 = vunpack.c.l.s4 1966171168
        %v1529 = vunpack.c.0.s8 %v1528
        %v1530 = vlaneseq
        %v1531 = vshrl.u32 %v1530, 7
        %v1532 = vsub.s32 %v1529, %v1531
        %v1533 = vrot.slane %v1525, %v1532
        %v1535 = vunpack.c.l.s4 1966171168
        %v1536 = vunpack.c.0.s8 %v1535
        %v1537 = vlaneseq
        %v1538 = vshrl.u32 %v1537, 7
        %v1539 = vsub.s32 %v1536, %v1538
        %v1540 = vrot.slane %v1526, %v1539
        %v1541 = vcombine.high %v1533, %v1533
        %v1542 = vcombine.high %v1540, %v1540
        %v1544 = vpack.i.b16 %v1533, %v1533
        %v1546 = vlaneseq
        %v1547 = vshrl.u32 %v1546, 7
        %v1548 = vsub.s32 0, %v1547
        %v1549 = vrot.slane %v1544, %v1548
        %v1551 = vpack.i.b16 %v1540, %v1540
        %v1553 = vlaneseq
        %v1554 = vshrl.u32 %v1553, 7
        %v1555 = vsub.s32 0, %v1554
        %v1556 = vrot.slane %v1551, %v1555
        %v1558 = vpack.i.b16 %v1541, %v1541
        %v1560 = vlaneseq
        %v1561 = vshrl.u32 %v1560, 7
        %v1562 = vsub.s32 0, %v1561
        %v1563 = vrot.slane %v1558, %v1562
        %v1565 = vpack.i.b16 %v1542, %v1542
        %v1567 = vlaneseq
        %v1568 = vshrl.u32 %v1567, 7
        %v1569 = vsub.s32 0, %v1568
        %v1570 = vrot.slane %v1565, %v1569
        %v1575 = vunpack.c.l.b16 %v1549
        %v1576 = vunpack.c.l.b16 %v1556
        %v1577 = vunpack.c.l.b16 %v1563
        %v1578 = vunpack.c.l.b16 %v1570
        %v1579 = vpack.c.b16 %v1576, %v1575
        %v1580 = vpack.c.b16 %v1578, %v1577
        %1581 = vrot.lane.b32.xlu0 %v1579, 71
        %v1582 = vpop.permute.xlu0 %1581
        %1583 = vrot.lane.b32.xlu0 %v1580, 71
        %v1584 = vpop.permute.xlu0 %1583
        %v1585 = vrot.slane %v1582, 4
        %v1586 = vrot.slane %v1584, 4
        %v1587 = vsel %vm1193, %v1585, %v1582
        %v1588 = vsel %vm961, %v1585, %v1586
        %v1589 = vsel %vm1193, %v1588, %v1584
        %v1593 = vmul.bf16 %v1513, %v1587
        %v1594 = vmul.bf16 %v1514, %v1589
        %v1595 = vmul.bf16 %v1515, %v1586
        %1599 = vrot.lane.b32.xlu0 %v1593, 57
        %v1600 = vpop.permute.xlu0 %1599
        %1601 = vrot.lane.b32.xlu0 %v1594, 57
        %v1602 = vpop.permute.xlu0 %1601
        %1603 = vrot.lane.b32.xlu0 %v1595, 57
        %v1604 = vpop.permute.xlu0 %1603
        %v1605 = vrot.slane %v1600, 4
        %v1606 = vrot.slane %v1602, 4
        %v1607 = vrot.slane %v1604, 4
        %v1608 = vsel %vm961, %v1605, %v1606
        %v1609 = vsel %vm1170, %v1600, %v1608
        %v1610 = vsel %vm961, %v1606, %v1607
        %v1611 = vsel %vm1170, %v1602, %v1610
        %1614 = vst [vmem:[#allocation3 + $0x60] sm:$0xff] %v1609
        %1615 = vst [vmem:[#allocation3 + $0x68] sm:$0xff] %v1611
        %v1616 = vld [vmem:[#allocation2] sm:$0xff]
        %v1617 = vld [vmem:[#allocation2 + $0x8] sm:$0xff]
        %v1618 = vld [vmem:[#allocation2 + $0x10] sm:$0xf]
        %s1619 = scalar_lea.vmem %s609, 28
        %v1620 = vld [vmem:[%s1619] sm:$0xf]
        %v1623 = vunpack.c.l.s4 1966171168
        %v1624 = vunpack.c.0.s8 %v1623
        %v1625 = vlaneseq
        %v1626 = vshrl.u32 %v1625, 7
        %v1627 = vsub.s32 %v1624, %v1626
        %v1628 = vrot.slane %v1620, %v1627
        %v1629 = vcombine.high %v1628, %v1628
        %v1631 = vunpack.c.l.s4 1966171168
        %v1632 = vunpack.c.0.s8 %v1631
        %v1633 = vlaneseq
        %v1634 = vshrl.u32 %v1633, 7
        %v1635 = vsub.s32 %v1632, %v1634
        %v1636 = vrot.slane %v1628, %v1635
        %v1638 = vunpack.c.l.s4 1966171168
        %v1639 = vunpack.c.0.s8 %v1638
        %v1640 = vlaneseq
        %v1641 = vshrl.u32 %v1640, 7
        %v1642 = vsub.s32 %v1639, %v1641
        %v1643 = vrot.slane %v1629, %v1642
        %v1644 = vcombine.high %v1636, %v1636
        %v1645 = vcombine.high %v1643, %v1643
        %v1647 = vpack.i.b16 %v1636, %v1636
        %v1649 = vlaneseq
        %v1650 = vshrl.u32 %v1649, 7
        %v1651 = vsub.s32 0, %v1650
        %v1652 = vrot.slane %v1647, %v1651
        %v1654 = vpack.i.b16 %v1643, %v1643
        %v1656 = vlaneseq
        %v1657 = vshrl.u32 %v1656, 7
        %v1658 = vsub.s32 0, %v1657
        %v1659 = vrot.slane %v1654, %v1658
        %v1661 = vpack.i.b16 %v1644, %v1644
        %v1663 = vlaneseq
        %v1664 = vshrl.u32 %v1663, 7
        %v1665 = vsub.s32 0, %v1664
        %v1666 = vrot.slane %v1661, %v1665
        %v1668 = vpack.i.b16 %v1645, %v1645
        %v1670 = vlaneseq
        %v1671 = vshrl.u32 %v1670, 7
        %v1672 = vsub.s32 0, %v1671
        %v1673 = vrot.slane %v1668, %v1672
        %v1678 = vunpack.c.l.b16 %v1652
        %v1679 = vunpack.c.l.b16 %v1659
        %v1680 = vunpack.c.l.b16 %v1666
        %v1681 = vunpack.c.l.b16 %v1673
        %v1682 = vpack.c.b16 %v1679, %v1678
        %v1683 = vpack.c.b16 %v1681, %v1680
        %1684 = vrot.lane.b32.xlu0 %v1682, 72
        %v1685 = vpop.permute.xlu0 %1684
        %1686 = vrot.lane.b32.xlu0 %v1683, 72
        %v1687 = vpop.permute.xlu0 %1686
        %v1688 = vrot.slane %v1685, 4
        %v1689 = vrot.slane %v1687, 4
        %v1690 = vsel %vm1088, %v1688, %v1685
        %v1691 = vsel %vm961, %v1688, %v1689
        %v1692 = vsel %vm1088, %v1691, %v1687
        %v1696 = vmul.bf16 %v1616, %v1690
        %v1697 = vmul.bf16 %v1617, %v1692
        %v1698 = vmul.bf16 %v1618, %v1689
        %1702 = vrot.lane.b32.xlu0 %v1696, 56
        %v1703 = vpop.permute.xlu0 %1702
        %1704 = vrot.lane.b32.xlu0 %v1697, 56
        %v1705 = vpop.permute.xlu0 %1704
        %1706 = vrot.lane.b32.xlu0 %v1698, 56
        %v1707 = vpop.permute.xlu0 %1706
        %v1708 = vrot.slane %v1703, 4
        %v1709 = vrot.slane %v1705, 4
        %v1710 = vrot.slane %v1707, 4
        %v1711 = vsel %vm961, %v1708, %v1709
        %v1712 = vsel %vm1065, %v1703, %v1711
        %v1713 = vsel %vm961, %v1709, %v1710
        %v1714 = vsel %vm1065, %v1705, %v1713
        %1717 = vst [vmem:[#allocation3 + $0x70] sm:$0xff] %v1712
        %1718 = vst [vmem:[#allocation3 + $0x78] sm:$0xff] %v1714
        %v1719 = vld [vmem:[#allocation2] sm:$0xff]
        %v1720 = vld [vmem:[#allocation2 + $0x8] sm:$0xff]
        %v1721 = vld [vmem:[#allocation2 + $0x10] sm:$0xf]
        %s1722 = scalar_lea.vmem %s609, 32
        %v1723 = vld [vmem:[%s1722] sm:$0xf]
        %v1726 = vunpack.c.l.s4 1966171168
        %v1727 = vunpack.c.0.s8 %v1726
        %v1728 = vlaneseq
        %v1729 = vshrl.u32 %v1728, 7
        %v1730 = vsub.s32 %v1727, %v1729
        %v1731 = vrot.slane %v1723, %v1730
        %v1732 = vcombine.high %v1731, %v1731
        %v1734 = vunpack.c.l.s4 1966171168
        %v1735 = vunpack.c.0.s8 %v1734
        %v1736 = vlaneseq
        %v1737 = vshrl.u32 %v1736, 7
        %v1738 = vsub.s32 %v1735, %v1737
        %v1739 = vrot.slane %v1731, %v1738
        %v1741 = vunpack.c.l.s4 1966171168
        %v1742 = vunpack.c.0.s8 %v1741
        %v1743 = vlaneseq
        %v1744 = vshrl.u32 %v1743, 7
        %v1745 = vsub.s32 %v1742, %v1744
        %v1746 = vrot.slane %v1732, %v1745
        %v1747 = vcombine.high %v1739, %v1739
        %v1748 = vcombine.high %v1746, %v1746
        %v1750 = vpack.i.b16 %v1739, %v1739
        %v1752 = vlaneseq
        %v1753 = vshrl.u32 %v1752, 7
        %v1754 = vsub.s32 0, %v1753
        %v1755 = vrot.slane %v1750, %v1754
        %v1757 = vpack.i.b16 %v1746, %v1746
        %v1759 = vlaneseq
        %v1760 = vshrl.u32 %v1759, 7
        %v1761 = vsub.s32 0, %v1760
        %v1762 = vrot.slane %v1757, %v1761
        %v1764 = vpack.i.b16 %v1747, %v1747
        %v1766 = vlaneseq
        %v1767 = vshrl.u32 %v1766, 7
        %v1768 = vsub.s32 0, %v1767
        %v1769 = vrot.slane %v1764, %v1768
        %v1771 = vpack.i.b16 %v1748, %v1748
        %v1773 = vlaneseq
        %v1774 = vshrl.u32 %v1773, 7
        %v1775 = vsub.s32 0, %v1774
        %v1776 = vrot.slane %v1771, %v1775
        %v1781 = vunpack.c.l.b16 %v1755
        %v1782 = vunpack.c.l.b16 %v1762
        %v1783 = vunpack.c.l.b16 %v1769
        %v1784 = vunpack.c.l.b16 %v1776
        %v1785 = vpack.c.b16 %v1782, %v1781
        %v1786 = vpack.c.b16 %v1784, %v1783
        %1787 = vrot.lane.b32.xlu0 %v1785, 73
        %v1788 = vpop.permute.xlu0 %1787
        %1789 = vrot.lane.b32.xlu0 %v1786, 73
        %v1790 = vpop.permute.xlu0 %1789
        %v1791 = vrot.slane %v1788, 4
        %v1792 = vrot.slane %v1790, 4
        %v1793 = vsel %vm983, %v1791, %v1788
        %v1794 = vsel %vm961, %v1791, %v1792
        %v1795 = vsel %vm983, %v1794, %v1790
        %v1799 = vmul.bf16 %v1719, %v1793
        %v1800 = vmul.bf16 %v1720, %v1795
        %v1801 = vmul.bf16 %v1721, %v1792
        %1805 = vrot.lane.b32.xlu0 %v1799, 55
        %v1806 = vpop.permute.xlu0 %1805
        %1807 = vrot.lane.b32.xlu0 %v1800, 55
        %v1808 = vpop.permute.xlu0 %1807
        %1809 = vrot.lane.b32.xlu0 %v1801, 55
        %v1810 = vpop.permute.xlu0 %1809
        %v1811 = vrot.slane %v1806, 4
        %v1812 = vrot.slane %v1808, 4
        %v1813 = vrot.slane %v1810, 4
        %v1814 = vsel %vm961, %v1811, %v1812
        %v1815 = vsel %vm959, %v1806, %v1814
        %v1816 = vsel %vm961, %v1812, %v1813
        %v1817 = vsel %vm959, %v1808, %v1816
        %1820 = vst [vmem:[#allocation3 + $0x80] sm:$0xff] %v1815
        %1821 = vst [vmem:[#allocation3 + $0x88] sm:$0xff] %v1817
        %v1822 = vld [vmem:[#allocation2] sm:$0xff]
        %v1823 = vld [vmem:[#allocation2 + $0x8] sm:$0xff]
        %v1824 = vld [vmem:[#allocation2 + $0x10] sm:$0xf]
        %s1825 = scalar_lea.vmem %s609, 36
        %v1826 = vld [vmem:[%s1825] sm:$0xf]
        %v1829 = vunpack.c.l.s4 1966171168
        %v1830 = vunpack.c.0.s8 %v1829
        %v1831 = vlaneseq
        %v1832 = vshrl.u32 %v1831, 7
        %v1833 = vsub.s32 %v1830, %v1832
        %v1834 = vrot.slane %v1826, %v1833
        %v1835 = vcombine.high %v1834, %v1834
        %v1837 = vunpack.c.l.s4 1966171168
        %v1838 = vunpack.c.0.s8 %v1837
        %v1839 = vlaneseq
        %v1840 = vshrl.u32 %v1839, 7
        %v1841 = vsub.s32 %v1838, %v1840
        %v1842 = vrot.slane %v1834, %v1841
        %v1844 = vunpack.c.l.s4 1966171168
        %v1845 = vunpack.c.0.s8 %v1844
        %v1846 = vlaneseq
        %v1847 = vshrl.u32 %v1846, 7
        %v1848 = vsub.s32 %v1845, %v1847
        %v1849 = vrot.slane %v1835, %v1848
        %v1850 = vcombine.high %v1842, %v1842
        %v1851 = vcombine.high %v1849, %v1849
        %v1853 = vpack.i.b16 %v1842, %v1842
        %v1855 = vlaneseq
        %v1856 = vshrl.u32 %v1855, 7
        %v1857 = vsub.s32 0, %v1856
        %v1858 = vrot.slane %v1853, %v1857
        %v1860 = vpack.i.b16 %v1849, %v1849
        %v1862 = vlaneseq
        %v1863 = vshrl.u32 %v1862, 7
        %v1864 = vsub.s32 0, %v1863
        %v1865 = vrot.slane %v1860, %v1864
        %v1867 = vpack.i.b16 %v1850, %v1850
        %v1869 = vlaneseq
        %v1870 = vshrl.u32 %v1869, 7
        %v1871 = vsub.s32 0, %v1870
        %v1872 = vrot.slane %v1867, %v1871
        %v1874 = vpack.i.b16 %v1851, %v1851
        %v1876 = vlaneseq
        %v1877 = vshrl.u32 %v1876, 7
        %v1878 = vsub.s32 0, %v1877
        %v1879 = vrot.slane %v1874, %v1878
        %v1884 = vunpack.c.l.b16 %v1858
        %v1885 = vunpack.c.l.b16 %v1865
        %v1886 = vunpack.c.l.b16 %v1872
        %v1887 = vunpack.c.l.b16 %v1879
        %v1888 = vpack.c.b16 %v1885, %v1884
        %v1889 = vpack.c.b16 %v1887, %v1886
        %1890 = vrot.lane.b32.xlu0 %v1888, 119
        %v1891 = vpop.permute.xlu0 %1890
        %1892 = vrot.lane.b32.xlu0 %v1889, 119
        %v1893 = vpop.permute.xlu0 %1892
        %v1894 = vrot.slane %v1891, 4
        %v1895 = vrot.slane %v1893, 4
        %vm1896 = vcmask 973824
        %v1897 = vsel %vm1896, %v1894, %v1891
        %v1898 = vsel %vm961, %v1894, %v1895
        %v1899 = vsel %vm1896, %v1898, %v1893
        %v1903 = vmul.bf16 %v1822, %v1897
        %v1904 = vmul.bf16 %v1823, %v1899
        %v1905 = vmul.bf16 %v1824, %v1895
        %1909 = vrot.lane.b32.xlu0 %v1903, 9
        %v1910 = vpop.permute.xlu0 %1909
        %1911 = vrot.lane.b32.xlu0 %v1904, 9
        %v1912 = vpop.permute.xlu0 %1911
        %1913 = vrot.lane.b32.xlu0 %v1905, 9
        %v1914 = vpop.permute.xlu0 %1913
        %v1915 = vrot.slane %v1910, 4
        %v1916 = vrot.slane %v1912, 4
        %v1917 = vrot.slane %v1914, 4
        %v1918 = vsel %vm961, %v1915, %v1916
        %vm1919 = vcmask 72704
        %v1920 = vsel %vm1919, %v1910, %v1918
        %v1921 = vsel %vm961, %v1916, %v1917
        %v1922 = vsel %vm1919, %v1912, %v1921
        %1925 = vst [vmem:[#allocation3 + $0x90] sm:$0xff] %v1920
        %1926 = vst [vmem:[#allocation3 + $0x98] sm:$0xff] %v1922
        %v1927 = vld [vmem:[#allocation2] sm:$0xff]
        %v1928 = vld [vmem:[#allocation2 + $0x8] sm:$0xff]
        %v1929 = vld [vmem:[#allocation2 + $0x10] sm:$0xf]
        %s1930 = scalar_lea.vmem %s609, 40
        %v1931 = vld [vmem:[%s1930] sm:$0xf]
        %v1934 = vunpack.c.l.s4 1966171168
        %v1935 = vunpack.c.0.s8 %v1934
        %v1936 = vlaneseq
        %v1937 = vshrl.u32 %v1936, 7
        %v1938 = vsub.s32 %v1935, %v1937
        %v1939 = vrot.slane %v1931, %v1938
        %v1940 = vcombine.high %v1939, %v1939
        %v1942 = vunpack.c.l.s4 1966171168
        %v1943 = vunpack.c.0.s8 %v1942
        %v1944 = vlaneseq
        %v1945 = vshrl.u32 %v1944, 7
        %v1946 = vsub.s32 %v1943, %v1945
        %v1947 = vrot.slane %v1939, %v1946
        %v1949 = vunpack.c.l.s4 1966171168
        %v1950 = vunpack.c.0.s8 %v1949
        %v1951 = vlaneseq
        %v1952 = vshrl.u32 %v1951, 7
        %v1953 = vsub.s32 %v1950, %v1952
        %v1954 = vrot.slane %v1940, %v1953
        %v1955 = vcombine.high %v1947, %v1947
        %v1956 = vcombine.high %v1954, %v1954
        %v1958 = vpack.i.b16 %v1947, %v1947
        %v1960 = vlaneseq
        %v1961 = vshrl.u32 %v1960, 7
        %v1962 = vsub.s32 0, %v1961
        %v1963 = vrot.slane %v1958, %v1962
        %v1965 = vpack.i.b16 %v1954, %v1954
        %v1967 = vlaneseq
        %v1968 = vshrl.u32 %v1967, 7
        %v1969 = vsub.s32 0, %v1968
        %v1970 = vrot.slane %v1965, %v1969
        %v1972 = vpack.i.b16 %v1955, %v1955
        %v1974 = vlaneseq
        %v1975 = vshrl.u32 %v1974, 7
        %v1976 = vsub.s32 0, %v1975
        %v1977 = vrot.slane %v1972, %v1976
        %v1979 = vpack.i.b16 %v1956, %v1956
        %v1981 = vlaneseq
        %v1982 = vshrl.u32 %v1981, 7
        %v1983 = vsub.s32 0, %v1982
        %v1984 = vrot.slane %v1979, %v1983
        %v1989 = vunpack.c.l.b16 %v1963
        %v1990 = vunpack.c.l.b16 %v1970
        %v1991 = vunpack.c.l.b16 %v1977
        %v1992 = vunpack.c.l.b16 %v1984
        %v1993 = vpack.c.b16 %v1990, %v1989
        %v1994 = vpack.c.b16 %v1992, %v1991
        %1995 = vrot.lane.b32.xlu0 %v1993, 120
        %v1996 = vpop.permute.xlu0 %1995
        %1997 = vrot.lane.b32.xlu0 %v1994, 120
        %v1998 = vpop.permute.xlu0 %1997
        %v1999 = vrot.slane %v1996, 4
        %v2000 = vrot.slane %v1998, 4
        %vm2001 = vcmask 982016
        %v2002 = vsel %vm2001, %v1999, %v1996
        %v2003 = vsel %vm961, %v1999, %v2000
        %v2004 = vsel %vm2001, %v2003, %v1998
        %v2008 = vmul.bf16 %v1927, %v2002
        %v2009 = vmul.bf16 %v1928, %v2004
        %v2010 = vmul.bf16 %v1929, %v2000
        %2014 = vrot.lane.b32.xlu0 %v2008, 8
        %v2015 = vpop.permute.xlu0 %2014
        %2016 = vrot.lane.b32.xlu0 %v2009, 8
        %v2017 = vpop.permute.xlu0 %2016
        %2018 = vrot.lane.b32.xlu0 %v2010, 8
        %v2019 = vpop.permute.xlu0 %2018
        %v2020 = vrot.slane %v2015, 4
        %v2021 = vrot.slane %v2017, 4
        %v2022 = vrot.slane %v2019, 4
        %v2023 = vsel %vm961, %v2020, %v2021
        %vm2024 = vcmask 64512
        %v2025 = vsel %vm2024, %v2015, %v2023
        %v2026 = vsel %vm961, %v2021, %v2022
        %v2027 = vsel %vm2024, %v2017, %v2026
        %2030 = vst [vmem:[#allocation3 + $0xa0] sm:$0xff] %v2025
        %2031 = vst [vmem:[#allocation3 + $0xa8] sm:$0xff] %v2027
        %v2032 = vld [vmem:[#allocation2] sm:$0xff]
        %v2033 = vld [vmem:[#allocation2 + $0x8] sm:$0xff]
        %v2034 = vld [vmem:[#allocation2 + $0x10] sm:$0xf]
        %s2035 = scalar_lea.vmem %s609, 44
        %v2036 = vld [vmem:[%s2035] sm:$0xf]
        %v2039 = vunpack.c.l.s4 1966171168
        %v2040 = vunpack.c.0.s8 %v2039
        %v2041 = vlaneseq
        %v2042 = vshrl.u32 %v2041, 7
        %v2043 = vsub.s32 %v2040, %v2042
        %v2044 = vrot.slane %v2036, %v2043
        %v2045 = vcombine.high %v2044, %v2044
        %v2047 = vunpack.c.l.s4 1966171168
        %v2048 = vunpack.c.0.s8 %v2047
        %v2049 = vlaneseq
        %v2050 = vshrl.u32 %v2049, 7
        %v2051 = vsub.s32 %v2048, %v2050
        %v2052 = vrot.slane %v2044, %v2051
        %v2054 = vunpack.c.l.s4 1966171168
        %v2055 = vunpack.c.0.s8 %v2054
        %v2056 = vlaneseq
        %v2057 = vshrl.u32 %v2056, 7
        %v2058 = vsub.s32 %v2055, %v2057
        %v2059 = vrot.slane %v2045, %v2058
        %v2060 = vcombine.high %v2052, %v2052
        %v2061 = vcombine.high %v2059, %v2059
        %v2063 = vpack.i.b16 %v2052, %v2052
        %v2065 = vlaneseq
        %v2066 = vshrl.u32 %v2065, 7
        %v2067 = vsub.s32 0, %v2066
        %v2068 = vrot.slane %v2063, %v2067
        %v2070 = vpack.i.b16 %v2059, %v2059
        %v2072 = vlaneseq
        %v2073 = vshrl.u32 %v2072, 7
        %v2074 = vsub.s32 0, %v2073
        %v2075 = vrot.slane %v2070, %v2074
        %v2077 = vpack.i.b16 %v2060, %v2060
        %v2079 = vlaneseq
        %v2080 = vshrl.u32 %v2079, 7
        %v2081 = vsub.s32 0, %v2080
        %v2082 = vrot.slane %v2077, %v2081
        %v2084 = vpack.i.b16 %v2061, %v2061
        %v2086 = vlaneseq
        %v2087 = vshrl.u32 %v2086, 7
        %v2088 = vsub.s32 0, %v2087
        %v2089 = vrot.slane %v2084, %v2088
        %v2094 = vunpack.c.l.b16 %v2068
        %v2095 = vunpack.c.l.b16 %v2075
        %v2096 = vunpack.c.l.b16 %v2082
        %v2097 = vunpack.c.l.b16 %v2089
        %v2098 = vpack.c.b16 %v2095, %v2094
        %v2099 = vpack.c.b16 %v2097, %v2096
        %2100 = vrot.lane.b32.xlu0 %v2098, 121
        %v2101 = vpop.permute.xlu0 %2100
        %2102 = vrot.lane.b32.xlu0 %v2099, 121
        %v2103 = vpop.permute.xlu0 %2102
        %v2104 = vrot.slane %v2101, 4
        %v2105 = vrot.slane %v2103, 4
        %vm2106 = vcmask 990208
        %v2107 = vsel %vm2106, %v2104, %v2101
        %v2108 = vsel %vm961, %v2104, %v2105
        %v2109 = vsel %vm2106, %v2108, %v2103
        %v2113 = vmul.bf16 %v2032, %v2107
        %v2114 = vmul.bf16 %v2033, %v2109
        %v2115 = vmul.bf16 %v2034, %v2105
        %2119 = vrot.lane.b32.xlu0 %v2113, 7
        %v2120 = vpop.permute.xlu0 %2119
        %2121 = vrot.lane.b32.xlu0 %v2114, 7
        %v2122 = vpop.permute.xlu0 %2121
        %2123 = vrot.lane.b32.xlu0 %v2115, 7
        %v2124 = vpop.permute.xlu0 %2123
        %v2125 = vrot.slane %v2120, 4
        %v2126 = vrot.slane %v2122, 4
        %v2127 = vrot.slane %v2124, 4
        %v2128 = vsel %vm961, %v2125, %v2126
        %vm2129 = vcmask 56320
        %v2130 = vsel %vm2129, %v2120, %v2128
        %v2131 = vsel %vm961, %v2126, %v2127
        %v2132 = vsel %vm2129, %v2122, %v2131
        %2135 = vst [vmem:[#allocation3 + $0xb0] sm:$0xff] %v2130
        %2136 = vst [vmem:[#allocation3 + $0xb8] sm:$0xff] %v2132
        %v2137 = vld [vmem:[#allocation2] sm:$0xff]
        %v2138 = vld [vmem:[#allocation2 + $0x8] sm:$0xff]
        %v2139 = vld [vmem:[#allocation2 + $0x10] sm:$0xf]
        %s2140 = scalar_lea.vmem %s609, 48
        %v2141 = vld [vmem:[%s2140] sm:$0xf]
        %v2144 = vunpack.c.l.s4 1966171168
        %v2145 = vunpack.c.0.s8 %v2144
        %v2146 = vlaneseq
        %v2147 = vshrl.u32 %v2146, 7
        %v2148 = vsub.s32 %v2145, %v2147
        %v2149 = vrot.slane %v2141, %v2148
        %v2150 = vcombine.high %v2149, %v2149
        %v2152 = vunpack.c.l.s4 1966171168
        %v2153 = vunpack.c.0.s8 %v2152
        %v2154 = vlaneseq
        %v2155 = vshrl.u32 %v2154, 7
        %v2156 = vsub.s32 %v2153, %v2155
        %v2157 = vrot.slane %v2149, %v2156
        %v2159 = vunpack.c.l.s4 1966171168
        %v2160 = vunpack.c.0.s8 %v2159
        %v2161 = vlaneseq
        %v2162 = vshrl.u32 %v2161, 7
        %v2163 = vsub.s32 %v2160, %v2162
        %v2164 = vrot.slane %v2150, %v2163
        %v2165 = vcombine.high %v2157, %v2157
        %v2166 = vcombine.high %v2164, %v2164
        %v2168 = vpack.i.b16 %v2157, %v2157
        %v2170 = vlaneseq
        %v2171 = vshrl.u32 %v2170, 7
        %v2172 = vsub.s32 0, %v2171
        %v2173 = vrot.slane %v2168, %v2172
        %v2175 = vpack.i.b16 %v2164, %v2164
        %v2177 = vlaneseq
        %v2178 = vshrl.u32 %v2177, 7
        %v2179 = vsub.s32 0, %v2178
        %v2180 = vrot.slane %v2175, %v2179
        %v2182 = vpack.i.b16 %v2165, %v2165
        %v2184 = vlaneseq
        %v2185 = vshrl.u32 %v2184, 7
        %v2186 = vsub.s32 0, %v2185
        %v2187 = vrot.slane %v2182, %v2186
        %v2189 = vpack.i.b16 %v2166, %v2166
        %v2191 = vlaneseq
        %v2192 = vshrl.u32 %v2191, 7
        %v2193 = vsub.s32 0, %v2192
        %v2194 = vrot.slane %v2189, %v2193
        %v2199 = vunpack.c.l.b16 %v2173
        %v2200 = vunpack.c.l.b16 %v2180
        %v2201 = vunpack.c.l.b16 %v2187
        %v2202 = vunpack.c.l.b16 %v2194
        %v2203 = vpack.c.b16 %v2200, %v2199
        %v2204 = vpack.c.b16 %v2202, %v2201
        %2205 = vrot.lane.b32.xlu0 %v2203, 127
        %v2206 = vpop.permute.xlu0 %2205
        %2207 = vrot.lane.b32.xlu0 %v2204, 127
        %v2208 = vpop.permute.xlu0 %2207
        %v2209 = vrot.slane %v2206, 4
        %v2210 = vrot.slane %v2208, 4
        %vm2211 = vcmask 1039360
        %v2212 = vsel %vm2211, %v2209, %v2206
        %v2213 = vsel %vm961, %v2209, %v2210
        %v2214 = vsel %vm2211, %v2213, %v2208
        %v2218 = vmul.bf16 %v2137, %v2212
        %v2219 = vmul.bf16 %v2138, %v2214
        %v2220 = vmul.bf16 %v2139, %v2210
        %2224 = vrot.lane.b32.xlu0 %v2218, 1
        %v2225 = vpop.permute.xlu0 %2224
        %2226 = vrot.lane.b32.xlu0 %v2219, 1
        %v2227 = vpop.permute.xlu0 %2226
        %2228 = vrot.lane.b32.xlu0 %v2220, 1
        %v2229 = vpop.permute.xlu0 %2228
        %v2230 = vrot.slane %v2225, 4
        %v2231 = vrot.slane %v2227, 4
        %v2232 = vrot.slane %v2229, 4
        %v2233 = vsel %vm961, %v2230, %v2231
        %vm2234 = vcmask 7168
        %v2235 = vsel %vm2234, %v2225, %v2233
        %v2236 = vsel %vm961, %v2231, %v2232
        %v2237 = vsel %vm2234, %v2227, %v2236
        %2240 = vst [vmem:[#allocation3 + $0xc0] sm:$0xff] %v2235
        %2241 = vst [vmem:[#allocation3 + $0xc8] sm:$0xff] %v2237
        %v2242 = vld [vmem:[#allocation2 + $0x4] sm:$0xff]
        %v2243 = vld [vmem:[#allocation2 + $0xc] sm:$0xff]
        %2244 = vst [vmem:[#allocation3 + $0xd0] sm:$0xff] %v2242
        %2245 = vst [vmem:[#allocation3 + $0xd8] sm:$0xff] %v2243
        %v2246 = vld [vmem:[#allocation2 + $0x4] sm:$0xff]
        %v2247 = vld [vmem:[#allocation2 + $0xc] sm:$0xff]
        %v2248 = vld [vmem:[#allocation2 + $0x14] sm:$0xf]
        %s2249 = scalar_lea.vmem %s609, 56
        %v2250 = vld [vmem:[%s2249] sm:$0xf]
        %v2253 = vunpack.c.l.s4 1966171168
        %v2254 = vunpack.c.0.s8 %v2253
        %v2255 = vlaneseq
        %v2256 = vshrl.u32 %v2255, 7
        %v2257 = vsub.s32 %v2254, %v2256
        %v2258 = vrot.slane %v2250, %v2257
        %v2259 = vcombine.high %v2258, %v2258
        %v2261 = vunpack.c.l.s4 1966171168
        %v2262 = vunpack.c.0.s8 %v2261
        %v2263 = vlaneseq
        %v2264 = vshrl.u32 %v2263, 7
        %v2265 = vsub.s32 %v2262, %v2264
        %v2266 = vrot.slane %v2258, %v2265
        %v2268 = vunpack.c.l.s4 1966171168
        %v2269 = vunpack.c.0.s8 %v2268
        %v2270 = vlaneseq
        %v2271 = vshrl.u32 %v2270, 7
        %v2272 = vsub.s32 %v2269, %v2271
        %v2273 = vrot.slane %v2259, %v2272
        %v2274 = vcombine.high %v2266, %v2266
        %v2275 = vcombine.high %v2273, %v2273
        %v2277 = vpack.i.b16 %v2266, %v2266
        %v2279 = vlaneseq
        %v2280 = vshrl.u32 %v2279, 7
        %v2281 = vsub.s32 0, %v2280
        %v2282 = vrot.slane %v2277, %v2281
        %v2284 = vpack.i.b16 %v2273, %v2273
        %v2286 = vlaneseq
        %v2287 = vshrl.u32 %v2286, 7
        %v2288 = vsub.s32 0, %v2287
        %v2289 = vrot.slane %v2284, %v2288
        %v2291 = vpack.i.b16 %v2274, %v2274
        %v2293 = vlaneseq
        %v2294 = vshrl.u32 %v2293, 7
        %v2295 = vsub.s32 0, %v2294
        %v2296 = vrot.slane %v2291, %v2295
        %v2298 = vpack.i.b16 %v2275, %v2275
        %v2300 = vlaneseq
        %v2301 = vshrl.u32 %v2300, 7
        %v2302 = vsub.s32 0, %v2301
        %v2303 = vrot.slane %v2298, %v2302
        %v2308 = vunpack.c.l.b16 %v2282
        %v2309 = vunpack.c.l.b16 %v2289
        %v2310 = vunpack.c.l.b16 %v2296
        %v2311 = vunpack.c.l.b16 %v2303
        %v2312 = vpack.c.b16 %v2309, %v2308
        %v2313 = vpack.c.b16 %v2311, %v2310
        %2314 = vrot.lane.b32.xlu0 %v2312, 1
        %v2315 = vpop.permute.xlu0 %2314
        %2316 = vrot.lane.b32.xlu0 %v2313, 1
        %v2317 = vpop.permute.xlu0 %2316
        %v2318 = vrot.slane %v2315, 4
        %v2319 = vrot.slane %v2317, 4
        %v2320 = vsel %vm2234, %v2318, %v2315
        %v2321 = vsel %vm961, %v2318, %v2319
        %v2322 = vsel %vm2234, %v2321, %v2317
        %v2326 = vmul.bf16 %v2246, %v2320
        %v2327 = vmul.bf16 %v2247, %v2322
        %v2328 = vmul.bf16 %v2248, %v2319
        %2332 = vrot.lane.b32.xlu0 %v2326, 127
        %v2333 = vpop.permute.xlu0 %2332
        %2334 = vrot.lane.b32.xlu0 %v2327, 127
        %v2335 = vpop.permute.xlu0 %2334
        %2336 = vrot.lane.b32.xlu0 %v2328, 127
        %v2337 = vpop.permute.xlu0 %2336
        %v2338 = vrot.slane %v2333, 4
        %v2339 = vrot.slane %v2335, 4
        %v2340 = vrot.slane %v2337, 4
        %v2341 = vsel %vm961, %v2338, %v2339
        %v2342 = vsel %vm2211, %v2333, %v2341
        %v2343 = vsel %vm961, %v2339, %v2340
        %v2344 = vsel %vm2211, %v2335, %v2343
        %2347 = vst [vmem:[#allocation3 + $0xe0] sm:$0xff] %v2342
        %2348 = vst [vmem:[#allocation3 + $0xe8] sm:$0xff] %v2344
        %v2349 = vld [vmem:[#allocation2 + $0x4] sm:$0xff]
        %v2350 = vld [vmem:[#allocation2 + $0xc] sm:$0xff]
        %v2351 = vld [vmem:[#allocation2 + $0x14] sm:$0xf]
        %s2352 = scalar_lea.vmem %s609, 60
        %v2353 = vld [vmem:[%s2352] sm:$0xf]
        %v2356 = vunpack.c.l.s4 1966171168
        %v2357 = vunpack.c.0.s8 %v2356
        %v2358 = vlaneseq
        %v2359 = vshrl.u32 %v2358, 7
        %v2360 = vsub.s32 %v2357, %v2359
        %v2361 = vrot.slane %v2353, %v2360
        %v2362 = vcombine.high %v2361, %v2361
        %v2364 = vunpack.c.l.s4 1966171168
        %v2365 = vunpack.c.0.s8 %v2364
        %v2366 = vlaneseq
        %v2367 = vshrl.u32 %v2366, 7
        %v2368 = vsub.s32 %v2365, %v2367
        %v2369 = vrot.slane %v2361, %v2368
        %v2371 = vunpack.c.l.s4 1966171168
        %v2372 = vunpack.c.0.s8 %v2371
        %v2373 = vlaneseq
        %v2374 = vshrl.u32 %v2373, 7
        %v2375 = vsub.s32 %v2372, %v2374
        %v2376 = vrot.slane %v2362, %v2375
        %v2377 = vcombine.high %v2369, %v2369
        %v2378 = vcombine.high %v2376, %v2376
        %v2380 = vpack.i.b16 %v2369, %v2369
        %v2382 = vlaneseq
        %v2383 = vshrl.u32 %v2382, 7
        %v2384 = vsub.s32 0, %v2383
        %v2385 = vrot.slane %v2380, %v2384
        %v2387 = vpack.i.b16 %v2376, %v2376
        %v2389 = vlaneseq
        %v2390 = vshrl.u32 %v2389, 7
        %v2391 = vsub.s32 0, %v2390
        %v2392 = vrot.slane %v2387, %v2391
        %v2394 = vpack.i.b16 %v2377, %v2377
        %v2396 = vlaneseq
        %v2397 = vshrl.u32 %v2396, 7
        %v2398 = vsub.s32 0, %v2397
        %v2399 = vrot.slane %v2394, %v2398
        %v2401 = vpack.i.b16 %v2378, %v2378
        %v2403 = vlaneseq
        %v2404 = vshrl.u32 %v2403, 7
        %v2405 = vsub.s32 0, %v2404
        %v2406 = vrot.slane %v2401, %v2405
        %v2411 = vunpack.c.l.b16 %v2385
        %v2412 = vunpack.c.l.b16 %v2392
        %v2413 = vunpack.c.l.b16 %v2399
        %v2414 = vunpack.c.l.b16 %v2406
        %v2415 = vpack.c.b16 %v2412, %v2411
        %v2416 = vpack.c.b16 %v2414, %v2413
        %2417 = vrot.lane.b32.xlu0 %v2415, 7
        %v2418 = vpop.permute.xlu0 %2417
        %2419 = vrot.lane.b32.xlu0 %v2416, 7
        %v2420 = vpop.permute.xlu0 %2419
        %v2421 = vrot.slane %v2418, 4
        %v2422 = vrot.slane %v2420, 4
        %v2423 = vsel %vm2129, %v2421, %v2418
        %v2424 = vsel %vm961, %v2421, %v2422
        %v2425 = vsel %vm2129, %v2424, %v2420
        %v2429 = vmul.bf16 %v2349, %v2423
        %v2430 = vmul.bf16 %v2350, %v2425
        %v2431 = vmul.bf16 %v2351, %v2422
        %2435 = vrot.lane.b32.xlu0 %v2429, 121
        %v2436 = vpop.permute.xlu0 %2435
        %2437 = vrot.lane.b32.xlu0 %v2430, 121
        %v2438 = vpop.permute.xlu0 %2437
        %2439 = vrot.lane.b32.xlu0 %v2431, 121
        %v2440 = vpop.permute.xlu0 %2439
        %v2441 = vrot.slane %v2436, 4
        %v2442 = vrot.slane %v2438, 4
        %v2443 = vrot.slane %v2440, 4
        %v2444 = vsel %vm961, %v2441, %v2442
        %v2445 = vsel %vm2106, %v2436, %v2444
        %v2446 = vsel %vm961, %v2442, %v2443
        %v2447 = vsel %vm2106, %v2438, %v2446
        %2450 = vst [vmem:[#allocation3 + $0xf0] sm:$0xff] %v2445
        %2451 = vst [vmem:[#allocation3 + $0xf8] sm:$0xff] %v2447
        %v2452 = vld [vmem:[#allocation2 + $0x4] sm:$0xff]
        %v2453 = vld [vmem:[#allocation2 + $0xc] sm:$0xff]
        %v2454 = vld [vmem:[#allocation2 + $0x14] sm:$0xf]
        %s2455 = scalar_lea.vmem %s609, 64
        %v2456 = vld [vmem:[%s2455] sm:$0xf]
        %v2459 = vunpack.c.l.s4 1966171168
        %v2460 = vunpack.c.0.s8 %v2459
        %v2461 = vlaneseq
        %v2462 = vshrl.u32 %v2461, 7
        %v2463 = vsub.s32 %v2460, %v2462
        %v2464 = vrot.slane %v2456, %v2463
        %v2465 = vcombine.high %v2464, %v2464
        %v2467 = vunpack.c.l.s4 1966171168
        %v2468 = vunpack.c.0.s8 %v2467
        %v2469 = vlaneseq
        %v2470 = vshrl.u32 %v2469, 7
        %v2471 = vsub.s32 %v2468, %v2470
        %v2472 = vrot.slane %v2464, %v2471
        %v2474 = vunpack.c.l.s4 1966171168
        %v2475 = vunpack.c.0.s8 %v2474
        %v2476 = vlaneseq
        %v2477 = vshrl.u32 %v2476, 7
        %v2478 = vsub.s32 %v2475, %v2477
        %v2479 = vrot.slane %v2465, %v2478
        %v2480 = vcombine.high %v2472, %v2472
        %v2481 = vcombine.high %v2479, %v2479
        %v2483 = vpack.i.b16 %v2472, %v2472
        %v2485 = vlaneseq
        %v2486 = vshrl.u32 %v2485, 7
        %v2487 = vsub.s32 0, %v2486
        %v2488 = vrot.slane %v2483, %v2487
        %v2490 = vpack.i.b16 %v2479, %v2479
        %v2492 = vlaneseq
        %v2493 = vshrl.u32 %v2492, 7
        %v2494 = vsub.s32 0, %v2493
        %v2495 = vrot.slane %v2490, %v2494
        %v2497 = vpack.i.b16 %v2480, %v2480
        %v2499 = vlaneseq
        %v2500 = vshrl.u32 %v2499, 7
        %v2501 = vsub.s32 0, %v2500
        %v2502 = vrot.slane %v2497, %v2501
        %v2504 = vpack.i.b16 %v2481, %v2481
        %v2506 = vlaneseq
        %v2507 = vshrl.u32 %v2506, 7
        %v2508 = vsub.s32 0, %v2507
        %v2509 = vrot.slane %v2504, %v2508
        %v2514 = vunpack.c.l.b16 %v2488
        %v2515 = vunpack.c.l.b16 %v2495
        %v2516 = vunpack.c.l.b16 %v2502
        %v2517 = vunpack.c.l.b16 %v2509
        %v2518 = vpack.c.b16 %v2515, %v2514
        %v2519 = vpack.c.b16 %v2517, %v2516
        %2520 = vrot.lane.b32.xlu0 %v2518, 8
        %v2521 = vpop.permute.xlu0 %2520
        %2522 = vrot.lane.b32.xlu0 %v2519, 8
        %v2523 = vpop.permute.xlu0 %2522
        %v2524 = vrot.slane %v2521, 4
        %v2525 = vrot.slane %v2523, 4
        %v2526 = vsel %vm2024, %v2524, %v2521
        %v2527 = vsel %vm961, %v2524, %v2525
        %v2528 = vsel %vm2024, %v2527, %v2523
        %v2532 = vmul.bf16 %v2452, %v2526
        %v2533 = vmul.bf16 %v2453, %v2528
        %v2534 = vmul.bf16 %v2454, %v2525
        %2538 = vrot.lane.b32.xlu0 %v2532, 120
        %v2539 = vpop.permute.xlu0 %2538
        %2540 = vrot.lane.b32.xlu0 %v2533, 120
        %v2541 = vpop.permute.xlu0 %2540
        %2542 = vrot.lane.b32.xlu0 %v2534, 120
        %v2543 = vpop.permute.xlu0 %2542
        %v2544 = vrot.slane %v2539, 4
        %v2545 = vrot.slane %v2541, 4
        %v2546 = vrot.slane %v2543, 4
        %v2547 = vsel %vm961, %v2544, %v2545
        %v2548 = vsel %vm2001, %v2539, %v2547
        %v2549 = vsel %vm961, %v2545, %v2546
        %v2550 = vsel %vm2001, %v2541, %v2549
        %2553 = vst [vmem:[#allocation3 + $0x100] sm:$0xff] %v2548
        %2554 = vst [vmem:[#allocation3 + $0x108] sm:$0xff] %v2550
        %v2555 = vld [vmem:[#allocation2 + $0x4] sm:$0xff]
        %v2556 = vld [vmem:[#allocation2 + $0xc] sm:$0xff]
        %v2557 = vld [vmem:[#allocation2 + $0x14] sm:$0xf]
        %s2558 = scalar_lea.vmem %s609, 68
        %v2559 = vld [vmem:[%s2558] sm:$0xf]
        %v2562 = vunpack.c.l.s4 1966171168
        %v2563 = vunpack.c.0.s8 %v2562
        %v2564 = vlaneseq
        %v2565 = vshrl.u32 %v2564, 7
        %v2566 = vsub.s32 %v2563, %v2565
        %v2567 = vrot.slane %v2559, %v2566
        %v2568 = vcombine.high %v2567, %v2567
        %v2570 = vunpack.c.l.s4 1966171168
        %v2571 = vunpack.c.0.s8 %v2570
        %v2572 = vlaneseq
        %v2573 = vshrl.u32 %v2572, 7
        %v2574 = vsub.s32 %v2571, %v2573
        %v2575 = vrot.slane %v2567, %v2574
        %v2577 = vunpack.c.l.s4 1966171168
        %v2578 = vunpack.c.0.s8 %v2577
        %v2579 = vlaneseq
        %v2580 = vshrl.u32 %v2579, 7
        %v2581 = vsub.s32 %v2578, %v2580
        %v2582 = vrot.slane %v2568, %v2581
        %v2583 = vcombine.high %v2575, %v2575
        %v2584 = vcombine.high %v2582, %v2582
        %v2586 = vpack.i.b16 %v2575, %v2575
        %v2588 = vlaneseq
        %v2589 = vshrl.u32 %v2588, 7
        %v2590 = vsub.s32 0, %v2589
        %v2591 = vrot.slane %v2586, %v2590
        %v2593 = vpack.i.b16 %v2582, %v2582
        %v2595 = vlaneseq
        %v2596 = vshrl.u32 %v2595, 7
        %v2597 = vsub.s32 0, %v2596
        %v2598 = vrot.slane %v2593, %v2597
        %v2600 = vpack.i.b16 %v2583, %v2583
        %v2602 = vlaneseq
        %v2603 = vshrl.u32 %v2602, 7
        %v2604 = vsub.s32 0, %v2603
        %v2605 = vrot.slane %v2600, %v2604
        %v2607 = vpack.i.b16 %v2584, %v2584
        %v2609 = vlaneseq
        %v2610 = vshrl.u32 %v2609, 7
        %v2611 = vsub.s32 0, %v2610
        %v2612 = vrot.slane %v2607, %v2611
        %v2617 = vunpack.c.l.b16 %v2591
        %v2618 = vunpack.c.l.b16 %v2598
        %v2619 = vunpack.c.l.b16 %v2605
        %v2620 = vunpack.c.l.b16 %v2612
        %v2621 = vpack.c.b16 %v2618, %v2617
        %v2622 = vpack.c.b16 %v2620, %v2619
        %2623 = vrot.lane.b32.xlu0 %v2621, 9
        %v2624 = vpop.permute.xlu0 %2623
        %2625 = vrot.lane.b32.xlu0 %v2622, 9
        %v2626 = vpop.permute.xlu0 %2625
        %v2627 = vrot.slane %v2624, 4
        %v2628 = vrot.slane %v2626, 4
        %v2629 = vsel %vm1919, %v2627, %v2624
        %v2630 = vsel %vm961, %v2627, %v2628
        %v2631 = vsel %vm1919, %v2630, %v2626
        %v2635 = vmul.bf16 %v2555, %v2629
        %v2636 = vmul.bf16 %v2556, %v2631
        %v2637 = vmul.bf16 %v2557, %v2628
        %2641 = vrot.lane.b32.xlu0 %v2635, 119
        %v2642 = vpop.permute.xlu0 %2641
        %2643 = vrot.lane.b32.xlu0 %v2636, 119
        %v2644 = vpop.permute.xlu0 %2643
        %2645 = vrot.lane.b32.xlu0 %v2637, 119
        %v2646 = vpop.permute.xlu0 %2645
        %v2647 = vrot.slane %v2642, 4
        %v2648 = vrot.slane %v2644, 4
        %v2649 = vrot.slane %v2646, 4
        %v2650 = vsel %vm961, %v2647, %v2648
        %v2651 = vsel %vm1896, %v2642, %v2650
        %v2652 = vsel %vm961, %v2648, %v2649
        %v2653 = vsel %vm1896, %v2644, %v2652
        %2656 = vst [vmem:[#allocation3 + $0x110] sm:$0xff] %v2651
        %2657 = vst [vmem:[#allocation3 + $0x118] sm:$0xff] %v2653
        %v2658 = vld [vmem:[#allocation2 + $0x4] sm:$0xff]
        %v2659 = vld [vmem:[#allocation2 + $0xc] sm:$0xff]
        %v2660 = vld [vmem:[#allocation2 + $0x14] sm:$0xf]
        %s2661 = scalar_lea.vmem %s609, 72
        %v2662 = vld [vmem:[%s2661] sm:$0xf]
        %v2665 = vunpack.c.l.s4 1966171168
        %v2666 = vunpack.c.0.s8 %v2665
        %v2667 = vlaneseq
        %v2668 = vshrl.u32 %v2667, 7
        %v2669 = vsub.s32 %v2666, %v2668
        %v2670 = vrot.slane %v2662, %v2669
        %v2671 = vcombine.high %v2670, %v2670
        %v2673 = vunpack.c.l.s4 1966171168
        %v2674 = vunpack.c.0.s8 %v2673
        %v2675 = vlaneseq
        %v2676 = vshrl.u32 %v2675, 7
        %v2677 = vsub.s32 %v2674, %v2676
        %v2678 = vrot.slane %v2670, %v2677
        %v2680 = vunpack.c.l.s4 1966171168
        %v2681 = vunpack.c.0.s8 %v2680
        %v2682 = vlaneseq
        %v2683 = vshrl.u32 %v2682, 7
        %v2684 = vsub.s32 %v2681, %v2683
        %v2685 = vrot.slane %v2671, %v2684
        %v2686 = vcombine.high %v2678, %v2678
        %v2687 = vcombine.high %v2685, %v2685
        %v2689 = vpack.i.b16 %v2678, %v2678
        %v2691 = vlaneseq
        %v2692 = vshrl.u32 %v2691, 7
        %v2693 = vsub.s32 0, %v2692
        %v2694 = vrot.slane %v2689, %v2693
        %v2696 = vpack.i.b16 %v2685, %v2685
        %v2698 = vlaneseq
        %v2699 = vshrl.u32 %v2698, 7
        %v2700 = vsub.s32 0, %v2699
        %v2701 = vrot.slane %v2696, %v2700
        %v2703 = vpack.i.b16 %v2686, %v2686
        %v2705 = vlaneseq
        %v2706 = vshrl.u32 %v2705, 7
        %v2707 = vsub.s32 0, %v2706
        %v2708 = vrot.slane %v2703, %v2707
        %v2710 = vpack.i.b16 %v2687, %v2687
        %v2712 = vlaneseq
        %v2713 = vshrl.u32 %v2712, 7
        %v2714 = vsub.s32 0, %v2713
        %v2715 = vrot.slane %v2710, %v2714
        %v2720 = vunpack.c.l.b16 %v2694
        %v2721 = vunpack.c.l.b16 %v2701
        %v2722 = vunpack.c.l.b16 %v2708
        %v2723 = vunpack.c.l.b16 %v2715
        %v2724 = vpack.c.b16 %v2721, %v2720
        %v2725 = vpack.c.b16 %v2723, %v2722
        %2726 = vrot.lane.b32.xlu0 %v2724, 55
        %v2727 = vpop.permute.xlu0 %2726
        %2728 = vrot.lane.b32.xlu0 %v2725, 55
        %v2729 = vpop.permute.xlu0 %2728
        %v2730 = vrot.slane %v2727, 4
        %v2731 = vrot.slane %v2729, 4
        %v2732 = vsel %vm959, %v2730, %v2727
        %v2733 = vsel %vm961, %v2730, %v2731
        %v2734 = vsel %vm959, %v2733, %v2729
        %v2738 = vmul.bf16 %v2658, %v2732
        %v2739 = vmul.bf16 %v2659, %v2734
        %v2740 = vmul.bf16 %v2660, %v2731
        %2744 = vrot.lane.b32.xlu0 %v2738, 73
        %v2745 = vpop.permute.xlu0 %2744
        %2746 = vrot.lane.b32.xlu0 %v2739, 73
        %v2747 = vpop.permute.xlu0 %2746
        %2748 = vrot.lane.b32.xlu0 %v2740, 73
        %v2749 = vpop.permute.xlu0 %2748
        %v2750 = vrot.slane %v2745, 4
        %v2751 = vrot.slane %v2747, 4
        %v2752 = vrot.slane %v2749, 4
        %v2753 = vsel %vm961, %v2750, %v2751
        %v2754 = vsel %vm983, %v2745, %v2753
        %v2755 = vsel %vm961, %v2751, %v2752
        %v2756 = vsel %vm983, %v2747, %v2755
        %2759 = vst [vmem:[#allocation3 + $0x120] sm:$0xff] %v2754
        %2760 = vst [vmem:[#allocation3 + $0x128] sm:$0xff] %v2756
        %v2761 = vld [vmem:[#allocation2 + $0x4] sm:$0xff]
        %v2762 = vld [vmem:[#allocation2 + $0xc] sm:$0xff]
        %v2763 = vld [vmem:[#allocation2 + $0x14] sm:$0xf]
        %s2764 = scalar_lea.vmem %s609, 76
        %v2765 = vld [vmem:[%s2764] sm:$0xf]
        %v2768 = vunpack.c.l.s4 1966171168
        %v2769 = vunpack.c.0.s8 %v2768
        %v2770 = vlaneseq
        %v2771 = vshrl.u32 %v2770, 7
        %v2772 = vsub.s32 %v2769, %v2771
        %v2773 = vrot.slane %v2765, %v2772
        %v2774 = vcombine.high %v2773, %v2773
        %v2776 = vunpack.c.l.s4 1966171168
        %v2777 = vunpack.c.0.s8 %v2776
        %v2778 = vlaneseq
        %v2779 = vshrl.u32 %v2778, 7
        %v2780 = vsub.s32 %v2777, %v2779
        %v2781 = vrot.slane %v2773, %v2780
        %v2783 = vunpack.c.l.s4 1966171168
        %v2784 = vunpack.c.0.s8 %v2783
        %v2785 = vlaneseq
        %v2786 = vshrl.u32 %v2785, 7
        %v2787 = vsub.s32 %v2784, %v2786
        %v2788 = vrot.slane %v2774, %v2787
        %v2789 = vcombine.high %v2781, %v2781
        %v2790 = vcombine.high %v2788, %v2788
        %v2792 = vpack.i.b16 %v2781, %v2781
        %v2794 = vlaneseq
        %v2795 = vshrl.u32 %v2794, 7
        %v2796 = vsub.s32 0, %v2795
        %v2797 = vrot.slane %v2792, %v2796
        %v2799 = vpack.i.b16 %v2788, %v2788
        %v2801 = vlaneseq
        %v2802 = vshrl.u32 %v2801, 7
        %v2803 = vsub.s32 0, %v2802
        %v2804 = vrot.slane %v2799, %v2803
        %v2806 = vpack.i.b16 %v2789, %v2789
        %v2808 = vlaneseq
        %v2809 = vshrl.u32 %v2808, 7
        %v2810 = vsub.s32 0, %v2809
        %v2811 = vrot.slane %v2806, %v2810
        %v2813 = vpack.i.b16 %v2790, %v2790
        %v2815 = vlaneseq
        %v2816 = vshrl.u32 %v2815, 7
        %v2817 = vsub.s32 0, %v2816
        %v2818 = vrot.slane %v2813, %v2817
        %v2823 = vunpack.c.l.b16 %v2797
        %v2824 = vunpack.c.l.b16 %v2804
        %v2825 = vunpack.c.l.b16 %v2811
        %v2826 = vunpack.c.l.b16 %v2818
        %v2827 = vpack.c.b16 %v2824, %v2823
        %v2828 = vpack.c.b16 %v2826, %v2825
        %2829 = vrot.lane.b32.xlu0 %v2827, 56
        %v2830 = vpop.permute.xlu0 %2829
        %2831 = vrot.lane.b32.xlu0 %v2828, 56
        %v2832 = vpop.permute.xlu0 %2831
        %v2833 = vrot.slane %v2830, 4
        %v2834 = vrot.slane %v2832, 4
        %v2835 = vsel %vm1065, %v2833, %v2830
        %v2836 = vsel %vm961, %v2833, %v2834
        %v2837 = vsel %vm1065, %v2836, %v2832
        %v2841 = vmul.bf16 %v2761, %v2835
        %v2842 = vmul.bf16 %v2762, %v2837
        %v2843 = vmul.bf16 %v2763, %v2834
        %2847 = vrot.lane.b32.xlu0 %v2841, 72
        %v2848 = vpop.permute.xlu0 %2847
        %2849 = vrot.lane.b32.xlu0 %v2842, 72
        %v2850 = vpop.permute.xlu0 %2849
        %2851 = vrot.lane.b32.xlu0 %v2843, 72
        %v2852 = vpop.permute.xlu0 %2851
        %v2853 = vrot.slane %v2848, 4
        %v2854 = vrot.slane %v2850, 4
        %v2855 = vrot.slane %v2852, 4
        %v2856 = vsel %vm961, %v2853, %v2854
        %v2857 = vsel %vm1088, %v2848, %v2856
        %v2858 = vsel %vm961, %v2854, %v2855
        %v2859 = vsel %vm1088, %v2850, %v2858
        %2862 = vst [vmem:[#allocation3 + $0x130] sm:$0xff] %v2857
        %2863 = vst [vmem:[#allocation3 + $0x138] sm:$0xff] %v2859
        %v2864 = vld [vmem:[#allocation2 + $0x4] sm:$0xff]
        %v2865 = vld [vmem:[#allocation2 + $0xc] sm:$0xff]
        %v2866 = vld [vmem:[#allocation2 + $0x14] sm:$0xf]
        %s2867 = scalar_lea.vmem %s609, 80
        %v2868 = vld [vmem:[%s2867] sm:$0xf]
        %v2871 = vunpack.c.l.s4 1966171168
        %v2872 = vunpack.c.0.s8 %v2871
        %v2873 = vlaneseq
        %v2874 = vshrl.u32 %v2873, 7
        %v2875 = vsub.s32 %v2872, %v2874
        %v2876 = vrot.slane %v2868, %v2875
        %v2877 = vcombine.high %v2876, %v2876
        %v2879 = vunpack.c.l.s4 1966171168
        %v2880 = vunpack.c.0.s8 %v2879
        %v2881 = vlaneseq
        %v2882 = vshrl.u32 %v2881, 7
        %v2883 = vsub.s32 %v2880, %v2882
        %v2884 = vrot.slane %v2876, %v2883
        %v2886 = vunpack.c.l.s4 1966171168
        %v2887 = vunpack.c.0.s8 %v2886
        %v2888 = vlaneseq
        %v2889 = vshrl.u32 %v2888, 7
        %v2890 = vsub.s32 %v2887, %v2889
        %v2891 = vrot.slane %v2877, %v2890
        %v2892 = vcombine.high %v2884, %v2884
        %v2893 = vcombine.high %v2891, %v2891
        %v2895 = vpack.i.b16 %v2884, %v2884
        %v2897 = vlaneseq
        %v2898 = vshrl.u32 %v2897, 7
        %v2899 = vsub.s32 0, %v2898
        %v2900 = vrot.slane %v2895, %v2899
        %v2902 = vpack.i.b16 %v2891, %v2891
        %v2904 = vlaneseq
        %v2905 = vshrl.u32 %v2904, 7
        %v2906 = vsub.s32 0, %v2905
        %v2907 = vrot.slane %v2902, %v2906
        %v2909 = vpack.i.b16 %v2892, %v2892
        %v2911 = vlaneseq
        %v2912 = vshrl.u32 %v2911, 7
        %v2913 = vsub.s32 0, %v2912
        %v2914 = vrot.slane %v2909, %v2913
        %v2916 = vpack.i.b16 %v2893, %v2893
        %v2918 = vlaneseq
        %v2919 = vshrl.u32 %v2918, 7
        %v2920 = vsub.s32 0, %v2919
        %v2921 = vrot.slane %v2916, %v2920
        %v2926 = vunpack.c.l.b16 %v2900
        %v2927 = vunpack.c.l.b16 %v2907
        %v2928 = vunpack.c.l.b16 %v2914
        %v2929 = vunpack.c.l.b16 %v2921
        %v2930 = vpack.c.b16 %v2927, %v2926
        %v2931 = vpack.c.b16 %v2929, %v2928
        %2932 = vrot.lane.b32.xlu0 %v2930, 57
        %v2933 = vpop.permute.xlu0 %2932
        %2934 = vrot.lane.b32.xlu0 %v2931, 57
        %v2935 = vpop.permute.xlu0 %2934
        %v2936 = vrot.slane %v2933, 4
        %v2937 = vrot.slane %v2935, 4
        %v2938 = vsel %vm1170, %v2936, %v2933
        %v2939 = vsel %vm961, %v2936, %v2937
        %v2940 = vsel %vm1170, %v2939, %v2935
        %v2944 = vmul.bf16 %v2864, %v2938
        %v2945 = vmul.bf16 %v2865, %v2940
        %v2946 = vmul.bf16 %v2866, %v2937
        %2950 = vrot.lane.b32.xlu0 %v2944, 71
        %v2951 = vpop.permute.xlu0 %2950
        %2952 = vrot.lane.b32.xlu0 %v2945, 71
        %v2953 = vpop.permute.xlu0 %2952
        %2954 = vrot.lane.b32.xlu0 %v2946, 71
        %v2955 = vpop.permute.xlu0 %2954
        %v2956 = vrot.slane %v2951, 4
        %v2957 = vrot.slane %v2953, 4
        %v2958 = vrot.slane %v2955, 4
        %v2959 = vsel %vm961, %v2956, %v2957
        %v2960 = vsel %vm1193, %v2951, %v2959
        %v2961 = vsel %vm961, %v2957, %v2958
        %v2962 = vsel %vm1193, %v2953, %v2961
        %2965 = vst [vmem:[#allocation3 + $0x140] sm:$0xff] %v2960
        %2966 = vst [vmem:[#allocation3 + $0x148] sm:$0xff] %v2962
        %v2967 = vld [vmem:[#allocation2 + $0x4] sm:$0xff]
        %v2968 = vld [vmem:[#allocation2 + $0xc] sm:$0xff]
        %v2969 = vld [vmem:[#allocation2 + $0x14] sm:$0xf]
        %s2970 = scalar_lea.vmem %s609, 84
        %v2971 = vld [vmem:[%s2970] sm:$0xf]
        %v2974 = vunpack.c.l.s4 1966171168
        %v2975 = vunpack.c.0.s8 %v2974
        %v2976 = vlaneseq
        %v2977 = vshrl.u32 %v2976, 7
        %v2978 = vsub.s32 %v2975, %v2977
        %v2979 = vrot.slane %v2971, %v2978
        %v2980 = vcombine.high %v2979, %v2979
        %v2982 = vunpack.c.l.s4 1966171168
        %v2983 = vunpack.c.0.s8 %v2982
        %v2984 = vlaneseq
        %v2985 = vshrl.u32 %v2984, 7
        %v2986 = vsub.s32 %v2983, %v2985
        %v2987 = vrot.slane %v2979, %v2986
        %v2989 = vunpack.c.l.s4 1966171168
        %v2990 = vunpack.c.0.s8 %v2989
        %v2991 = vlaneseq
        %v2992 = vshrl.u32 %v2991, 7
        %v2993 = vsub.s32 %v2990, %v2992
        %v2994 = vrot.slane %v2980, %v2993
        %v2995 = vcombine.high %v2987, %v2987
        %v2996 = vcombine.high %v2994, %v2994
        %v2998 = vpack.i.b16 %v2987, %v2987
        %v3000 = vlaneseq
        %v3001 = vshrl.u32 %v3000, 7
        %v3002 = vsub.s32 0, %v3001
        %v3003 = vrot.slane %v2998, %v3002
        %v3005 = vpack.i.b16 %v2994, %v2994
        %v3007 = vlaneseq
        %v3008 = vshrl.u32 %v3007, 7
        %v3009 = vsub.s32 0, %v3008
        %v3010 = vrot.slane %v3005, %v3009
        %v3012 = vpack.i.b16 %v2995, %v2995
        %v3014 = vlaneseq
        %v3015 = vshrl.u32 %v3014, 7
        %v3016 = vsub.s32 0, %v3015
        %v3017 = vrot.slane %v3012, %v3016
        %v3019 = vpack.i.b16 %v2996, %v2996
        %v3021 = vlaneseq
        %v3022 = vshrl.u32 %v3021, 7
        %v3023 = vsub.s32 0, %v3022
        %v3024 = vrot.slane %v3019, %v3023
        %v3029 = vunpack.c.l.b16 %v3003
        %v3030 = vunpack.c.l.b16 %v3010
        %v3031 = vunpack.c.l.b16 %v3017
        %v3032 = vunpack.c.l.b16 %v3024
        %v3033 = vpack.c.b16 %v3030, %v3029
        %v3034 = vpack.c.b16 %v3032, %v3031
        %3035 = vrot.lane.b32.xlu0 %v3033, 63
        %v3036 = vpop.permute.xlu0 %3035
        %3037 = vrot.lane.b32.xlu0 %v3034, 63
        %v3038 = vpop.permute.xlu0 %3037
        %v3039 = vrot.slane %v3036, 4
        %v3040 = vrot.slane %v3038, 4
        %v3041 = vsel %vm1275, %v3039, %v3036
        %v3042 = vsel %vm961, %v3039, %v3040
        %v3043 = vsel %vm1275, %v3042, %v3038
        %v3047 = vmul.bf16 %v2967, %v3041
        %v3048 = vmul.bf16 %v2968, %v3043
        %v3049 = vmul.bf16 %v2969, %v3040
        %3053 = vrot.lane.b32.xlu0 %v3047, 65
        %v3054 = vpop.permute.xlu0 %3053
        %3055 = vrot.lane.b32.xlu0 %v3048, 65
        %v3056 = vpop.permute.xlu0 %3055
        %3057 = vrot.lane.b32.xlu0 %v3049, 65
        %v3058 = vpop.permute.xlu0 %3057
        %v3059 = vrot.slane %v3054, 4
        %v3060 = vrot.slane %v3056, 4
        %v3061 = vrot.slane %v3058, 4
        %v3062 = vsel %vm961, %v3059, %v3060
        %v3063 = vsel %vm1298, %v3054, %v3062
        %v3064 = vsel %vm961, %v3060, %v3061
        %v3065 = vsel %vm1298, %v3056, %v3064
        %3068 = vst [vmem:[#allocation3 + $0x150] sm:$0xff] %v3063
        %3069 = vst [vmem:[#allocation3 + $0x158] sm:$0xff] %v3065
        %v3070 = vld [vmem:[#allocation2 + $0x4] sm:$0xff]
        %v3071 = vld [vmem:[#allocation2 + $0xc] sm:$0xff]
        %v3072 = vld [vmem:[#allocation2 + $0x14] sm:$0xf]
        %s3073 = scalar_lea.vmem %s609, 88
        %v3074 = vld [vmem:[%s3073] sm:$0xf]
        %v3077 = vunpack.c.l.s4 1966171168
        %v3078 = vunpack.c.0.s8 %v3077
        %v3079 = vlaneseq
        %v3080 = vshrl.u32 %v3079, 7
        %v3081 = vsub.s32 %v3078, %v3080
        %v3082 = vrot.slane %v3074, %v3081
        %v3083 = vcombine.high %v3082, %v3082
        %v3085 = vunpack.c.l.s4 1966171168
        %v3086 = vunpack.c.0.s8 %v3085
        %v3087 = vlaneseq
        %v3088 = vshrl.u32 %v3087, 7
        %v3089 = vsub.s32 %v3086, %v3088
        %v3090 = vrot.slane %v3082, %v3089
        %v3092 = vunpack.c.l.s4 1966171168
        %v3093 = vunpack.c.0.s8 %v3092
        %v3094 = vlaneseq
        %v3095 = vshrl.u32 %v3094, 7
        %v3096 = vsub.s32 %v3093, %v3095
        %v3097 = vrot.slane %v3083, %v3096
        %v3098 = vcombine.high %v3090, %v3090
        %v3099 = vcombine.high %v3097, %v3097
        %v3101 = vpack.i.b16 %v3090, %v3090
        %v3103 = vlaneseq
        %v3104 = vshrl.u32 %v3103, 7
        %v3105 = vsub.s32 0, %v3104
        %v3106 = vrot.slane %v3101, %v3105
        %v3108 = vpack.i.b16 %v3097, %v3097
        %v3110 = vlaneseq
        %v3111 = vshrl.u32 %v3110, 7
        %v3112 = vsub.s32 0, %v3111
        %v3113 = vrot.slane %v3108, %v3112
        %v3115 = vpack.i.b16 %v3098, %v3098
        %v3117 = vlaneseq
        %v3118 = vshrl.u32 %v3117, 7
        %v3119 = vsub.s32 0, %v3118
        %v3120 = vrot.slane %v3115, %v3119
        %v3122 = vpack.i.b16 %v3099, %v3099
        %v3124 = vlaneseq
        %v3125 = vshrl.u32 %v3124, 7
        %v3126 = vsub.s32 0, %v3125
        %v3127 = vrot.slane %v3122, %v3126
        %v3132 = vunpack.c.l.b16 %v3106
        %v3133 = vunpack.c.l.b16 %v3113
        %v3134 = vunpack.c.l.b16 %v3120
        %v3135 = vunpack.c.l.b16 %v3127
        %v3136 = vpack.c.b16 %v3133, %v3132
        %v3137 = vpack.c.b16 %v3135, %v3134
        %3138 = vrot.lane.b32.xlu0 %v3136, 64
        %v3139 = vpop.permute.xlu0 %3138
        %3140 = vrot.lane.b32.xlu0 %v3137, 64
        %v3141 = vpop.permute.xlu0 %3140
        %v3142 = vrot.slane %v3139, 4
        %v3143 = vrot.slane %v3141, 4
        %v3144 = vsel %vm1380, %v3142, %v3139
        %v3145 = vsel %vm961, %v3142, %v3143
        %v3146 = vsel %vm1380, %v3145, %v3141
        %v3150 = vmul.bf16 %v3070, %v3144
        %v3151 = vmul.bf16 %v3071, %v3146
        %v3152 = vmul.bf16 %v3072, %v3143
        %3156 = vrot.lane.b32.xlu0 %v3150, 64
        %v3157 = vpop.permute.xlu0 %3156
        %3158 = vrot.lane.b32.xlu0 %v3151, 64
        %v3159 = vpop.permute.xlu0 %3158
        %3160 = vrot.lane.b32.xlu0 %v3152, 64
        %v3161 = vpop.permute.xlu0 %3160
        %v3162 = vrot.slane %v3157, 4
        %v3163 = vrot.slane %v3159, 4
        %v3164 = vrot.slane %v3161, 4
        %v3165 = vsel %vm961, %v3162, %v3163
        %v3166 = vsel %vm1380, %v3157, %v3165
        %v3167 = vsel %vm961, %v3163, %v3164
        %v3168 = vsel %vm1380, %v3159, %v3167
        %3171 = vst [vmem:[#allocation3 + $0x160] sm:$0xff] %v3166
        %3172 = vst [vmem:[#allocation3 + $0x168] sm:$0xff] %v3168
        %v3173 = vld [vmem:[#allocation2 + $0x4] sm:$0xff]
        %v3174 = vld [vmem:[#allocation2 + $0xc] sm:$0xff]
        %v3175 = vld [vmem:[#allocation2 + $0x14] sm:$0xf]
        %s3176 = scalar_lea.vmem %s609, 92
        %v3177 = vld [vmem:[%s3176] sm:$0xf]
        %v3180 = vunpack.c.l.s4 1966171168
        %v3181 = vunpack.c.0.s8 %v3180
        %v3182 = vlaneseq
        %v3183 = vshrl.u32 %v3182, 7
        %v3184 = vsub.s32 %v3181, %v3183
        %v3185 = vrot.slane %v3177, %v3184
        %v3186 = vcombine.high %v3185, %v3185
        %v3188 = vunpack.c.l.s4 1966171168
        %v3189 = vunpack.c.0.s8 %v3188
        %v3190 = vlaneseq
        %v3191 = vshrl.u32 %v3190, 7
        %v3192 = vsub.s32 %v3189, %v3191
        %v3193 = vrot.slane %v3185, %v3192
        %v3195 = vunpack.c.l.s4 1966171168
        %v3196 = vunpack.c.0.s8 %v3195
        %v3197 = vlaneseq
        %v3198 = vshrl.u32 %v3197, 7
        %v3199 = vsub.s32 %v3196, %v3198
        %v3200 = vrot.slane %v3186, %v3199
        %v3201 = vcombine.high %v3193, %v3193
        %v3202 = vcombine.high %v3200, %v3200
        %v3204 = vpack.i.b16 %v3193, %v3193
        %v3206 = vlaneseq
        %v3207 = vshrl.u32 %v3206, 7
        %v3208 = vsub.s32 0, %v3207
        %v3209 = vrot.slane %v3204, %v3208
        %v3211 = vpack.i.b16 %v3200, %v3200
        %v3213 = vlaneseq
        %v3214 = vshrl.u32 %v3213, 7
        %v3215 = vsub.s32 0, %v3214
        %v3216 = vrot.slane %v3211, %v3215
        %v3218 = vpack.i.b16 %v3201, %v3201
        %v3220 = vlaneseq
        %v3221 = vshrl.u32 %v3220, 7
        %v3222 = vsub.s32 0, %v3221
        %v3223 = vrot.slane %v3218, %v3222
        %v3225 = vpack.i.b16 %v3202, %v3202
        %v3227 = vlaneseq
        %v3228 = vshrl.u32 %v3227, 7
        %v3229 = vsub.s32 0, %v3228
        %v3230 = vrot.slane %v3225, %v3229
        %v3235 = vunpack.c.l.b16 %v3209
        %v3236 = vunpack.c.l.b16 %v3216
        %v3237 = vunpack.c.l.b16 %v3223
        %v3238 = vunpack.c.l.b16 %v3230
        %v3239 = vpack.c.b16 %v3236, %v3235
        %v3240 = vpack.c.b16 %v3238, %v3237
        %3241 = vrot.lane.b32.xlu0 %v3239, 65
        %v3242 = vpop.permute.xlu0 %3241
        %3243 = vrot.lane.b32.xlu0 %v3240, 65
        %v3244 = vpop.permute.xlu0 %3243
        %v3245 = vrot.slane %v3242, 4
        %v3246 = vrot.slane %v3244, 4
        %v3247 = vsel %vm1298, %v3245, %v3242
        %v3248 = vsel %vm961, %v3245, %v3246
        %v3249 = vsel %vm1298, %v3248, %v3244
        %v3253 = vmul.bf16 %v3173, %v3247
        %v3254 = vmul.bf16 %v3174, %v3249
        %v3255 = vmul.bf16 %v3175, %v3246
        %3259 = vrot.lane.b32.xlu0 %v3253, 63
        %v3260 = vpop.permute.xlu0 %3259
        %3261 = vrot.lane.b32.xlu0 %v3254, 63
        %v3262 = vpop.permute.xlu0 %3261
        %3263 = vrot.lane.b32.xlu0 %v3255, 63
        %v3264 = vpop.permute.xlu0 %3263
        %v3265 = vrot.slane %v3260, 4
        %v3266 = vrot.slane %v3262, 4
        %v3267 = vrot.slane %v3264, 4
        %v3268 = vsel %vm961, %v3265, %v3266
        %v3269 = vsel %vm1275, %v3260, %v3268
        %v3270 = vsel %vm961, %v3266, %v3267
        %v3271 = vsel %vm1275, %v3262, %v3270
        %3274 = vst [vmem:[#allocation3 + $0x170] sm:$0xff] %v3269
        %3275 = vst [vmem:[#allocation3 + $0x178] sm:$0xff] %v3271
        %v3276 = vld [vmem:[#allocation2 + $0x4] sm:$0xff]
        %v3277 = vld [vmem:[#allocation2 + $0xc] sm:$0xff]
        %v3278 = vld [vmem:[#allocation2 + $0x14] sm:$0xf]
        %s3279 = scalar_lea.vmem %s609, 96
        %v3280 = vld [vmem:[%s3279] sm:$0xf]
        %v3283 = vunpack.c.l.s4 1966171168
        %v3284 = vunpack.c.0.s8 %v3283
        %v3285 = vlaneseq
        %v3286 = vshrl.u32 %v3285, 7
        %v3287 = vsub.s32 %v3284, %v3286
        %v3288 = vrot.slane %v3280, %v3287
        %v3289 = vcombine.high %v3288, %v3288
        %v3291 = vunpack.c.l.s4 1966171168
        %v3292 = vunpack.c.0.s8 %v3291
        %v3293 = vlaneseq
        %v3294 = vshrl.u32 %v3293, 7
        %v3295 = vsub.s32 %v3292, %v3294
        %v3296 = vrot.slane %v3288, %v3295
        %v3298 = vunpack.c.l.s4 1966171168
        %v3299 = vunpack.c.0.s8 %v3298
        %v3300 = vlaneseq
        %v3301 = vshrl.u32 %v3300, 7
        %v3302 = vsub.s32 %v3299, %v3301
        %v3303 = vrot.slane %v3289, %v3302
        %v3304 = vcombine.high %v3296, %v3296
        %v3305 = vcombine.high %v3303, %v3303
        %v3307 = vpack.i.b16 %v3296, %v3296
        %v3309 = vlaneseq
        %v3310 = vshrl.u32 %v3309, 7
        %v3311 = vsub.s32 0, %v3310
        %v3312 = vrot.slane %v3307, %v3311
        %v3314 = vpack.i.b16 %v3303, %v3303
        %v3316 = vlaneseq
        %v3317 = vshrl.u32 %v3316, 7
        %v3318 = vsub.s32 0, %v3317
        %v3319 = vrot.slane %v3314, %v3318
        %v3321 = vpack.i.b16 %v3304, %v3304
        %v3323 = vlaneseq
        %v3324 = vshrl.u32 %v3323, 7
        %v3325 = vsub.s32 0, %v3324
        %v3326 = vrot.slane %v3321, %v3325
        %v3328 = vpack.i.b16 %v3305, %v3305
        %v3330 = vlaneseq
        %v3331 = vshrl.u32 %v3330, 7
        %v3332 = vsub.s32 0, %v3331
        %v3333 = vrot.slane %v3328, %v3332
        %v3338 = vunpack.c.l.b16 %v3312
        %v3339 = vunpack.c.l.b16 %v3319
        %v3340 = vunpack.c.l.b16 %v3326
        %v3341 = vunpack.c.l.b16 %v3333
        %v3342 = vpack.c.b16 %v3339, %v3338
        %v3343 = vpack.c.b16 %v3341, %v3340
        %3344 = vrot.lane.b32.xlu0 %v3342, 71
        %v3345 = vpop.permute.xlu0 %3344
        %3346 = vrot.lane.b32.xlu0 %v3343, 71
        %v3347 = vpop.permute.xlu0 %3346
        %v3348 = vrot.slane %v3345, 4
        %v3349 = vrot.slane %v3347, 4
        %v3350 = vsel %vm1193, %v3348, %v3345
        %v3351 = vsel %vm961, %v3348, %v3349
        %v3352 = vsel %vm1193, %v3351, %v3347
        %v3356 = vmul.bf16 %v3276, %v3350
        %v3357 = vmul.bf16 %v3277, %v3352
        %v3358 = vmul.bf16 %v3278, %v3349
        %3362 = vrot.lane.b32.xlu0 %v3356, 57
        %v3363 = vpop.permute.xlu0 %3362
        %3364 = vrot.lane.b32.xlu0 %v3357, 57
        %v3365 = vpop.permute.xlu0 %3364
        %3366 = vrot.lane.b32.xlu0 %v3358, 57
        %v3367 = vpop.permute.xlu0 %3366
        %v3368 = vrot.slane %v3363, 4
        %v3369 = vrot.slane %v3365, 4
        %v3370 = vrot.slane %v3367, 4
        %v3371 = vsel %vm961, %v3368, %v3369
        %v3372 = vsel %vm1170, %v3363, %v3371
        %v3373 = vsel %vm961, %v3369, %v3370
        %v3374 = vsel %vm1170, %v3365, %v3373
        %3377 = vst [vmem:[#allocation3 + $0x180] sm:$0xff] %v3372
        %3378 = vst [vmem:[#allocation3 + $0x188] sm:$0xff] %v3374
        %v3379 = vld [vmem:[#allocation2 + $0x4] sm:$0xff]
        %v3380 = vld [vmem:[#allocation2 + $0xc] sm:$0xff]
        %v3381 = vld [vmem:[#allocation2 + $0x14] sm:$0xf]
        %s3382 = scalar_lea.vmem %s609, 100
        %v3383 = vld [vmem:[%s3382] sm:$0xf]
        %v3386 = vunpack.c.l.s4 1966171168
        %v3387 = vunpack.c.0.s8 %v3386
        %v3388 = vlaneseq
        %v3389 = vshrl.u32 %v3388, 7
        %v3390 = vsub.s32 %v3387, %v3389
        %v3391 = vrot.slane %v3383, %v3390
        %v3392 = vcombine.high %v3391, %v3391
        %v3394 = vunpack.c.l.s4 1966171168
        %v3395 = vunpack.c.0.s8 %v3394
        %v3396 = vlaneseq
        %v3397 = vshrl.u32 %v3396, 7
        %v3398 = vsub.s32 %v3395, %v3397
        %v3399 = vrot.slane %v3391, %v3398
        %v3401 = vunpack.c.l.s4 1966171168
        %v3402 = vunpack.c.0.s8 %v3401
        %v3403 = vlaneseq
        %v3404 = vshrl.u32 %v3403, 7
        %v3405 = vsub.s32 %v3402, %v3404
        %v3406 = vrot.slane %v3392, %v3405
        %v3407 = vcombine.high %v3399, %v3399
        %v3408 = vcombine.high %v3406, %v3406
        %v3410 = vpack.i.b16 %v3399, %v3399
        %v3412 = vlaneseq
        %v3413 = vshrl.u32 %v3412, 7
        %v3414 = vsub.s32 0, %v3413
        %v3415 = vrot.slane %v3410, %v3414
        %v3417 = vpack.i.b16 %v3406, %v3406
        %v3419 = vlaneseq
        %v3420 = vshrl.u32 %v3419, 7
        %v3421 = vsub.s32 0, %v3420
        %v3422 = vrot.slane %v3417, %v3421
        %v3424 = vpack.i.b16 %v3407, %v3407
        %v3426 = vlaneseq
        %v3427 = vshrl.u32 %v3426, 7
        %v3428 = vsub.s32 0, %v3427
        %v3429 = vrot.slane %v3424, %v3428
        %v3431 = vpack.i.b16 %v3408, %v3408
        %v3433 = vlaneseq
        %v3434 = vshrl.u32 %v3433, 7
        %v3435 = vsub.s32 0, %v3434
        %v3436 = vrot.slane %v3431, %v3435
        %v3441 = vunpack.c.l.b16 %v3415
        %v3442 = vunpack.c.l.b16 %v3422
        %v3443 = vunpack.c.l.b16 %v3429
        %v3444 = vunpack.c.l.b16 %v3436
        %v3445 = vpack.c.b16 %v3442, %v3441
        %v3446 = vpack.c.b16 %v3444, %v3443
        %3447 = vrot.lane.b32.xlu0 %v3445, 72
        %v3448 = vpop.permute.xlu0 %3447
        %3449 = vrot.lane.b32.xlu0 %v3446, 72
        %v3450 = vpop.permute.xlu0 %3449
        %v3451 = vrot.slane %v3448, 4
        %v3452 = vrot.slane %v3450, 4
        %v3453 = vsel %vm1088, %v3451, %v3448
        %v3454 = vsel %vm961, %v3451, %v3452
        %v3455 = vsel %vm1088, %v3454, %v3450
        %v3459 = vmul.bf16 %v3379, %v3453
        %v3460 = vmul.bf16 %v3380, %v3455
        %v3461 = vmul.bf16 %v3381, %v3452
        %3465 = vrot.lane.b32.xlu0 %v3459, 56
        %v3466 = vpop.permute.xlu0 %3465
        %3467 = vrot.lane.b32.xlu0 %v3460, 56
        %v3468 = vpop.permute.xlu0 %3467
        %3469 = vrot.lane.b32.xlu0 %v3461, 56
        %v3470 = vpop.permute.xlu0 %3469
        %v3471 = vrot.slane %v3466, 4
        %v3472 = vrot.slane %v3468, 4
        %v3473 = vrot.slane %v3470, 4
        %v3474 = vsel %vm961, %v3471, %v3472
        %v3475 = vsel %vm1065, %v3466, %v3474
        %v3476 = vsel %vm961, %v3472, %v3473
        %v3477 = vsel %vm1065, %v3468, %v3476
        %3480 = vst [vmem:[#allocation3 + $0x190] sm:$0xff] %v3475
        %3481 = vst [vmem:[#allocation3 + $0x198] sm:$0xff] %v3477
        %v3482 = vld [vmem:[#allocation2 + $0x4] sm:$0xff]
        %v3483 = vld [vmem:[#allocation2 + $0xc] sm:$0xff]
        %v3484 = vld [vmem:[#allocation2 + $0x14] sm:$0xf]
        %s3485 = scalar_lea.vmem %s609, 104
        %v3486 = vld [vmem:[%s3485] sm:$0xf]
        %v3489 = vunpack.c.l.s4 1966171168
        %v3490 = vunpack.c.0.s8 %v3489
        %v3491 = vlaneseq
        %v3492 = vshrl.u32 %v3491, 7
        %v3493 = vsub.s32 %v3490, %v3492
        %v3494 = vrot.slane %v3486, %v3493
        %v3495 = vcombine.high %v3494, %v3494
        %v3497 = vunpack.c.l.s4 1966171168
        %v3498 = vunpack.c.0.s8 %v3497
        %v3499 = vlaneseq
        %v3500 = vshrl.u32 %v3499, 7
        %v3501 = vsub.s32 %v3498, %v3500
        %v3502 = vrot.slane %v3494, %v3501
        %v3504 = vunpack.c.l.s4 1966171168
        %v3505 = vunpack.c.0.s8 %v3504
        %v3506 = vlaneseq
        %v3507 = vshrl.u32 %v3506, 7
        %v3508 = vsub.s32 %v3505, %v3507
        %v3509 = vrot.slane %v3495, %v3508
        %v3510 = vcombine.high %v3502, %v3502
        %v3511 = vcombine.high %v3509, %v3509
        %v3513 = vpack.i.b16 %v3502, %v3502
        %v3515 = vlaneseq
        %v3516 = vshrl.u32 %v3515, 7
        %v3517 = vsub.s32 0, %v3516
        %v3518 = vrot.slane %v3513, %v3517
        %v3520 = vpack.i.b16 %v3509, %v3509
        %v3522 = vlaneseq
        %v3523 = vshrl.u32 %v3522, 7
        %v3524 = vsub.s32 0, %v3523
        %v3525 = vrot.slane %v3520, %v3524
        %v3527 = vpack.i.b16 %v3510, %v3510
        %v3529 = vlaneseq
        %v3530 = vshrl.u32 %v3529, 7
        %v3531 = vsub.s32 0, %v3530
        %v3532 = vrot.slane %v3527, %v3531
        %v3534 = vpack.i.b16 %v3511, %v3511
        %v3536 = vlaneseq
        %v3537 = vshrl.u32 %v3536, 7
        %v3538 = vsub.s32 0, %v3537
        %v3539 = vrot.slane %v3534, %v3538
        %v3544 = vunpack.c.l.b16 %v3518
        %v3545 = vunpack.c.l.b16 %v3525
        %v3546 = vunpack.c.l.b16 %v3532
        %v3547 = vunpack.c.l.b16 %v3539
        %v3548 = vpack.c.b16 %v3545, %v3544
        %v3549 = vpack.c.b16 %v3547, %v3546
        %3550 = vrot.lane.b32.xlu0 %v3548, 73
        %v3551 = vpop.permute.xlu0 %3550
        %3552 = vrot.lane.b32.xlu0 %v3549, 73
        %v3553 = vpop.permute.xlu0 %3552
        %v3554 = vrot.slane %v3551, 4
        %v3555 = vrot.slane %v3553, 4
        %v3556 = vsel %vm983, %v3554, %v3551
        %v3557 = vsel %vm961, %v3554, %v3555
        %v3558 = vsel %vm983, %v3557, %v3553
        %v3562 = vmul.bf16 %v3482, %v3556
        %v3563 = vmul.bf16 %v3483, %v3558
        %v3564 = vmul.bf16 %v3484, %v3555
        %3568 = vrot.lane.b32.xlu0 %v3562, 55
        %v3569 = vpop.permute.xlu0 %3568
        %3570 = vrot.lane.b32.xlu0 %v3563, 55
        %v3571 = vpop.permute.xlu0 %3570
        %3572 = vrot.lane.b32.xlu0 %v3564, 55
        %v3573 = vpop.permute.xlu0 %3572
        %v3574 = vrot.slane %v3569, 4
        %v3575 = vrot.slane %v3571, 4
        %v3576 = vrot.slane %v3573, 4
        %v3577 = vsel %vm961, %v3574, %v3575
        %v3578 = vsel %vm959, %v3569, %v3577
        %v3579 = vsel %vm961, %v3575, %v3576
        %v3580 = vsel %vm959, %v3571, %v3579
        %3583 = vst [vmem:[#allocation3 + $0x1a0] sm:$0xff] %v3578
        %3584 = vst [vmem:[#allocation3 + $0x1a8] sm:$0xff] %v3580
        %v3585 = vld [vmem:[%s7] sm:$0xff]
        %v3586 = vld [vmem:[#allocation3] sm:$0xff]
        %v3587 = vld [vmem:[#allocation3 + $0x8] sm:$0xff]
        %v3588 = vld [vmem:[#allocation3 + $0x10] sm:$0xff]
        %v3589 = vld [vmem:[#allocation3 + $0x18] sm:$0xff]
        %v3590 = vld [vmem:[#allocation3 + $0x20] sm:$0xff]
        %v3591 = vld [vmem:[#allocation3 + $0x28] sm:$0xff]
        %v3592 = vld [vmem:[#allocation3 + $0x30] sm:$0xff]
        %v3593 = vld [vmem:[#allocation3 + $0x38] sm:$0xff]
        %v3594 = vld [vmem:[#allocation3 + $0x40] sm:$0xff]
        %v3595 = vld [vmem:[#allocation3 + $0x48] sm:$0xff]
        %v3596 = vld [vmem:[#allocation3 + $0x50] sm:$0xff]
        %v3597 = vld [vmem:[#allocation3 + $0x58] sm:$0xff]
        %v3598 = vld [vmem:[#allocation3 + $0x60] sm:$0xff]
        %v3599 = vld [vmem:[#allocation3 + $0x68] sm:$0xff]
        %v3600 = vld [vmem:[#allocation3 + $0x70] sm:$0xff]
        %v3601 = vld [vmem:[#allocation3 + $0x78] sm:$0xff]
        %v3602 = vld [vmem:[#allocation3 + $0x80] sm:$0xff]
        %v3603 = vld [vmem:[#allocation3 + $0x88] sm:$0xff]
        %v3604 = vld [vmem:[#allocation3 + $0x90] sm:$0xff]
        %v3605 = vld [vmem:[#allocation3 + $0x98] sm:$0xff]
        %v3606 = vld [vmem:[#allocation3 + $0xa0] sm:$0xff]
        %v3607 = vld [vmem:[#allocation3 + $0xa8] sm:$0xff]
        %v3608 = vld [vmem:[#allocation3 + $0xb0] sm:$0xff]
        %v3609 = vld [vmem:[#allocation3 + $0xb8] sm:$0xff]
        %v3610 = vld [vmem:[#allocation3 + $0xc0] sm:$0xff]
        %v3611 = vld [vmem:[#allocation3 + $0xc8] sm:$0xff]
        %v3612 = vld [vmem:[#allocation3 + $0xd0] sm:$0xff]
        %v3613 = vld [vmem:[#allocation3 + $0xd8] sm:$0xff]
        %v3614 = vld [vmem:[#allocation3 + $0xe0] sm:$0xff]
        %v3615 = vld [vmem:[#allocation3 + $0xe8] sm:$0xff]
        %v3616 = vld [vmem:[#allocation3 + $0xf0] sm:$0xff]
        %v3617 = vld [vmem:[#allocation3 + $0xf8] sm:$0xff]
        %v3618 = vld [vmem:[#allocation3 + $0x100] sm:$0xff]
        %v3619 = vld [vmem:[#allocation3 + $0x108] sm:$0xff]
        %v3620 = vld [vmem:[#allocation3 + $0x110] sm:$0xff]
        %v3621 = vld [vmem:[#allocation3 + $0x118] sm:$0xff]
        %v3622 = vld [vmem:[#allocation3 + $0x120] sm:$0xff]
        %v3623 = vld [vmem:[#allocation3 + $0x128] sm:$0xff]
        %v3624 = vld [vmem:[#allocation3 + $0x130] sm:$0xff]
        %v3625 = vld [vmem:[#allocation3 + $0x138] sm:$0xff]
        %v3626 = vld [vmem:[#allocation3 + $0x140] sm:$0xff]
        %v3627 = vld [vmem:[#allocation3 + $0x148] sm:$0xff]
        %v3628 = vld [vmem:[#allocation3 + $0x150] sm:$0xff]
        %v3629 = vld [vmem:[#allocation3 + $0x158] sm:$0xff]
        %v3630 = vld [vmem:[#allocation3 + $0x160] sm:$0xff]
        %v3631 = vld [vmem:[#allocation3 + $0x168] sm:$0xff]
        %v3632 = vld [vmem:[#allocation3 + $0x170] sm:$0xff]
        %v3633 = vld [vmem:[#allocation3 + $0x178] sm:$0xff]
        %v3634 = vld [vmem:[#allocation3 + $0x180] sm:$0xff]
        %v3635 = vld [vmem:[#allocation3 + $0x188] sm:$0xff]
        %v3636 = vld [vmem:[#allocation3 + $0x190] sm:$0xff]
        %v3637 = vld [vmem:[#allocation3 + $0x198] sm:$0xff]
        %v3638 = vld [vmem:[#allocation3 + $0x1a0] sm:$0xff]
        %v3639 = vld [vmem:[#allocation3 + $0x1a8] sm:$0xff]
        %v3641 = vunpack.c.l.b16 %v3585
        %v3642 = vunpack.c.h.b16 %v3585
        %v3643 = vpack.c.b16 %v3641, %v3641
        %v3644 = vpack.c.b16 %v3642, %v3642
        %v3700 = vunpack.c.l.b16 %v3586
        %v3701 = vunpack.c.h.b16 %v3586
        %v3702 = vunpack.c.l.b16 %v3587
        %v3703 = vunpack.c.h.b16 %v3587
        %v3704 = vunpack.c.l.b16 %v3588
        %v3705 = vunpack.c.h.b16 %v3588
        %v3706 = vunpack.c.l.b16 %v3589
        %v3707 = vunpack.c.h.b16 %v3589
        %v3708 = vunpack.c.l.b16 %v3590
        %v3709 = vunpack.c.h.b16 %v3590
        %v3710 = vunpack.c.l.b16 %v3591
        %v3711 = vunpack.c.h.b16 %v3591
        %v3712 = vunpack.c.l.b16 %v3592
        %v3713 = vunpack.c.h.b16 %v3592
        %v3714 = vunpack.c.l.b16 %v3593
        %v3715 = vunpack.c.h.b16 %v3593
        %v3716 = vunpack.c.l.b16 %v3594
        %v3717 = vunpack.c.h.b16 %v3594
        %v3718 = vunpack.c.l.b16 %v3595
        %v3719 = vunpack.c.h.b16 %v3595
        %v3720 = vunpack.c.l.b16 %v3596
        %v3721 = vunpack.c.h.b16 %v3596
        %v3722 = vunpack.c.l.b16 %v3597
        %v3723 = vunpack.c.h.b16 %v3597
        %v3724 = vunpack.c.l.b16 %v3598
        %v3725 = vunpack.c.h.b16 %v3598
        %v3726 = vunpack.c.l.b16 %v3599
        %v3727 = vunpack.c.h.b16 %v3599
        %v3728 = vunpack.c.l.b16 %v3600
        %v3729 = vunpack.c.h.b16 %v3600
        %v3730 = vunpack.c.l.b16 %v3601
        %v3731 = vunpack.c.h.b16 %v3601
        %v3732 = vunpack.c.l.b16 %v3602
        %v3733 = vunpack.c.h.b16 %v3602
        %v3734 = vunpack.c.l.b16 %v3603
        %v3735 = vunpack.c.h.b16 %v3603
        %v3736 = vunpack.c.l.b16 %v3604
        %v3737 = vunpack.c.h.b16 %v3604
        %v3738 = vunpack.c.l.b16 %v3605
        %v3739 = vunpack.c.h.b16 %v3605
        %v3740 = vunpack.c.l.b16 %v3606
        %v3741 = vunpack.c.h.b16 %v3606
        %v3742 = vunpack.c.l.b16 %v3607
        %v3743 = vunpack.c.h.b16 %v3607
        %v3744 = vunpack.c.l.b16 %v3608
        %v3745 = vunpack.c.h.b16 %v3608
        %v3746 = vunpack.c.l.b16 %v3609
        %v3747 = vunpack.c.h.b16 %v3609
        %v3748 = vunpack.c.l.b16 %v3610
        %v3749 = vunpack.c.h.b16 %v3610
        %v3750 = vunpack.c.l.b16 %v3611
        %v3751 = vunpack.c.h.b16 %v3611
        %v3752 = vunpack.c.l.b16 %v3612
        %v3753 = vunpack.c.h.b16 %v3612
        %v3754 = vunpack.c.l.b16 %v3613
        %v3755 = vunpack.c.h.b16 %v3613
        %v3756 = vunpack.c.l.b16 %v3614
        %v3757 = vunpack.c.h.b16 %v3614
        %v3758 = vunpack.c.l.b16 %v3615
        %v3759 = vunpack.c.h.b16 %v3615
        %v3760 = vunpack.c.l.b16 %v3616
        %v3761 = vunpack.c.h.b16 %v3616
        %v3762 = vunpack.c.l.b16 %v3617
        %v3763 = vunpack.c.h.b16 %v3617
        %v3764 = vunpack.c.l.b16 %v3618
        %v3765 = vunpack.c.h.b16 %v3618
        %v3766 = vunpack.c.l.b16 %v3619
        %v3767 = vunpack.c.h.b16 %v3619
        %v3768 = vunpack.c.l.b16 %v3620
        %v3769 = vunpack.c.h.b16 %v3620
        %v3770 = vunpack.c.l.b16 %v3621
        %v3771 = vunpack.c.h.b16 %v3621
        %v3772 = vunpack.c.l.b16 %v3622
        %v3773 = vunpack.c.h.b16 %v3622
        %v3774 = vunpack.c.l.b16 %v3623
        %v3775 = vunpack.c.h.b16 %v3623
        %v3776 = vunpack.c.l.b16 %v3624
        %v3777 = vunpack.c.h.b16 %v3624
        %v3778 = vunpack.c.l.b16 %v3625
        %v3779 = vunpack.c.h.b16 %v3625
        %v3780 = vunpack.c.l.b16 %v3626
        %v3781 = vunpack.c.h.b16 %v3626
        %v3782 = vunpack.c.l.b16 %v3627
        %v3783 = vunpack.c.h.b16 %v3627
        %v3784 = vunpack.c.l.b16 %v3628
        %v3785 = vunpack.c.h.b16 %v3628
        %v3786 = vunpack.c.l.b16 %v3629
        %v3787 = vunpack.c.h.b16 %v3629
        %v3788 = vunpack.c.l.b16 %v3630
        %v3789 = vunpack.c.h.b16 %v3630
        %v3790 = vunpack.c.l.b16 %v3631
        %v3791 = vunpack.c.h.b16 %v3631
        %v3792 = vunpack.c.l.b16 %v3632
        %v3793 = vunpack.c.h.b16 %v3632
        %v3794 = vunpack.c.l.b16 %v3633
        %v3795 = vunpack.c.h.b16 %v3633
        %v3796 = vunpack.c.l.b16 %v3634
        %v3797 = vunpack.c.h.b16 %v3634
        %v3798 = vunpack.c.l.b16 %v3635
        %v3799 = vunpack.c.h.b16 %v3635
        %v3800 = vunpack.c.l.b16 %v3636
        %v3801 = vunpack.c.h.b16 %v3636
        %v3802 = vunpack.c.l.b16 %v3637
        %v3803 = vunpack.c.h.b16 %v3637
        %v3804 = vunpack.c.l.b16 %v3638
        %v3805 = vunpack.c.h.b16 %v3638
        %v3806 = vunpack.c.l.b16 %v3639
        %v3807 = vunpack.c.h.b16 %v3639
        %v3808 = vpack.c.b16 %v3704, %v3700
        %v3809 = vpack.c.b16 %v3705, %v3701
        %v3810 = vpack.c.b16 %v3706, %v3702
        %v3811 = vpack.c.b16 %v3707, %v3703
        %v3812 = vpack.c.b16 %v3712, %v3708
        %v3813 = vpack.c.b16 %v3713, %v3709
        %v3814 = vpack.c.b16 %v3714, %v3710
        %v3815 = vpack.c.b16 %v3715, %v3711
        %v3816 = vpack.c.b16 %v3720, %v3716
        %v3817 = vpack.c.b16 %v3721, %v3717
        %v3818 = vpack.c.b16 %v3722, %v3718
        %v3819 = vpack.c.b16 %v3723, %v3719
        %v3820 = vpack.c.b16 %v3728, %v3724
        %v3821 = vpack.c.b16 %v3729, %v3725
        %v3822 = vpack.c.b16 %v3730, %v3726
        %v3823 = vpack.c.b16 %v3731, %v3727
        %v3824 = vpack.c.b16 %v3736, %v3732
        %v3825 = vpack.c.b16 %v3737, %v3733
        %v3826 = vpack.c.b16 %v3738, %v3734
        %v3827 = vpack.c.b16 %v3739, %v3735
        %v3828 = vpack.c.b16 %v3744, %v3740
        %v3829 = vpack.c.b16 %v3745, %v3741
        %v3830 = vpack.c.b16 %v3746, %v3742
        %v3831 = vpack.c.b16 %v3747, %v3743
        %v3832 = vpack.c.b16 %v3752, %v3748
        %v3833 = vpack.c.b16 %v3753, %v3749
        %v3834 = vpack.c.b16 %v3754, %v3750
        %v3835 = vpack.c.b16 %v3755, %v3751
        %v3836 = vpack.c.b16 %v3760, %v3756
        %v3837 = vpack.c.b16 %v3761, %v3757
        %v3838 = vpack.c.b16 %v3762, %v3758
        %v3839 = vpack.c.b16 %v3763, %v3759
        %v3840 = vpack.c.b16 %v3768, %v3764
        %v3841 = vpack.c.b16 %v3769, %v3765
        %v3842 = vpack.c.b16 %v3770, %v3766
        %v3843 = vpack.c.b16 %v3771, %v3767
        %v3844 = vpack.c.b16 %v3776, %v3772
        %v3845 = vpack.c.b16 %v3777, %v3773
        %v3846 = vpack.c.b16 %v3778, %v3774
        %v3847 = vpack.c.b16 %v3779, %v3775
        %v3848 = vpack.c.b16 %v3784, %v3780
        %v3849 = vpack.c.b16 %v3785, %v3781
        %v3850 = vpack.c.b16 %v3786, %v3782
        %v3851 = vpack.c.b16 %v3787, %v3783
        %v3852 = vpack.c.b16 %v3792, %v3788
        %v3853 = vpack.c.b16 %v3793, %v3789
        %v3854 = vpack.c.b16 %v3794, %v3790
        %v3855 = vpack.c.b16 %v3795, %v3791
        %v3856 = vpack.c.b16 %v3800, %v3796
        %v3857 = vpack.c.b16 %v3801, %v3797
        %v3858 = vpack.c.b16 %v3802, %v3798
        %v3859 = vpack.c.b16 %v3803, %v3799
        %v3860 = vpack.c.b16 %v3804, %v3804
        %v3861 = vpack.c.b16 %v3805, %v3805
        %v3862 = vpack.c.b16 %v3806, %v3806
        %v3863 = vpack.c.b16 %v3807, %v3807
        %vm3916 = vcmask 719872
        %v3918 = vsel %vm3916, %v3644, 0
        %vm3920 = vcmask 1043456
        %v3922 = vsel %vm3920, %v3860, 0
        %v3925 = vsel %vm3920, %v3861, 0
        %v3928 = vsel %vm3920, %v3862, 0
        %v3931 = vsel %vm3920, %v3863, 0
        %3933 = vmatprep.subr.bf16.mxu0 %v3809
        %3934 = vmatpush1.bf16.msra.mxu0 %v3808
        %3935 = vmatprep.subr.bf16.mxu0 %v3813
        %3936 = vmatpush1.bf16.msra.mxu0 %v3812
        %3937 = vmatprep.subr.bf16.mxu0 %v3817
        %3938 = vmatpush1.bf16.msra.mxu0 %v3816
        %3939 = vmatprep.subr.bf16.mxu0 %v3821
        %3940 = vmatpush1.bf16.msra.mxu0 %v3820
        %3941 = vmatprep.subr.bf16.mxu0 %v3825
        %3942 = vmatpush1.bf16.msra.mxu0 %v3824
        %3943 = vmatprep.subr.bf16.mxu0 %v3829
        %3944 = vmatpush1.bf16.msra.mxu0 %v3828
        %3945 = vmatprep.subr.bf16.mxu0 %v3833
        %3946 = vmatpush1.bf16.msra.mxu0 %v3832
        %3947 = vmatprep.subr.bf16.mxu0 %v3837
        %3948 = vmatpush1.bf16.msra.mxu0 %v3836
        %3949 = vmatprep.subr.bf16.mxu0 %v3841
        %3950 = vmatpush1.bf16.msra.mxu0 %v3840
        %3951 = vmatprep.subr.bf16.mxu0 %v3845
        %3952 = vmatpush1.bf16.msra.mxu0 %v3844
        %3953 = vmatprep.subr.bf16.mxu0 %v3849
        %3954 = vmatpush1.bf16.msra.mxu0 %v3848
        %3955 = vmatprep.subr.bf16.mxu0 %v3853
        %3956 = vmatpush1.bf16.msra.mxu0 %v3852
        %3957 = vmatprep.subr.bf16.mxu0 %v3857
        %3958 = vmatpush1.bf16.msra.mxu0 %v3856
        %3959 = vmatprep.subr.bf16.mxu0 %v3925
        %3960 = vmatpush1.bf16.msra.mxu0 %v3922
        %3961 = vmatprep.subr.bf16.mxu0 0
        %3962 = vmatpush1.bf16.msra.mxu0 0
        %3963 = vmatprep.subr.bf16.mxu0 0
        %3964 = vmatpush1.bf16.msra.mxu0 0
        %3965 = vmatprep.mubr.bf16.mxu0 %v3918
        %3966 = vmatmul.mubr.bf16.gmra.mrb[0].mxu0 %v3643
        %v3967 = vpop.f32.mrb[0].mxu0
        %v3968 = vadd.f32 0.0, %v3967
        %v3969 = vpop.f32.mrb[0].mxu0
        %v3970 = vadd.f32 0.0, %v3969
        %v3971 = vpop.f32.mrb[0].mxu0
        %v3972 = vpop.f32.mrb[0].mxu0
        %3973 = vdwg.mxu0
        %3974 = vmatprep.subr.bf16.mxu0 %v3811
        %3975 = vmatpush1.bf16.msra.mxu0 %v3810
        %3976 = vmatprep.subr.bf16.mxu0 %v3815
        %3977 = vmatpush1.bf16.msra.mxu0 %v3814
        %3978 = vmatprep.subr.bf16.mxu0 %v3819
        %3979 = vmatpush1.bf16.msra.mxu0 %v3818
        %3980 = vmatprep.subr.bf16.mxu0 %v3823
        %3981 = vmatpush1.bf16.msra.mxu0 %v3822
        %3982 = vmatprep.subr.bf16.mxu0 %v3827
        %3983 = vmatpush1.bf16.msra.mxu0 %v3826
        %3984 = vmatprep.subr.bf16.mxu0 %v3831
        %3985 = vmatpush1.bf16.msra.mxu0 %v3830
        %3986 = vmatprep.subr.bf16.mxu0 %v3835
        %3987 = vmatpush1.bf16.msra.mxu0 %v3834
        %3988 = vmatprep.subr.bf16.mxu0 %v3839
        %3989 = vmatpush1.bf16.msra.mxu0 %v3838
        %3990 = vmatprep.subr.bf16.mxu0 %v3843
        %3991 = vmatpush1.bf16.msra.mxu0 %v3842
        %3992 = vmatprep.subr.bf16.mxu0 %v3847
        %3993 = vmatpush1.bf16.msra.mxu0 %v3846
        %3994 = vmatprep.subr.bf16.mxu0 %v3851
        %3995 = vmatpush1.bf16.msra.mxu0 %v3850
        %3996 = vmatprep.subr.bf16.mxu0 %v3855
        %3997 = vmatpush1.bf16.msra.mxu0 %v3854
        %3998 = vmatprep.subr.bf16.mxu0 %v3859
        %3999 = vmatpush1.bf16.msra.mxu0 %v3858
        %4000 = vmatprep.subr.bf16.mxu0 %v3931
        %4001 = vmatpush1.bf16.msra.mxu0 %v3928
        %4002 = vmatprep.subr.bf16.mxu0 0
        %4003 = vmatpush1.bf16.msra.mxu0 0
        %4004 = vmatprep.subr.bf16.mxu0 0
        %4005 = vmatpush1.bf16.msra.mxu0 0
        %4006 = vmatprep.mubr.bf16.mxu0 %v3918
        %4007 = vmatmul.mubr.bf16.gmra.mrb[0].mxu0 %v3643
        %v4008 = vpop.f32.mrb[0].mxu0
        %v4009 = vadd.f32 0.0, %v4008
        %v4010 = vpop.f32.mrb[0].mxu0
        %v4011 = vadd.f32 0.0, %v4010
        %v4012 = vpop.f32.mrb[0].mxu0
        %v4013 = vpop.f32.mrb[0].mxu0
        %4014 = vdwg.mxu0
        %v4015 = vld [vmem:[%s8] sm:$0xff]
        %4017 = vset.pattern.permute.xlu0 0
        %4018 = vperm.xlu0 %4017, %v4015
        %v4019 = vpop.permute.xlu0 %4018
        %v4021 = vmul.f32 %v3968, %v4019
        %v4022 = vmul.f32 %v3970, %v4019
        %v4023 = vmul.f32 %v4009, %v4019
        %v4024 = vmul.f32 %v4011, %v4019
        %v4025 = vld [vmem:[%s9] sm:$0xff]
        %4027 = vset.pattern.permute.xlu0 0
        %4028 = vperm.xlu0 %4027, %v4025
        %v4029 = vpop.permute.xlu0 %4028
        %v4031 = vadd.f32 %v4021, %v4029
        %v4032 = vadd.f32 %v4022, %v4029
        %v4033 = vadd.f32 %v4023, %v4029
        %v4034 = vadd.f32 %v4024, %v4029
        %v4035 = vmax.f32 %v4031, 0.0
        %v4036 = vmax.f32 %v4032, 0.0
        %v4037 = vmax.f32 %v4033, 0.0
        %v4038 = vmax.f32 %v4034, 0.0
        %v4039 = vld [vmem:[%s10] sm:$0xf]
        %v4040 = vld [vmem:[%s10 + $0x4] sm:$0xf]
        %v4041 = vld [vmem:[%s10 + $0x8] sm:$0xf]
        %v4042 = vld [vmem:[%s10 + $0xc] sm:$0xf]
        %v4043 = vpack.c.bf16 %v4035, %v4035
        %v4044 = vpack.c.bf16 %v4036, %v4036
        %v4045 = vpack.c.bf16 %v4037, %v4037
        %v4046 = vpack.c.bf16 %v4038, %v4038
        %v4051 = vunpack.c.l.b16 %v4039
        %v4052 = vunpack.c.l.b16 %v4040
        %v4053 = vunpack.c.l.b16 %v4041
        %v4054 = vunpack.c.l.b16 %v4042
        %v4055 = vpack.c.b16 %v4052, %v4051
        %v4056 = vpack.c.b16 %v4054, %v4053
        %vm4057 = vcmask 64512
        %v4059 = vsel %vm4057, %v4055, 0
        %v4062 = vsel %vm4057, %v4056, 0
        %v4065 = vsel %vm3920, %v4043, 0
        %v4068 = vsel %vm3920, %v4044, 0
        %v4071 = vsel %vm3920, %v4045, 0
        %v4074 = vsel %vm3920, %v4046, 0
        %4076 = vmatprep.subr.bf16.mxu0 %v4068
        %4077 = vmatpush1.bf16.msra.mxu0 %v4065
        %4078 = vmatprep.subr.bf16.mxu0 0
        %4079 = vmatpush1.bf16.msra.mxu0 0
        %4080 = vmatprep.subr.bf16.mxu0 0
        %4081 = vmatpush1.bf16.msra.mxu0 0
        %4082 = vmatprep.subr.bf16.mxu0 0
        %4083 = vmatpush1.bf16.msra.mxu0 0
        %4084 = vmatprep.subr.bf16.mxu0 0
        %4085 = vmatpush1.bf16.msra.mxu0 0
        %4086 = vmatprep.subr.bf16.mxu0 0
        %4087 = vmatpush1.bf16.msra.mxu0 0
        %4088 = vmatprep.subr.bf16.mxu0 0
        %4089 = vmatpush1.bf16.msra.mxu0 0
        %4090 = vmatprep.subr.bf16.mxu0 0
        %4091 = vmatpush1.bf16.msra.mxu0 0
        %4092 = vmatprep.subr.bf16.mxu0 0
        %4093 = vmatpush1.bf16.msra.mxu0 0
        %4094 = vmatprep.subr.bf16.mxu0 0
        %4095 = vmatpush1.bf16.msra.mxu0 0
        %4096 = vmatprep.subr.bf16.mxu0 0
        %4097 = vmatpush1.bf16.msra.mxu0 0
        %4098 = vmatprep.subr.bf16.mxu0 0
        %4099 = vmatpush1.bf16.msra.mxu0 0
        %4100 = vmatprep.subr.bf16.mxu0 0
        %4101 = vmatpush1.bf16.msra.mxu0 0
        %4102 = vmatprep.subr.bf16.mxu0 0
        %4103 = vmatpush1.bf16.msra.mxu0 0
        %4104 = vmatprep.subr.bf16.mxu0 0
        %4105 = vmatpush1.bf16.msra.mxu0 0
        %4106 = vmatprep.subr.bf16.mxu0 0
        %4107 = vmatpush1.bf16.msra.mxu0 0
        %4108 = vmatprep.mubr.bf16.mxu0 0
        %4109 = vmatmul.mubr.bf16.gmra.mrb[0].mxu0 %v4059
        %v4110 = vpop.f32.mrb[0].mxu0
        %v4111 = vadd.f32 0.0, %v4110
        %v4112 = vpop.f32.mrb[0].mxu0
        %v4113 = vadd.f32 0.0, %v4112
        %v4114 = vpop.f32.mrb[0].mxu0
        %v4115 = vadd.f32 0.0, %v4114
        %v4116 = vpop.f32.mrb[0].mxu0
        %v4117 = vadd.f32 0.0, %v4116
        %4118 = vmatprep.mubr.bf16.mxu0 0
        %4119 = vmatmul.mubr.bf16.gmra.mrb[0].mxu0 %v4062
        %v4120 = vpop.f32.mrb[0].mxu0
        %v4121 = vadd.f32 0.0, %v4120
        %v4122 = vpop.f32.mrb[0].mxu0
        %v4123 = vadd.f32 0.0, %v4122
        %v4124 = vpop.f32.mrb[0].mxu0
        %v4125 = vadd.f32 0.0, %v4124
        %v4126 = vpop.f32.mrb[0].mxu0
        %v4127 = vadd.f32 0.0, %v4126
        %4128 = vdwg.mxu0
        %4129 = vmatprep.subr.bf16.mxu0 %v4074
        %4130 = vmatpush1.bf16.msra.mxu0 %v4071
        %4131 = vmatprep.subr.bf16.mxu0 0
        %4132 = vmatpush1.bf16.msra.mxu0 0
        %4133 = vmatprep.subr.bf16.mxu0 0
        %4134 = vmatpush1.bf16.msra.mxu0 0
        %4135 = vmatprep.subr.bf16.mxu0 0
        %4136 = vmatpush1.bf16.msra.mxu0 0
        %4137 = vmatprep.subr.bf16.mxu0 0
        %4138 = vmatpush1.bf16.msra.mxu0 0
        %4139 = vmatprep.subr.bf16.mxu0 0
        %4140 = vmatpush1.bf16.msra.mxu0 0
        %4141 = vmatprep.subr.bf16.mxu0 0
        %4142 = vmatpush1.bf16.msra.mxu0 0
        %4143 = vmatprep.subr.bf16.mxu0 0
        %4144 = vmatpush1.bf16.msra.mxu0 0
        %4145 = vmatprep.subr.bf16.mxu0 0
        %4146 = vmatpush1.bf16.msra.mxu0 0
        %4147 = vmatprep.subr.bf16.mxu0 0
        %4148 = vmatpush1.bf16.msra.mxu0 0
        %4149 = vmatprep.subr.bf16.mxu0 0
        %4150 = vmatpush1.bf16.msra.mxu0 0
        %4151 = vmatprep.subr.bf16.mxu0 0
        %4152 = vmatpush1.bf16.msra.mxu0 0
        %4153 = vmatprep.subr.bf16.mxu0 0
        %4154 = vmatpush1.bf16.msra.mxu0 0
        %4155 = vmatprep.subr.bf16.mxu0 0
        %4156 = vmatpush1.bf16.msra.mxu0 0
        %4157 = vmatprep.subr.bf16.mxu0 0
        %4158 = vmatpush1.bf16.msra.mxu0 0
        %4159 = vmatprep.subr.bf16.mxu0 0
        %4160 = vmatpush1.bf16.msra.mxu0 0
        %4161 = vmatprep.mubr.bf16.mxu0 0
        %4162 = vmatmul.mubr.bf16.gmra.mrb[0].mxu0 %v4059
        %v4163 = vpop.f32.mrb[0].mxu0
        %v4164 = vadd.f32 0.0, %v4163
        %v4165 = vpop.f32.mrb[0].mxu0
        %v4166 = vadd.f32 0.0, %v4165
        %v4167 = vpop.f32.mrb[0].mxu0
        %v4168 = vadd.f32 0.0, %v4167
        %v4169 = vpop.f32.mrb[0].mxu0
        %v4170 = vadd.f32 0.0, %v4169
        %4171 = vmatprep.mubr.bf16.mxu0 0
        %4172 = vmatmul.mubr.bf16.gmra.mrb[0].mxu0 %v4062
        %v4173 = vpop.f32.mrb[0].mxu0
        %v4174 = vadd.f32 0.0, %v4173
        %v4175 = vpop.f32.mrb[0].mxu0
        %v4176 = vadd.f32 0.0, %v4175
        %v4177 = vpop.f32.mrb[0].mxu0
        %v4178 = vadd.f32 0.0, %v4177
        %v4179 = vpop.f32.mrb[0].mxu0
        %v4180 = vadd.f32 0.0, %v4179
        %4181 = vdwg.mxu0
        %v4182 = vld [vmem:[%s11] sm:$0xff]
        %v4183 = vld [vmem:[%s11 + $0x8] sm:$0xff]
        %v4184 = vld [vmem:[%s11 + $0x10] sm:$0xff]
        %v4185 = vld [vmem:[%s11 + $0x18] sm:$0xff]
        %4187 = vset.pattern.permute.xlu0 0
        %4188 = vperm.xlu0 %4187, %v4182
        %v4189 = vpop.permute.xlu0 %4188
        %4192 = vset.pattern.permute.xlu0 0
        %4193 = vperm.xlu0 %4192, %v4183
        %v4194 = vpop.permute.xlu0 %4193
        %4197 = vset.pattern.permute.xlu0 0
        %4198 = vperm.xlu0 %4197, %v4184
        %v4199 = vpop.permute.xlu0 %4198
        %4202 = vset.pattern.permute.xlu0 0
        %4203 = vperm.xlu0 %4202, %v4185
        %v4204 = vpop.permute.xlu0 %4203
        %v4206 = vmul.f32 %v4111, %v4189
        %v4207 = vmul.f32 %v4113, %v4189
        %v4208 = vmul.f32 %v4164, %v4189
        %v4209 = vmul.f32 %v4166, %v4189
        %v4210 = vmul.f32 %v4115, %v4194
        %v4211 = vmul.f32 %v4117, %v4194
        %v4212 = vmul.f32 %v4168, %v4194
        %v4213 = vmul.f32 %v4170, %v4194
        %v4214 = vmul.f32 %v4121, %v4199
        %v4215 = vmul.f32 %v4123, %v4199
        %v4216 = vmul.f32 %v4174, %v4199
        %v4217 = vmul.f32 %v4176, %v4199
        %v4218 = vmul.f32 %v4125, %v4204
        %v4219 = vmul.f32 %v4127, %v4204
        %v4220 = vmul.f32 %v4178, %v4204
        %v4221 = vmul.f32 %v4180, %v4204
        %v4222 = vld [vmem:[%s12] sm:$0xff]
        %v4223 = vld [vmem:[%s12 + $0x8] sm:$0xff]
        %v4224 = vld [vmem:[%s12 + $0x10] sm:$0xff]
        %v4225 = vld [vmem:[%s12 + $0x18] sm:$0xff]
        %4227 = vset.pattern.permute.xlu0 0
        %4228 = vperm.xlu0 %4227, %v4222
        %v4229 = vpop.permute.xlu0 %4228
        %4232 = vset.pattern.permute.xlu0 0
        %4233 = vperm.xlu0 %4232, %v4223
        %v4234 = vpop.permute.xlu0 %4233
        %4237 = vset.pattern.permute.xlu0 0
        %4238 = vperm.xlu0 %4237, %v4224
        %v4239 = vpop.permute.xlu0 %4238
        %4242 = vset.pattern.permute.xlu0 0
        %4243 = vperm.xlu0 %4242, %v4225
        %v4244 = vpop.permute.xlu0 %4243
        %v4246 = vadd.f32 %v4206, %v4229
        %v4247 = vadd.f32 %v4207, %v4229
        %v4248 = vadd.f32 %v4208, %v4229
        %v4249 = vadd.f32 %v4209, %v4229
        %v4250 = vadd.f32 %v4210, %v4234
        %v4251 = vadd.f32 %v4211, %v4234
        %v4252 = vadd.f32 %v4212, %v4234
        %v4253 = vadd.f32 %v4213, %v4234
        %v4254 = vadd.f32 %v4214, %v4239
        %v4255 = vadd.f32 %v4215, %v4239
        %v4256 = vadd.f32 %v4216, %v4239
        %v4257 = vadd.f32 %v4217, %v4239
        %v4258 = vadd.f32 %v4218, %v4244
        %v4259 = vadd.f32 %v4219, %v4244
        %v4260 = vadd.f32 %v4220, %v4244
        %v4261 = vadd.f32 %v4221, %v4244
        %v4262 = vld [vmem:[%s512] sm:$0xff]
        %v4263 = vld [vmem:[%s512 + $0x8] sm:$0xff]
        %v4264 = vld [vmem:[%s512 + $0x10] sm:$0xff]
        %v4265 = vld [vmem:[%s512 + $0x18] sm:$0xff]
        %v4266 = vld [vmem:[%s512 + $0x20] sm:$0xff]
        %v4267 = vld [vmem:[%s512 + $0x28] sm:$0xff]
        %v4268 = vld [vmem:[%s512 + $0x30] sm:$0xff]
        %v4269 = vld [vmem:[%s512 + $0x38] sm:$0xff]
        %v4270 = vld [vmem:[%s512 + $0x40] sm:$0xff]
        %v4271 = vld [vmem:[%s512 + $0x48] sm:$0xff]
        %v4272 = vld [vmem:[%s512 + $0x50] sm:$0xff]
        %v4273 = vld [vmem:[%s512 + $0x58] sm:$0xff]
        %v4274 = vld [vmem:[%s512 + $0x60] sm:$0xff]
        %v4275 = vld [vmem:[%s512 + $0x68] sm:$0xff]
        %v4276 = vld [vmem:[%s512 + $0x70] sm:$0xff]
        %v4277 = vld [vmem:[%s512 + $0x78] sm:$0xff]
        %v4278 = vadd.f32 %v4246, %v4262
        %v4279 = vadd.f32 %v4247, %v4263
        %v4280 = vadd.f32 %v4248, %v4264
        %v4281 = vadd.f32 %v4249, %v4265
        %v4282 = vadd.f32 %v4250, %v4266
        %v4283 = vadd.f32 %v4251, %v4267
        %v4284 = vadd.f32 %v4252, %v4268
        %v4285 = vadd.f32 %v4253, %v4269
        %v4286 = vadd.f32 %v4254, %v4270
        %v4287 = vadd.f32 %v4255, %v4271
        %v4288 = vadd.f32 %v4256, %v4272
        %v4289 = vadd.f32 %v4257, %v4273
        %v4290 = vadd.f32 %v4258, %v4274
        %v4291 = vadd.f32 %v4259, %v4275
        %v4292 = vadd.f32 %v4260, %v4276
        %v4293 = vadd.f32 %v4261, %v4277
        %v4294 = vmax.f32 %v4278, 0.0
        %v4295 = vmax.f32 %v4279, 0.0
        %v4296 = vmax.f32 %v4280, 0.0
        %v4297 = vmax.f32 %v4281, 0.0
        %v4298 = vmax.f32 %v4282, 0.0
        %v4299 = vmax.f32 %v4283, 0.0
        %v4300 = vmax.f32 %v4284, 0.0
        %v4301 = vmax.f32 %v4285, 0.0
        %v4302 = vmax.f32 %v4286, 0.0
        %v4303 = vmax.f32 %v4287, 0.0
        %v4304 = vmax.f32 %v4288, 0.0
        %v4305 = vmax.f32 %v4289, 0.0
        %v4306 = vmax.f32 %v4290, 0.0
        %v4307 = vmax.f32 %v4291, 0.0
        %v4308 = vmax.f32 %v4292, 0.0
        %v4309 = vmax.f32 %v4293, 0.0
        %4310 = vst [vmem:[%s584] sm:$0xff] %v4294
        %4311 = vst [vmem:[%s584 + $0x8] sm:$0xff] %v4295
        %4312 = vst [vmem:[%s584 + $0x10] sm:$0xff] %v4296
        %4313 = vst [vmem:[%s584 + $0x18] sm:$0xff] %v4297
        %4314 = vst [vmem:[%s584 + $0x20] sm:$0xff] %v4298
        %4315 = vst [vmem:[%s584 + $0x28] sm:$0xff] %v4299
        %4316 = vst [vmem:[%s584 + $0x30] sm:$0xff] %v4300
        %4317 = vst [vmem:[%s584 + $0x38] sm:$0xff] %v4301
        %4318 = vst [vmem:[%s584 + $0x40] sm:$0xff] %v4302
        %4319 = vst [vmem:[%s584 + $0x48] sm:$0xff] %v4303
        %4320 = vst [vmem:[%s584 + $0x50] sm:$0xff] %v4304
        %4321 = vst [vmem:[%s584 + $0x58] sm:$0xff] %v4305
        %4322 = vst [vmem:[%s584 + $0x60] sm:$0xff] %v4306
        %4323 = vst [vmem:[%s584 + $0x68] sm:$0xff] %v4307
        %4324 = vst [vmem:[%s584 + $0x70] sm:$0xff] %v4308
        %4325 = vst [vmem:[%s584 + $0x78] sm:$0xff] %v4309
        %s4326 = sand.u32 %s366, 1
        %s4327 = scalar_lea.sflag [#allocation6], %s4326
        %s4328 = sand.u32 %s366, 1
        %s4329 = smul.addr %s4328, 128
        %s4330 = scalar_lea.vmem [#allocation9], %s4329
        // Predicated region
        $region81: #{tpu_custom_call.1} parent=71 // pred_check
          %p4331 = pneg %p376
        $region82: #{tpu_custom_call.1} parent=71 // pred_check_branch
          %4333 = sbr.rel (%p4331) target = $region84
        $region83: #{tpu_custom_call.1} parent=71 // pred_region
          %s4334 = smul.u32 4, %s38
          %s4336 = ssub.s32 2048, 2048
          %4337 = vsyncadd %s4327, %s4336
          %s4338 = smul.addr %s37, 16
          %s4339 = sadd.s32 %s4334, %s4338
          %s4340 = smul.addr %s4339, 128
          %s4341 = scalar_lea.hbm %s13, %s4340
          %s4342 = sshll.u32 %s4330, 4
          %s4343 = int_to_ptr.vmem [resolvable:$true] %s4342
          %4348 = dma.vmem_to_hbm [thread:$0]  %s4343, 2048, %s4341, %s4327, 512, 512, 32
        $region84: #{tpu_custom_call.1} parent=71 // pred_fallthru
          _
      $region72: #{tpu_custom_call.1} parent=5 // pred_fallthru
        _
      %p4349 = scmp.le.s32.totalorder 2, %s28
      // Predicated region
      $region85: #{tpu_custom_call.1} parent=5 // pred_check
        %p4350 = pneg %p4349
      $region86: #{tpu_custom_call.1} parent=5 // pred_check_branch
        %4352 = sbr.rel (%p4350) target = $region88
      $region87: #{tpu_custom_call.1} parent=5 // pred_region
        %s4353 = ssub.s32 %s28, 2
        // Predicated region
        $region89: #{tpu_custom_call.1} parent=87 // pred_check
          %p4354 = pneg %p382
        $region90: #{tpu_custom_call.1} parent=87 // pred_check_branch
          %4356 = sbr.rel (%p4354) target = $region92
        $region91: #{tpu_custom_call.1} parent=87 // pred_region
          %s4357 = sand.u32 %s367, 1
          %s4358 = scalar_lea.sflag [#allocation6], %s4357
          %s4359 = sand.u32 %s367, 1
          %s4360 = smul.addr %s4359, 128
          %s4361 = scalar_lea.vmem [#allocation9], %s4360
          %4362 = dma.done %s4358, 2048
        $region92: #{tpu_custom_call.1} parent=87 // pred_fallthru
          _
      $region88: #{tpu_custom_call.1} parent=5 // pred_fallthru
        _
    $region6: #{tpu_custom_call.1} parent=1 // loop_footer
      %s32 = sadd.s32 1, %s28
    $region7: #{tpu_custom_call.1} parent=1 // loop_footer_branch
      %27 = sbr.rel target = $region3
    $region8: #{tpu_custom_call.1} parent=1 // loop_exit
      _
    %4363 = vsyncpa [#allocation5], 1
    %s4364 = scalar_lea.sflag [#allocation5], 1
    %4365 = vsyncpa %s4364, 1
    %4366 = vsyncpa [#allocation8], 1
    %s4367 = scalar_lea.sflag [#allocation8], 1
    %4368 = vsyncpa %s4367, 1
    %4369 = vsyncpa [#allocation6], 1
    %s4370 = scalar_lea.sflag [#allocation6], 1
    %4371 = vsyncpa %s4370, 1

</llo_original>
